<compile_context>
chip_gen: v7x
topology: tpu7x:2x2x1
jax: 0.10.0
libtpu: 0.0.40
codegen_flags: <defaults>
</compile_context>

<pallas_src>
import functools

import jax
import jax.numpy as jnp
from jax.experimental import pallas as pl
from jax.experimental.pallas import tpu as pltpu

_PWMAX = 10   # max horizontal halo over the (1,7)/(1,11)/(1,21) strip convs


# ---------------------------------------------------------------------------
# In-kernel depthwise conv helpers (lane-folded layout: x is (H, W*C))
# ---------------------------------------------------------------------------
def _dw5x5(x, w, C):
    """5x5 depthwise 'same' conv; w:(25, W*C) per-tap, channel-tiled weights."""
    H, L = x.shape
    zh = jnp.zeros((2, L), jnp.float32)
    xp = jnp.concatenate([zh, x, zh], axis=0)                 # pad H by 2
    zw = jnp.zeros((H + 4, 2 * C), jnp.float32)
    xp = jnp.concatenate([zw, xp, zw], axis=1)                # pad W (lanes) by 2*C
    acc = jnp.zeros((H, L), jnp.float32)
    for i in range(5):
        row = xp[i:i + H, :]                                  # reuse across the 5 dw taps
        for j in range(5):
            acc = acc + row[:, j * C:j * C + L] * w[i * 5 + j][None, :]
    return acc


def _hstrips_fused(attn_wp, w7, w11, w21, C, L):
    """Fused (1,7)/(1,11)/(1,21) depthwise convs on the SHARED lane-padded attn.

    attn_wp is padded by _PWMAX*C lanes on each side.  A single sweep over the
    21-tap window produces all three branch outputs, reusing each lane-shifted
    slice for every branch whose window covers that offset.
    """
    H = attn_wp.shape[0]
    acc7 = jnp.zeros((H, L), jnp.float32)
    acc11 = jnp.zeros((H, L), jnp.float32)
    acc21 = jnp.zeros((H, L), jnp.float32)
    for t in range(21):                                       # offset = t*C lanes
        row = attn_wp[:, t * C:t * C + L]
        acc21 = acc21 + row * w21[t][None, :]
        j11 = t - (_PWMAX - 5)                                # (1,11): pw=5
        if 0 <= j11 < 11:
            acc11 = acc11 + row * w11[j11][None, :]
        j7 = t - (_PWMAX - 3)                                 # (1,7): pw=3
        if 0 <= j7 < 7:
            acc7 = acc7 + row * w7[j7][None, :]
    return acc7, acc11, acc21


def _vstrip(a, w, k):
    """(k,1) depthwise conv on a:(H, W*C); one zero pad along H, shifted slices."""
    H, L = a.shape
    ph = k // 2
    z = jnp.zeros((ph, L), jnp.float32)
    ap = jnp.concatenate([z, a, z], axis=0)
    acc = jnp.zeros((H, L), jnp.float32)
    for i in range(k):
        acc = acc + ap[i:i + H, :] * w[i][None, :]
    return acc


# ---------------------------------------------------------------------------
# Pallas kernel
# ---------------------------------------------------------------------------
def _msca_kernel(C,
                 x_ref,
                 w0_ref, b0_ref,
                 w01_ref, b01_ref, w02_ref, b02_ref,
                 w11_ref, b11_ref, w12_ref, b12_ref,
                 w21_ref, b21_ref, w22_ref, b22_ref,
                 w3_ref, b3_ref,
                 out_ref):
    x = x_ref[0]                      # (H, L) with L = W*C, lane-dense
    H, L = x.shape
    u = x                             # gating input (u = x.clone())

    # TODO(synk): on v6e/v7x the tap MAC chain could run in bf16 (f32 accum);
    # kept f32 so the same kernel is safe on v5e and within the 1e-3 tolerance.

    # conv0: 5x5 depthwise
    attn = _dw5x5(x, w0_ref[...], C) + b0_ref[...]

    # one shared lane-padded copy of attn for all three horizontal strips
    zpad = jnp.zeros((H, _PWMAX * C), jnp.float32)
    attn_wp = jnp.concatenate([zpad, attn, zpad], axis=1)     # (H, L + 2*_PWMAX*C)

    # fused horizontal strips (single sweep, shared shifted slices)
    h7, h11, h21 = _hstrips_fused(attn_wp, w01_ref[...], w11_ref[...],
                                  w21_ref[...], C, L)

    # branches, accumulated straight into s (no a0/a1/a2 kept live)
    s = attn
    s = s + _vstrip(h7 + b01_ref[...], w02_ref[...], 7) + b02_ref[...]
    s = s + _vstrip(h11 + b11_ref[...], w12_ref[...], 11) + b12_ref[...]
    s = s + _vstrip(h21 + b21_ref[...], w22_ref[...], 21) + b22_ref[...]

    # conv3: 1x1 pointwise conv == dense (H, L) x (L, L) MXU matmul against a
    # block-diagonal channel-mixing weight (built once in the wrapper).
    y = jnp.dot(s, w3_ref[...], preferred_element_type=jnp.float32) + b3_ref[...]

    out_ref[0] = (y * u).astype(out_ref.dtype)


def msca_attention_pallas(x_folded, kernel_params, C):
    """x_folded: (B, H, W*C) float32; kernel_params from _prep_kernel_params."""
    B, H, L = x_folded.shape
    kernel = functools.partial(_msca_kernel, C)

    in_specs = [pl.BlockSpec((1, H, L), lambda b: (b, 0, 0))]
    for p in kernel_params:
        nd = p.ndim
        in_specs.append(pl.BlockSpec(p.shape, lambda b, _nd=nd: (0,) * _nd))

    return pl.pallas_call(
        kernel,
        out_shape=jax.ShapeDtypeStruct((B, H, L), x_folded.dtype),
        grid=(B,),
        in_specs=in_specs,
        out_specs=pl.BlockSpec((1, H, L), lambda b: (b, 0, 0)),
        compiler_params=pltpu.CompilerParams(
            # batch images are independent -> lets v7x spread them over 2 TCs
            dimension_semantics=("parallel",),
            vmem_limit_bytes=32 * 1024 * 1024,
        ),
    )(x_folded, *kernel_params)


# ---------------------------------------------------------------------------
# Parameter construction (torch-like shapes) + host-side layout glue
# ---------------------------------------------------------------------------
def make_params(dim, key):
    ks = jax.random.split(key, 16)

    def w(k, shape):
        return 0.1 * jax.random.normal(k, shape, jnp.float32)

    return {
        "w0":  w(ks[0], (dim, 1, 5, 5)),   "b0":  w(ks[1], (dim,)),
        "w01": w(ks[2], (dim, 1, 1, 7)),   "b01": w(ks[3], (dim,)),
        "w02": w(ks[4], (dim, 1, 7, 1)),   "b02": w(ks[5], (dim,)),
        "w11": w(ks[6], (dim, 1, 1, 11)),  "b11": w(ks[7], (dim,)),
        "w12": w(ks[8], (dim, 1, 11, 1)),  "b12": w(ks[9], (dim,)),
        "w21": w(ks[10], (dim, 1, 1, 21)), "b21": w(ks[11], (dim,)),
        "w22": w(ks[12], (dim, 1, 21, 1)), "b22": w(ks[13], (dim,)),
        "w3":  w(ks[14], (dim, dim, 1, 1)), "b3": w(ks[15], (dim,)),
    }


def _prep_kernel_params(p, dim, W):
    """Torch-style params -> lane-folded weight tables (host-side glue only)."""
    C = dim

    def dwplanes(w):                       # (C,1,kh,kw) -> (kh*kw, W*C)
        kh, kw = w.shape[2], w.shape[3]
        wt = jnp.transpose(w.reshape(C, kh * kw), (1, 0))     # row t=i*kw+j -> w[:,0,i,j]
        return jnp.tile(wt, (1, W))                           # lane w*C+c = w[c,0,i,j]

    def brow(b):                           # (C,) -> (1, W*C)
        return jnp.tile(b, W).reshape(1, W * C)

    w3mat = jnp.transpose(p["w3"][:, :, 0, 0], (1, 0))        # (Cin, Cout)
    w3big = jnp.kron(jnp.eye(W, dtype=jnp.float32), w3mat)    # block-diag (W*C, W*C)

    return [
        dwplanes(p["w0"]),  brow(p["b0"]),
        dwplanes(p["w01"]), brow(p["b01"]), dwplanes(p["w02"]), brow(p["b02"]),
        dwplanes(p["w11"]), brow(p["b11"]), dwplanes(p["w12"]), brow(p["b12"]),
        dwplanes(p["w21"]), brow(p["b21"]), dwplanes(p["w22"]), brow(p["b22"]),
        w3big, brow(p["b3"]),
    ]


def reference_nchw(x, p):
    """Pure-JAX reference mirroring the PyTorch module (NCHW)."""
    C = x.shape[1]

    def dw(v, w, b, pad):
        y = jax.lax.conv_general_dilated(
            v, w, (1, 1), [(pad[0], pad[0]), (pad[1], pad[1])],
            dimension_numbers=("NCHW", "OIHW", "NCHW"),
            feature_group_count=C)
        return y + b[None, :, None, None]

    attn = dw(x, p["w0"], p["b0"], (2, 2))
    a0 = dw(dw(attn, p["w01"], p["b01"], (0, 3)), p["w02"], p["b02"], (3, 0))
    a1 = dw(dw(attn, p["w11"], p["b11"], (0, 5)), p["w12"], p["b12"], (5, 0))
    a2 = dw(dw(attn, p["w21"], p["b21"], (0, 10)), p["w22"], p["b22"], (10, 0))
    s = attn + a0 + a1 + a2
    y = jax.lax.conv_general_dilated(
        s, p["w3"], (1, 1), [(0, 0), (0, 0)],
        dimension_numbers=("NCHW", "OIHW", "NCHW"))
    y = y + p["b3"][None, :, None, None]
    return y * x


if __name__ == "__main__":
    B, C, H, W = 2, 8, 16, 16          # W * C = 128 -> fully lane-dense layout
    key = jax.random.PRNGKey(0)
    kx, kp = jax.random.split(key)

    x_nchw = jax.random.normal(kx, (B, C, H, W), jnp.float32)
    params = make_params(C, kp)
    kparams = _prep_kernel_params(params, C, W)

    # NCHW -> lane-folded (B, H, W*C) for the kernel (layout glue only)
    x_folded = jnp.transpose(x_nchw, (0, 2, 3, 1)).reshape(B, H, W * C)

    out_folded = msca_attention_pallas(x_folded, kparams, C)
    out_folded = jax.block_until_ready(out_folded)

    # correctness check against pure-JAX reference (same math as PyTorch module)
    out_nchw = jnp.transpose(out_folded.reshape(B, H, W, C), (0, 3, 1, 2))
    ref = reference_nchw(x_nchw, params)
    err = float(jnp.max(jnp.abs(out_nchw - ref)))
    assert err < 1e-3, f"max abs error too large: {err}"

    print("KERNEL_OK")
</pallas_src>

<mosaic_0001>
module attributes {stable_mosaic.version = 11 : i64} {
  func.func @_msca_kernel(%arg0: i32, %arg1: memref<1x16x128xf32, #tpu.memory_space<vmem>>, %arg2: memref<25x128xf32, #tpu.memory_space<vmem>>, %arg3: memref<1x128xf32, #tpu.memory_space<vmem>>, %arg4: memref<7x128xf32, #tpu.memory_space<vmem>>, %arg5: memref<1x128xf32, #tpu.memory_space<vmem>>, %arg6: memref<7x128xf32, #tpu.memory_space<vmem>>, %arg7: memref<1x128xf32, #tpu.memory_space<vmem>>, %arg8: memref<11x128xf32, #tpu.memory_space<vmem>>, %arg9: memref<1x128xf32, #tpu.memory_space<vmem>>, %arg10: memref<11x128xf32, #tpu.memory_space<vmem>>, %arg11: memref<1x128xf32, #tpu.memory_space<vmem>>, %arg12: memref<21x128xf32, #tpu.memory_space<vmem>>, %arg13: memref<1x128xf32, #tpu.memory_space<vmem>>, %arg14: memref<21x128xf32, #tpu.memory_space<vmem>>, %arg15: memref<1x128xf32, #tpu.memory_space<vmem>>, %arg16: memref<128x128xf32, #tpu.memory_space<vmem>>, %arg17: memref<1x128xf32, #tpu.memory_space<vmem>>, %arg18: memref<1x16x128xf32, #tpu.memory_space<vmem>>) attributes {dimension_semantics = [#tpu.dimension_semantics<parallel>], iteration_bounds = array<i64: 2>, scalar_prefetch = 0 : i64, scratch_operands = 0 : i64, tpu.core_type = #tpu.core_type<tc>, window_params = [{transform_indices = @transform_0, window_bounds = array<i64: 1, 16, 128>}, {pipeline_mode = #tpu.pipeline_mode<synchronous>, transform_indices = @transform_1, window_bounds = array<i64: 25, 128>}, {pipeline_mode = #tpu.pipeline_mode<synchronous>, transform_indices = @transform_2, window_bounds = array<i64: 1, 128>}, {pipeline_mode = #tpu.pipeline_mode<synchronous>, transform_indices = @transform_3, window_bounds = array<i64: 7, 128>}, {pipeline_mode = #tpu.pipeline_mode<synchronous>, transform_indices = @transform_4, window_bounds = array<i64: 1, 128>}, {pipeline_mode = #tpu.pipeline_mode<synchronous>, transform_indices = @transform_5, window_bounds = array<i64: 7, 128>}, {pipeline_mode = #tpu.pipeline_mode<synchronous>, transform_indices = @transform_6, window_bounds = array<i64: 1, 128>}, {pipeline_mode = #tpu.pipeline_mode<synchronous>, transform_indices = @transform_7, window_bounds = array<i64: 11, 128>}, {pipeline_mode = #tpu.pipeline_mode<synchronous>, transform_indices = @transform_8, window_bounds = array<i64: 1, 128>}, {pipeline_mode = #tpu.pipeline_mode<synchronous>, transform_indices = @transform_9, window_bounds = array<i64: 11, 128>}, {pipeline_mode = #tpu.pipeline_mode<synchronous>, transform_indices = @transform_10, window_bounds = array<i64: 1, 128>}, {pipeline_mode = #tpu.pipeline_mode<synchronous>, transform_indices = @transform_11, window_bounds = array<i64: 21, 128>}, {pipeline_mode = #tpu.pipeline_mode<synchronous>, transform_indices = @transform_12, window_bounds = array<i64: 1, 128>}, {pipeline_mode = #tpu.pipeline_mode<synchronous>, transform_indices = @transform_13, window_bounds = array<i64: 21, 128>}, {pipeline_mode = #tpu.pipeline_mode<synchronous>, transform_indices = @transform_14, window_bounds = array<i64: 1, 128>}, {pipeline_mode = #tpu.pipeline_mode<synchronous>, transform_indices = @transform_15, window_bounds = array<i64: 128, 128>}, {pipeline_mode = #tpu.pipeline_mode<synchronous>, transform_indices = @transform_16, window_bounds = array<i64: 1, 128>}, {transform_indices = @transform_17, window_bounds = array<i64: 1, 16, 128>}]} {
    %c0 = arith.constant 0 : index
    %c0_0 = arith.constant 0 : index
    %c0_1 = arith.constant 0 : index
    %0 = vector.load %arg1[%c0, %c0_0, %c0_1] : memref<1x16x128xf32, #tpu.memory_space<vmem>>, vector<1x16x128xf32>
    %1 = vector.shape_cast %0 : vector<1x16x128xf32> to vector<16x128xf32>
    %c0_2 = arith.constant 0 : index
    %c0_3 = arith.constant 0 : index
    %2 = vector.load %arg2[%c0_2, %c0_3] : memref<25x128xf32, #tpu.memory_space<vmem>>, vector<25x128xf32>
    %cst = arith.constant 0.000000e+00 : f32
    %3 = vector.broadcast %cst : f32 to vector<2x128xf32>
    %4 = tpu.concatenate %3, %1, %3 in 0 : vector<2x128xf32>, vector<16x128xf32>, vector<2x128xf32> -> vector<20x128xf32>
    %cst_4 = arith.constant 0.000000e+00 : f32
    %5 = vector.broadcast %cst_4 : f32 to vector<20x16xf32>
    %6 = tpu.concatenate %5, %4, %5 in 1 : vector<20x16xf32>, vector<20x128xf32>, vector<20x16xf32> -> vector<20x160xf32>
    %cst_5 = arith.constant 0.000000e+00 : f32
    %7 = vector.broadcast %cst_5 : f32 to vector<16x128xf32>
    %8 = vector.extract_strided_slice %6 {offsets = [0, 0], sizes = [16, 160], strides = [1, 1]} : vector<20x160xf32> to vector<16x160xf32>
    %9 = vector.extract_strided_slice %8 {offsets = [0, 0], sizes = [16, 128], strides = [1, 1]} : vector<16x160xf32> to vector<16x128xf32>
    %10 = vector.extract_strided_slice %2 {offsets = [0, 0], sizes = [1, 128], strides = [1, 1]} : vector<25x128xf32> to vector<1x128xf32>
    %11 = vector.shape_cast %10 : vector<1x128xf32> to vector<128xf32>
    %12 = vector.shape_cast %11 : vector<128xf32> to vector<1x128xf32>
    %13 = vector.broadcast %12 : vector<1x128xf32> to vector<16x128xf32>
    %14 = arith.mulf %9, %13 : vector<16x128xf32>
    %15 = arith.addf %7, %14 : vector<16x128xf32>
    %16 = vector.extract_strided_slice %8 {offsets = [0, 8], sizes = [16, 128], strides = [1, 1]} : vector<16x160xf32> to vector<16x128xf32>
    %17 = vector.extract_strided_slice %2 {offsets = [1, 0], sizes = [1, 128], strides = [1, 1]} : vector<25x128xf32> to vector<1x128xf32>
    %18 = vector.shape_cast %17 : vector<1x128xf32> to vector<128xf32>
    %19 = vector.shape_cast %18 : vector<128xf32> to vector<1x128xf32>
    %20 = vector.broadcast %19 : vector<1x128xf32> to vector<16x128xf32>
    %21 = arith.mulf %16, %20 : vector<16x128xf32>
    %22 = arith.addf %15, %21 : vector<16x128xf32>
    %23 = vector.extract_strided_slice %8 {offsets = [0, 16], sizes = [16, 128], strides = [1, 1]} : vector<16x160xf32> to vector<16x128xf32>
    %24 = vector.extract_strided_slice %2 {offsets = [2, 0], sizes = [1, 128], strides = [1, 1]} : vector<25x128xf32> to vector<1x128xf32>
    %25 = vector.shape_cast %24 : vector<1x128xf32> to vector<128xf32>
    %26 = vector.shape_cast %25 : vector<128xf32> to vector<1x128xf32>
    %27 = vector.broadcast %26 : vector<1x128xf32> to vector<16x128xf32>
    %28 = arith.mulf %23, %27 : vector<16x128xf32>
    %29 = arith.addf %22, %28 : vector<16x128xf32>
    %30 = vector.extract_strided_slice %8 {offsets = [0, 24], sizes = [16, 128], strides = [1, 1]} : vector<16x160xf32> to vector<16x128xf32>
    %31 = vector.extract_strided_slice %2 {offsets = [3, 0], sizes = [1, 128], strides = [1, 1]} : vector<25x128xf32> to vector<1x128xf32>
    %32 = vector.shape_cast %31 : vector<1x128xf32> to vector<128xf32>
    %33 = vector.shape_cast %32 : vector<128xf32> to vector<1x128xf32>
    %34 = vector.broadcast %33 : vector<1x128xf32> to vector<16x128xf32>
    %35 = arith.mulf %30, %34 : vector<16x128xf32>
    %36 = arith.addf %29, %35 : vector<16x128xf32>
    %37 = vector.extract_strided_slice %8 {offsets = [0, 32], sizes = [16, 128], strides = [1, 1]} : vector<16x160xf32> to vector<16x128xf32>
    %38 = vector.extract_strided_slice %2 {offsets = [4, 0], sizes = [1, 128], strides = [1, 1]} : vector<25x128xf32> to vector<1x128xf32>
    %39 = vector.shape_cast %38 : vector<1x128xf32> to vector<128xf32>
    %40 = vector.shape_cast %39 : vector<128xf32> to vector<1x128xf32>
    %41 = vector.broadcast %40 : vector<1x128xf32> to vector<16x128xf32>
    %42 = arith.mulf %37, %41 : vector<16x128xf32>
    %43 = arith.addf %36, %42 : vector<16x128xf32>
    %44 = vector.extract_strided_slice %6 {offsets = [1, 0], sizes = [16, 160], strides = [1, 1]} : vector<20x160xf32> to vector<16x160xf32>
    %45 = vector.extract_strided_slice %44 {offsets = [0, 0], sizes = [16, 128], strides = [1, 1]} : vector<16x160xf32> to vector<16x128xf32>
    %46 = vector.extract_strided_slice %2 {offsets = [5, 0], sizes = [1, 128], strides = [1, 1]} : vector<25x128xf32> to vector<1x128xf32>
    %47 = vector.shape_cast %46 : vector<1x128xf32> to vector<128xf32>
    %48 = vector.shape_cast %47 : vector<128xf32> to vector<1x128xf32>
    %49 = vector.broadcast %48 : vector<1x128xf32> to vector<16x128xf32>
    %50 = arith.mulf %45, %49 : vector<16x128xf32>
    %51 = arith.addf %43, %50 : vector<16x128xf32>
    %52 = vector.extract_strided_slice %44 {offsets = [0, 8], sizes = [16, 128], strides = [1, 1]} : vector<16x160xf32> to vector<16x128xf32>
    %53 = vector.extract_strided_slice %2 {offsets = [6, 0], sizes = [1, 128], strides = [1, 1]} : vector<25x128xf32> to vector<1x128xf32>
    %54 = vector.shape_cast %53 : vector<1x128xf32> to vector<128xf32>
    %55 = vector.shape_cast %54 : vector<128xf32> to vector<1x128xf32>
    %56 = vector.broadcast %55 : vector<1x128xf32> to vector<16x128xf32>
    %57 = arith.mulf %52, %56 : vector<16x128xf32>
    %58 = arith.addf %51, %57 : vector<16x128xf32>
    %59 = vector.extract_strided_slice %44 {offsets = [0, 16], sizes = [16, 128], strides = [1, 1]} : vector<16x160xf32> to vector<16x128xf32>
    %60 = vector.extract_strided_slice %2 {offsets = [7, 0], sizes = [1, 128], strides = [1, 1]} : vector<25x128xf32> to vector<1x128xf32>
    %61 = vector.shape_cast %60 : vector<1x128xf32> to vector<128xf32>
    %62 = vector.shape_cast %61 : vector<128xf32> to vector<1x128xf32>
    %63 = vector.broadcast %62 : vector<1x128xf32> to vector<16x128xf32>
    %64 = arith.mulf %59, %63 : vector<16x128xf32>
    %65 = arith.addf %58, %64 : vector<16x128xf32>
    %66 = vector.extract_strided_slice %44 {offsets = [0, 24], sizes = [16, 128], strides = [1, 1]} : vector<16x160xf32> to vector<16x128xf32>
    %67 = vector.extract_strided_slice %2 {offsets = [8, 0], sizes = [1, 128], strides = [1, 1]} : vector<25x128xf32> to vector<1x128xf32>
    %68 = vector.shape_cast %67 : vector<1x128xf32> to vector<128xf32>
    %69 = vector.shape_cast %68 : vector<128xf32> to vector<1x128xf32>
    %70 = vector.broadcast %69 : vector<1x128xf32> to vector<16x128xf32>
    %71 = arith.mulf %66, %70 : vector<16x128xf32>
    %72 = arith.addf %65, %71 : vector<16x128xf32>
    %73 = vector.extract_strided_slice %44 {offsets = [0, 32], sizes = [16, 128], strides = [1, 1]} : vector<16x160xf32> to vector<16x128xf32>
    %74 = vector.extract_strided_slice %2 {offsets = [9, 0], sizes = [1, 128], strides = [1, 1]} : vector<25x128xf32> to vector<1x128xf32>
    %75 = vector.shape_cast %74 : vector<1x128xf32> to vector<128xf32>
    %76 = vector.shape_cast %75 : vector<128xf32> to vector<1x128xf32>
    %77 = vector.broadcast %76 : vector<1x128xf32> to vector<16x128xf32>
    %78 = arith.mulf %73, %77 : vector<16x128xf32>
    %79 = arith.addf %72, %78 : vector<16x128xf32>
    %80 = vector.extract_strided_slice %6 {offsets = [2, 0], sizes = [16, 160], strides = [1, 1]} : vector<20x160xf32> to vector<16x160xf32>
    %81 = vector.extract_strided_slice %80 {offsets = [0, 0], sizes = [16, 128], strides = [1, 1]} : vector<16x160xf32> to vector<16x128xf32>
    %82 = vector.extract_strided_slice %2 {offsets = [10, 0], sizes = [1, 128], strides = [1, 1]} : vector<25x128xf32> to vector<1x128xf32>
    %83 = vector.shape_cast %82 : vector<1x128xf32> to vector<128xf32>
    %84 = vector.shape_cast %83 : vector<128xf32> to vector<1x128xf32>
    %85 = vector.broadcast %84 : vector<1x128xf32> to vector<16x128xf32>
    %86 = arith.mulf %81, %85 : vector<16x128xf32>
    %87 = arith.addf %79, %86 : vector<16x128xf32>
    %88 = vector.extract_strided_slice %80 {offsets = [0, 8], sizes = [16, 128], strides = [1, 1]} : vector<16x160xf32> to vector<16x128xf32>
    %89 = vector.extract_strided_slice %2 {offsets = [11, 0], sizes = [1, 128], strides = [1, 1]} : vector<25x128xf32> to vector<1x128xf32>
    %90 = vector.shape_cast %89 : vector<1x128xf32> to vector<128xf32>
    %91 = vector.shape_cast %90 : vector<128xf32> to vector<1x128xf32>
    %92 = vector.broadcast %91 : vector<1x128xf32> to vector<16x128xf32>
    %93 = arith.mulf %88, %92 : vector<16x128xf32>
    %94 = arith.addf %87, %93 : vector<16x128xf32>
    %95 = vector.extract_strided_slice %80 {offsets = [0, 16], sizes = [16, 128], strides = [1, 1]} : vector<16x160xf32> to vector<16x128xf32>
    %96 = vector.extract_strided_slice %2 {offsets = [12, 0], sizes = [1, 128], strides = [1, 1]} : vector<25x128xf32> to vector<1x128xf32>
    %97 = vector.shape_cast %96 : vector<1x128xf32> to vector<128xf32>
    %98 = vector.shape_cast %97 : vector<128xf32> to vector<1x128xf32>
    %99 = vector.broadcast %98 : vector<1x128xf32> to vector<16x128xf32>
    %100 = arith.mulf %95, %99 : vector<16x128xf32>
    %101 = arith.addf %94, %100 : vector<16x128xf32>
    %102 = vector.extract_strided_slice %80 {offsets = [0, 24], sizes = [16, 128], strides = [1, 1]} : vector<16x160xf32> to vector<16x128xf32>
    %103 = vector.extract_strided_slice %2 {offsets = [13, 0], sizes = [1, 128], strides = [1, 1]} : vector<25x128xf32> to vector<1x128xf32>
    %104 = vector.shape_cast %103 : vector<1x128xf32> to vector<128xf32>
    %105 = vector.shape_cast %104 : vector<128xf32> to vector<1x128xf32>
    %106 = vector.broadcast %105 : vector<1x128xf32> to vector<16x128xf32>
    %107 = arith.mulf %102, %106 : vector<16x128xf32>
    %108 = arith.addf %101, %107 : vector<16x128xf32>
    %109 = vector.extract_strided_slice %80 {offsets = [0, 32], sizes = [16, 128], strides = [1, 1]} : vector<16x160xf32> to vector<16x128xf32>
    %110 = vector.extract_strided_slice %2 {offsets = [14, 0], sizes = [1, 128], strides = [1, 1]} : vector<25x128xf32> to vector<1x128xf32>
    %111 = vector.shape_cast %110 : vector<1x128xf32> to vector<128xf32>
    %112 = vector.shape_cast %111 : vector<128xf32> to vector<1x128xf32>
    %113 = vector.broadcast %112 : vector<1x128xf32> to vector<16x128xf32>
    %114 = arith.mulf %109, %113 : vector<16x128xf32>
    %115 = arith.addf %108, %114 : vector<16x128xf32>
    %116 = vector.extract_strided_slice %6 {offsets = [3, 0], sizes = [16, 160], strides = [1, 1]} : vector<20x160xf32> to vector<16x160xf32>
    %117 = vector.extract_strided_slice %116 {offsets = [0, 0], sizes = [16, 128], strides = [1, 1]} : vector<16x160xf32> to vector<16x128xf32>
    %118 = vector.extract_strided_slice %2 {offsets = [15, 0], sizes = [1, 128], strides = [1, 1]} : vector<25x128xf32> to vector<1x128xf32>
    %119 = vector.shape_cast %118 : vector<1x128xf32> to vector<128xf32>
    %120 = vector.shape_cast %119 : vector<128xf32> to vector<1x128xf32>
    %121 = vector.broadcast %120 : vector<1x128xf32> to vector<16x128xf32>
    %122 = arith.mulf %117, %121 : vector<16x128xf32>
    %123 = arith.addf %115, %122 : vector<16x128xf32>
    %124 = vector.extract_strided_slice %116 {offsets = [0, 8], sizes = [16, 128], strides = [1, 1]} : vector<16x160xf32> to vector<16x128xf32>
    %125 = vector.extract_strided_slice %2 {offsets = [16, 0], sizes = [1, 128], strides = [1, 1]} : vector<25x128xf32> to vector<1x128xf32>
    %126 = vector.shape_cast %125 : vector<1x128xf32> to vector<128xf32>
    %127 = vector.shape_cast %126 : vector<128xf32> to vector<1x128xf32>
    %128 = vector.broadcast %127 : vector<1x128xf32> to vector<16x128xf32>
    %129 = arith.mulf %124, %128 : vector<16x128xf32>
    %130 = arith.addf %123, %129 : vector<16x128xf32>
    %131 = vector.extract_strided_slice %116 {offsets = [0, 16], sizes = [16, 128], strides = [1, 1]} : vector<16x160xf32> to vector<16x128xf32>
    %132 = vector.extract_strided_slice %2 {offsets = [17, 0], sizes = [1, 128], strides = [1, 1]} : vector<25x128xf32> to vector<1x128xf32>
    %133 = vector.shape_cast %132 : vector<1x128xf32> to vector<128xf32>
    %134 = vector.shape_cast %133 : vector<128xf32> to vector<1x128xf32>
    %135 = vector.broadcast %134 : vector<1x128xf32> to vector<16x128xf32>
    %136 = arith.mulf %131, %135 : vector<16x128xf32>
    %137 = arith.addf %130, %136 : vector<16x128xf32>
    %138 = vector.extract_strided_slice %116 {offsets = [0, 24], sizes = [16, 128], strides = [1, 1]} : vector<16x160xf32> to vector<16x128xf32>
    %139 = vector.extract_strided_slice %2 {offsets = [18, 0], sizes = [1, 128], strides = [1, 1]} : vector<25x128xf32> to vector<1x128xf32>
    %140 = vector.shape_cast %139 : vector<1x128xf32> to vector<128xf32>
    %141 = vector.shape_cast %140 : vector<128xf32> to vector<1x128xf32>
    %142 = vector.broadcast %141 : vector<1x128xf32> to vector<16x128xf32>
    %143 = arith.mulf %138, %142 : vector<16x128xf32>
    %144 = arith.addf %137, %143 : vector<16x128xf32>
    %145 = vector.extract_strided_slice %116 {offsets = [0, 32], sizes = [16, 128], strides = [1, 1]} : vector<16x160xf32> to vector<16x128xf32>
    %146 = vector.extract_strided_slice %2 {offsets = [19, 0], sizes = [1, 128], strides = [1, 1]} : vector<25x128xf32> to vector<1x128xf32>
    %147 = vector.shape_cast %146 : vector<1x128xf32> to vector<128xf32>
    %148 = vector.shape_cast %147 : vector<128xf32> to vector<1x128xf32>
    %149 = vector.broadcast %148 : vector<1x128xf32> to vector<16x128xf32>
    %150 = arith.mulf %145, %149 : vector<16x128xf32>
    %151 = arith.addf %144, %150 : vector<16x128xf32>
    %152 = vector.extract_strided_slice %6 {offsets = [4, 0], sizes = [16, 160], strides = [1, 1]} : vector<20x160xf32> to vector<16x160xf32>
    %153 = vector.extract_strided_slice %152 {offsets = [0, 0], sizes = [16, 128], strides = [1, 1]} : vector<16x160xf32> to vector<16x128xf32>
    %154 = vector.extract_strided_slice %2 {offsets = [20, 0], sizes = [1, 128], strides = [1, 1]} : vector<25x128xf32> to vector<1x128xf32>
    %155 = vector.shape_cast %154 : vector<1x128xf32> to vector<128xf32>
    %156 = vector.shape_cast %155 : vector<128xf32> to vector<1x128xf32>
    %157 = vector.broadcast %156 : vector<1x128xf32> to vector<16x128xf32>
    %158 = arith.mulf %153, %157 : vector<16x128xf32>
    %159 = arith.addf %151, %158 : vector<16x128xf32>
    %160 = vector.extract_strided_slice %152 {offsets = [0, 8], sizes = [16, 128], strides = [1, 1]} : vector<16x160xf32> to vector<16x128xf32>
    %161 = vector.extract_strided_slice %2 {offsets = [21, 0], sizes = [1, 128], strides = [1, 1]} : vector<25x128xf32> to vector<1x128xf32>
    %162 = vector.shape_cast %161 : vector<1x128xf32> to vector<128xf32>
    %163 = vector.shape_cast %162 : vector<128xf32> to vector<1x128xf32>
    %164 = vector.broadcast %163 : vector<1x128xf32> to vector<16x128xf32>
    %165 = arith.mulf %160, %164 : vector<16x128xf32>
    %166 = arith.addf %159, %165 : vector<16x128xf32>
    %167 = vector.extract_strided_slice %152 {offsets = [0, 16], sizes = [16, 128], strides = [1, 1]} : vector<16x160xf32> to vector<16x128xf32>
    %168 = vector.extract_strided_slice %2 {offsets = [22, 0], sizes = [1, 128], strides = [1, 1]} : vector<25x128xf32> to vector<1x128xf32>
    %169 = vector.shape_cast %168 : vector<1x128xf32> to vector<128xf32>
    %170 = vector.shape_cast %169 : vector<128xf32> to vector<1x128xf32>
    %171 = vector.broadcast %170 : vector<1x128xf32> to vector<16x128xf32>
    %172 = arith.mulf %167, %171 : vector<16x128xf32>
    %173 = arith.addf %166, %172 : vector<16x128xf32>
    %174 = vector.extract_strided_slice %152 {offsets = [0, 24], sizes = [16, 128], strides = [1, 1]} : vector<16x160xf32> to vector<16x128xf32>
    %175 = vector.extract_strided_slice %2 {offsets = [23, 0], sizes = [1, 128], strides = [1, 1]} : vector<25x128xf32> to vector<1x128xf32>
    %176 = vector.shape_cast %175 : vector<1x128xf32> to vector<128xf32>
    %177 = vector.shape_cast %176 : vector<128xf32> to vector<1x128xf32>
    %178 = vector.broadcast %177 : vector<1x128xf32> to vector<16x128xf32>
    %179 = arith.mulf %174, %178 : vector<16x128xf32>
    %180 = arith.addf %173, %179 : vector<16x128xf32>
    %181 = vector.extract_strided_slice %152 {offsets = [0, 32], sizes = [16, 128], strides = [1, 1]} : vector<16x160xf32> to vector<16x128xf32>
    %182 = vector.extract_strided_slice %2 {offsets = [24, 0], sizes = [1, 128], strides = [1, 1]} : vector<25x128xf32> to vector<1x128xf32>
    %183 = vector.shape_cast %182 : vector<1x128xf32> to vector<128xf32>
    %184 = vector.shape_cast %183 : vector<128xf32> to vector<1x128xf32>
    %185 = vector.broadcast %184 : vector<1x128xf32> to vector<16x128xf32>
    %186 = arith.mulf %181, %185 : vector<16x128xf32>
    %187 = arith.addf %180, %186 : vector<16x128xf32>
    %c0_6 = arith.constant 0 : index
    %c0_7 = arith.constant 0 : index
    %188 = vector.load %arg3[%c0_6, %c0_7] : memref<1x128xf32, #tpu.memory_space<vmem>>, vector<1x128xf32>
    %189 = vector.broadcast %188 : vector<1x128xf32> to vector<16x128xf32>
    %190 = arith.addf %187, %189 : vector<16x128xf32>
    %cst_8 = arith.constant 0.000000e+00 : f32
    %191 = vector.broadcast %cst_8 : f32 to vector<16x80xf32>
    %192 = tpu.concatenate %191, %190, %191 in 1 : vector<16x80xf32>, vector<16x128xf32>, vector<16x80xf32> -> vector<16x288xf32>
    %c0_9 = arith.constant 0 : index
    %c0_10 = arith.constant 0 : index
    %193 = vector.load %arg4[%c0_9, %c0_10] : memref<7x128xf32, #tpu.memory_space<vmem>>, vector<7x128xf32>
    %c0_11 = arith.constant 0 : index
    %c0_12 = arith.constant 0 : index
    %194 = vector.load %arg8[%c0_11, %c0_12] : memref<11x128xf32, #tpu.memory_space<vmem>>, vector<11x128xf32>
    %c0_13 = arith.constant 0 : index
    %c0_14 = arith.constant 0 : index
    %195 = vector.load %arg12[%c0_13, %c0_14] : memref<21x128xf32, #tpu.memory_space<vmem>>, vector<21x128xf32>
    %cst_15 = arith.constant 0.000000e+00 : f32
    %196 = vector.broadcast %cst_15 : f32 to vector<16x128xf32>
    %cst_16 = arith.constant 0.000000e+00 : f32
    %197 = vector.broadcast %cst_16 : f32 to vector<16x128xf32>
    %cst_17 = arith.constant 0.000000e+00 : f32
    %198 = vector.broadcast %cst_17 : f32 to vector<16x128xf32>
    %199 = vector.extract_strided_slice %192 {offsets = [0, 0], sizes = [16, 128], strides = [1, 1]} : vector<16x288xf32> to vector<16x128xf32>
    %200 = vector.extract_strided_slice %195 {offsets = [0, 0], sizes = [1, 128], strides = [1, 1]} : vector<21x128xf32> to vector<1x128xf32>
    %201 = vector.shape_cast %200 : vector<1x128xf32> to vector<128xf32>
    %202 = vector.shape_cast %201 : vector<128xf32> to vector<1x128xf32>
    %203 = vector.broadcast %202 : vector<1x128xf32> to vector<16x128xf32>
    %204 = arith.mulf %199, %203 : vector<16x128xf32>
    %205 = arith.addf %198, %204 : vector<16x128xf32>
    %206 = vector.extract_strided_slice %192 {offsets = [0, 8], sizes = [16, 128], strides = [1, 1]} : vector<16x288xf32> to vector<16x128xf32>
    %207 = vector.extract_strided_slice %195 {offsets = [1, 0], sizes = [1, 128], strides = [1, 1]} : vector<21x128xf32> to vector<1x128xf32>
    %208 = vector.shape_cast %207 : vector<1x128xf32> to vector<128xf32>
    %209 = vector.shape_cast %208 : vector<128xf32> to vector<1x128xf32>
    %210 = vector.broadcast %209 : vector<1x128xf32> to vector<16x128xf32>
    %211 = arith.mulf %206, %210 : vector<16x128xf32>
    %212 = arith.addf %205, %211 : vector<16x128xf32>
    %213 = vector.extract_strided_slice %192 {offsets = [0, 16], sizes = [16, 128], strides = [1, 1]} : vector<16x288xf32> to vector<16x128xf32>
    %214 = vector.extract_strided_slice %195 {offsets = [2, 0], sizes = [1, 128], strides = [1, 1]} : vector<21x128xf32> to vector<1x128xf32>
    %215 = vector.shape_cast %214 : vector<1x128xf32> to vector<128xf32>
    %216 = vector.shape_cast %215 : vector<128xf32> to vector<1x128xf32>
    %217 = vector.broadcast %216 : vector<1x128xf32> to vector<16x128xf32>
    %218 = arith.mulf %213, %217 : vector<16x128xf32>
    %219 = arith.addf %212, %218 : vector<16x128xf32>
    %220 = vector.extract_strided_slice %192 {offsets = [0, 24], sizes = [16, 128], strides = [1, 1]} : vector<16x288xf32> to vector<16x128xf32>
    %221 = vector.extract_strided_slice %195 {offsets = [3, 0], sizes = [1, 128], strides = [1, 1]} : vector<21x128xf32> to vector<1x128xf32>
    %222 = vector.shape_cast %221 : vector<1x128xf32> to vector<128xf32>
    %223 = vector.shape_cast %222 : vector<128xf32> to vector<1x128xf32>
    %224 = vector.broadcast %223 : vector<1x128xf32> to vector<16x128xf32>
    %225 = arith.mulf %220, %224 : vector<16x128xf32>
    %226 = arith.addf %219, %225 : vector<16x128xf32>
    %227 = vector.extract_strided_slice %192 {offsets = [0, 32], sizes = [16, 128], strides = [1, 1]} : vector<16x288xf32> to vector<16x128xf32>
    %228 = vector.extract_strided_slice %195 {offsets = [4, 0], sizes = [1, 128], strides = [1, 1]} : vector<21x128xf32> to vector<1x128xf32>
    %229 = vector.shape_cast %228 : vector<1x128xf32> to vector<128xf32>
    %230 = vector.shape_cast %229 : vector<128xf32> to vector<1x128xf32>
    %231 = vector.broadcast %230 : vector<1x128xf32> to vector<16x128xf32>
    %232 = arith.mulf %227, %231 : vector<16x128xf32>
    %233 = arith.addf %226, %232 : vector<16x128xf32>
    %234 = vector.extract_strided_slice %192 {offsets = [0, 40], sizes = [16, 128], strides = [1, 1]} : vector<16x288xf32> to vector<16x128xf32>
    %235 = vector.extract_strided_slice %195 {offsets = [5, 0], sizes = [1, 128], strides = [1, 1]} : vector<21x128xf32> to vector<1x128xf32>
    %236 = vector.shape_cast %235 : vector<1x128xf32> to vector<128xf32>
    %237 = vector.shape_cast %236 : vector<128xf32> to vector<1x128xf32>
    %238 = vector.broadcast %237 : vector<1x128xf32> to vector<16x128xf32>
    %239 = arith.mulf %234, %238 : vector<16x128xf32>
    %240 = arith.addf %233, %239 : vector<16x128xf32>
    %241 = vector.extract_strided_slice %194 {offsets = [0, 0], sizes = [1, 128], strides = [1, 1]} : vector<11x128xf32> to vector<1x128xf32>
    %242 = vector.shape_cast %241 : vector<1x128xf32> to vector<128xf32>
    %243 = vector.shape_cast %242 : vector<128xf32> to vector<1x128xf32>
    %244 = vector.broadcast %243 : vector<1x128xf32> to vector<16x128xf32>
    %245 = arith.mulf %234, %244 : vector<16x128xf32>
    %246 = arith.addf %197, %245 : vector<16x128xf32>
    %247 = vector.extract_strided_slice %192 {offsets = [0, 48], sizes = [16, 128], strides = [1, 1]} : vector<16x288xf32> to vector<16x128xf32>
    %248 = vector.extract_strided_slice %195 {offsets = [6, 0], sizes = [1, 128], strides = [1, 1]} : vector<21x128xf32> to vector<1x128xf32>
    %249 = vector.shape_cast %248 : vector<1x128xf32> to vector<128xf32>
    %250 = vector.shape_cast %249 : vector<128xf32> to vector<1x128xf32>
    %251 = vector.broadcast %250 : vector<1x128xf32> to vector<16x128xf32>
    %252 = arith.mulf %247, %251 : vector<16x128xf32>
    %253 = arith.addf %240, %252 : vector<16x128xf32>
    %254 = vector.extract_strided_slice %194 {offsets = [1, 0], sizes = [1, 128], strides = [1, 1]} : vector<11x128xf32> to vector<1x128xf32>
    %255 = vector.shape_cast %254 : vector<1x128xf32> to vector<128xf32>
    %256 = vector.shape_cast %255 : vector<128xf32> to vector<1x128xf32>
    %257 = vector.broadcast %256 : vector<1x128xf32> to vector<16x128xf32>
    %258 = arith.mulf %247, %257 : vector<16x128xf32>
    %259 = arith.addf %246, %258 : vector<16x128xf32>
    %260 = vector.extract_strided_slice %192 {offsets = [0, 56], sizes = [16, 128], strides = [1, 1]} : vector<16x288xf32> to vector<16x128xf32>
    %261 = vector.extract_strided_slice %195 {offsets = [7, 0], sizes = [1, 128], strides = [1, 1]} : vector<21x128xf32> to vector<1x128xf32>
    %262 = vector.shape_cast %261 : vector<1x128xf32> to vector<128xf32>
    %263 = vector.shape_cast %262 : vector<128xf32> to vector<1x128xf32>
    %264 = vector.broadcast %263 : vector<1x128xf32> to vector<16x128xf32>
    %265 = arith.mulf %260, %264 : vector<16x128xf32>
    %266 = arith.addf %253, %265 : vector<16x128xf32>
    %267 = vector.extract_strided_slice %194 {offsets = [2, 0], sizes = [1, 128], strides = [1, 1]} : vector<11x128xf32> to vector<1x128xf32>
    %268 = vector.shape_cast %267 : vector<1x128xf32> to vector<128xf32>
    %269 = vector.shape_cast %268 : vector<128xf32> to vector<1x128xf32>
    %270 = vector.broadcast %269 : vector<1x128xf32> to vector<16x128xf32>
    %271 = arith.mulf %260, %270 : vector<16x128xf32>
    %272 = arith.addf %259, %271 : vector<16x128xf32>
    %273 = vector.extract_strided_slice %193 {offsets = [0, 0], sizes = [1, 128], strides = [1, 1]} : vector<7x128xf32> to vector<1x128xf32>
    %274 = vector.shape_cast %273 : vector<1x128xf32> to vector<128xf32>
    %275 = vector.shape_cast %274 : vector<128xf32> to vector<1x128xf32>
    %276 = vector.broadcast %275 : vector<1x128xf32> to vector<16x128xf32>
    %277 = arith.mulf %260, %276 : vector<16x128xf32>
    %278 = arith.addf %196, %277 : vector<16x128xf32>
    %279 = vector.extract_strided_slice %192 {offsets = [0, 64], sizes = [16, 128], strides = [1, 1]} : vector<16x288xf32> to vector<16x128xf32>
    %280 = vector.extract_strided_slice %195 {offsets = [8, 0], sizes = [1, 128], strides = [1, 1]} : vector<21x128xf32> to vector<1x128xf32>
    %281 = vector.shape_cast %280 : vector<1x128xf32> to vector<128xf32>
    %282 = vector.shape_cast %281 : vector<128xf32> to vector<1x128xf32>
    %283 = vector.broadcast %282 : vector<1x128xf32> to vector<16x128xf32>
    %284 = arith.mulf %279, %283 : vector<16x128xf32>
    %285 = arith.addf %266, %284 : vector<16x128xf32>
    %286 = vector.extract_strided_slice %194 {offsets = [3, 0], sizes = [1, 128], strides = [1, 1]} : vector<11x128xf32> to vector<1x128xf32>
    %287 = vector.shape_cast %286 : vector<1x128xf32> to vector<128xf32>
    %288 = vector.shape_cast %287 : vector<128xf32> to vector<1x128xf32>
    %289 = vector.broadcast %288 : vector<1x128xf32> to vector<16x128xf32>
    %290 = arith.mulf %279, %289 : vector<16x128xf32>
    %291 = arith.addf %272, %290 : vector<16x128xf32>
    %292 = vector.extract_strided_slice %193 {offsets = [1, 0], sizes = [1, 128], strides = [1, 1]} : vector<7x128xf32> to vector<1x128xf32>
    %293 = vector.shape_cast %292 : vector<1x128xf32> to vector<128xf32>
    %294 = vector.shape_cast %293 : vector<128xf32> to vector<1x128xf32>
    %295 = vector.broadcast %294 : vector<1x128xf32> to vector<16x128xf32>
    %296 = arith.mulf %279, %295 : vector<16x128xf32>
    %297 = arith.addf %278, %296 : vector<16x128xf32>
    %298 = vector.extract_strided_slice %192 {offsets = [0, 72], sizes = [16, 128], strides = [1, 1]} : vector<16x288xf32> to vector<16x128xf32>
    %299 = vector.extract_strided_slice %195 {offsets = [9, 0], sizes = [1, 128], strides = [1, 1]} : vector<21x128xf32> to vector<1x128xf32>
    %300 = vector.shape_cast %299 : vector<1x128xf32> to vector<128xf32>
    %301 = vector.shape_cast %300 : vector<128xf32> to vector<1x128xf32>
    %302 = vector.broadcast %301 : vector<1x128xf32> to vector<16x128xf32>
    %303 = arith.mulf %298, %302 : vector<16x128xf32>
    %304 = arith.addf %285, %303 : vector<16x128xf32>
    %305 = vector.extract_strided_slice %194 {offsets = [4, 0], sizes = [1, 128], strides = [1, 1]} : vector<11x128xf32> to vector<1x128xf32>
    %306 = vector.shape_cast %305 : vector<1x128xf32> to vector<128xf32>
    %307 = vector.shape_cast %306 : vector<128xf32> to vector<1x128xf32>
    %308 = vector.broadcast %307 : vector<1x128xf32> to vector<16x128xf32>
    %309 = arith.mulf %298, %308 : vector<16x128xf32>
    %310 = arith.addf %291, %309 : vector<16x128xf32>
    %311 = vector.extract_strided_slice %193 {offsets = [2, 0], sizes = [1, 128], strides = [1, 1]} : vector<7x128xf32> to vector<1x128xf32>
    %312 = vector.shape_cast %311 : vector<1x128xf32> to vector<128xf32>
    %313 = vector.shape_cast %312 : vector<128xf32> to vector<1x128xf32>
    %314 = vector.broadcast %313 : vector<1x128xf32> to vector<16x128xf32>
    %315 = arith.mulf %298, %314 : vector<16x128xf32>
    %316 = arith.addf %297, %315 : vector<16x128xf32>
    %317 = vector.extract_strided_slice %192 {offsets = [0, 80], sizes = [16, 128], strides = [1, 1]} : vector<16x288xf32> to vector<16x128xf32>
    %318 = vector.extract_strided_slice %195 {offsets = [10, 0], sizes = [1, 128], strides = [1, 1]} : vector<21x128xf32> to vector<1x128xf32>
    %319 = vector.shape_cast %318 : vector<1x128xf32> to vector<128xf32>
    %320 = vector.shape_cast %319 : vector<128xf32> to vector<1x128xf32>
    %321 = vector.broadcast %320 : vector<1x128xf32> to vector<16x128xf32>
    %322 = arith.mulf %317, %321 : vector<16x128xf32>
    %323 = arith.addf %304, %322 : vector<16x128xf32>
    %324 = vector.extract_strided_slice %194 {offsets = [5, 0], sizes = [1, 128], strides = [1, 1]} : vector<11x128xf32> to vector<1x128xf32>
    %325 = vector.shape_cast %324 : vector<1x128xf32> to vector<128xf32>
    %326 = vector.shape_cast %325 : vector<128xf32> to vector<1x128xf32>
    %327 = vector.broadcast %326 : vector<1x128xf32> to vector<16x128xf32>
    %328 = arith.mulf %317, %327 : vector<16x128xf32>
    %329 = arith.addf %310, %328 : vector<16x128xf32>
    %330 = vector.extract_strided_slice %193 {offsets = [3, 0], sizes = [1, 128], strides = [1, 1]} : vector<7x128xf32> to vector<1x128xf32>
    %331 = vector.shape_cast %330 : vector<1x128xf32> to vector<128xf32>
    %332 = vector.shape_cast %331 : vector<128xf32> to vector<1x128xf32>
    %333 = vector.broadcast %332 : vector<1x128xf32> to vector<16x128xf32>
    %334 = arith.mulf %317, %333 : vector<16x128xf32>
    %335 = arith.addf %316, %334 : vector<16x128xf32>
    %336 = vector.extract_strided_slice %192 {offsets = [0, 88], sizes = [16, 128], strides = [1, 1]} : vector<16x288xf32> to vector<16x128xf32>
    %337 = vector.extract_strided_slice %195 {offsets = [11, 0], sizes = [1, 128], strides = [1, 1]} : vector<21x128xf32> to vector<1x128xf32>
    %338 = vector.shape_cast %337 : vector<1x128xf32> to vector<128xf32>
    %339 = vector.shape_cast %338 : vector<128xf32> to vector<1x128xf32>
    %340 = vector.broadcast %339 : vector<1x128xf32> to vector<16x128xf32>
    %341 = arith.mulf %336, %340 : vector<16x128xf32>
    %342 = arith.addf %323, %341 : vector<16x128xf32>
    %343 = vector.extract_strided_slice %194 {offsets = [6, 0], sizes = [1, 128], strides = [1, 1]} : vector<11x128xf32> to vector<1x128xf32>
    %344 = vector.shape_cast %343 : vector<1x128xf32> to vector<128xf32>
    %345 = vector.shape_cast %344 : vector<128xf32> to vector<1x128xf32>
    %346 = vector.broadcast %345 : vector<1x128xf32> to vector<16x128xf32>
    %347 = arith.mulf %336, %346 : vector<16x128xf32>
    %348 = arith.addf %329, %347 : vector<16x128xf32>
    %349 = vector.extract_strided_slice %193 {offsets = [4, 0], sizes = [1, 128], strides = [1, 1]} : vector<7x128xf32> to vector<1x128xf32>
    %350 = vector.shape_cast %349 : vector<1x128xf32> to vector<128xf32>
    %351 = vector.shape_cast %350 : vector<128xf32> to vector<1x128xf32>
    %352 = vector.broadcast %351 : vector<1x128xf32> to vector<16x128xf32>
    %353 = arith.mulf %336, %352 : vector<16x128xf32>
    %354 = arith.addf %335, %353 : vector<16x128xf32>
    %355 = vector.extract_strided_slice %192 {offsets = [0, 96], sizes = [16, 128], strides = [1, 1]} : vector<16x288xf32> to vector<16x128xf32>
    %356 = vector.extract_strided_slice %195 {offsets = [12, 0], sizes = [1, 128], strides = [1, 1]} : vector<21x128xf32> to vector<1x128xf32>
    %357 = vector.shape_cast %356 : vector<1x128xf32> to vector<128xf32>
    %358 = vector.shape_cast %357 : vector<128xf32> to vector<1x128xf32>
    %359 = vector.broadcast %358 : vector<1x128xf32> to vector<16x128xf32>
    %360 = arith.mulf %355, %359 : vector<16x128xf32>
    %361 = arith.addf %342, %360 : vector<16x128xf32>
    %362 = vector.extract_strided_slice %194 {offsets = [7, 0], sizes = [1, 128], strides = [1, 1]} : vector<11x128xf32> to vector<1x128xf32>
    %363 = vector.shape_cast %362 : vector<1x128xf32> to vector<128xf32>
    %364 = vector.shape_cast %363 : vector<128xf32> to vector<1x128xf32>
    %365 = vector.broadcast %364 : vector<1x128xf32> to vector<16x128xf32>
    %366 = arith.mulf %355, %365 : vector<16x128xf32>
    %367 = arith.addf %348, %366 : vector<16x128xf32>
    %368 = vector.extract_strided_slice %193 {offsets = [5, 0], sizes = [1, 128], strides = [1, 1]} : vector<7x128xf32> to vector<1x128xf32>
    %369 = vector.shape_cast %368 : vector<1x128xf32> to vector<128xf32>
    %370 = vector.shape_cast %369 : vector<128xf32> to vector<1x128xf32>
    %371 = vector.broadcast %370 : vector<1x128xf32> to vector<16x128xf32>
    %372 = arith.mulf %355, %371 : vector<16x128xf32>
    %373 = arith.addf %354, %372 : vector<16x128xf32>
    %374 = vector.extract_strided_slice %192 {offsets = [0, 104], sizes = [16, 128], strides = [1, 1]} : vector<16x288xf32> to vector<16x128xf32>
    %375 = vector.extract_strided_slice %195 {offsets = [13, 0], sizes = [1, 128], strides = [1, 1]} : vector<21x128xf32> to vector<1x128xf32>
    %376 = vector.shape_cast %375 : vector<1x128xf32> to vector<128xf32>
    %377 = vector.shape_cast %376 : vector<128xf32> to vector<1x128xf32>
    %378 = vector.broadcast %377 : vector<1x128xf32> to vector<16x128xf32>
    %379 = arith.mulf %374, %378 : vector<16x128xf32>
    %380 = arith.addf %361, %379 : vector<16x128xf32>
    %381 = vector.extract_strided_slice %194 {offsets = [8, 0], sizes = [1, 128], strides = [1, 1]} : vector<11x128xf32> to vector<1x128xf32>
    %382 = vector.shape_cast %381 : vector<1x128xf32> to vector<128xf32>
    %383 = vector.shape_cast %382 : vector<128xf32> to vector<1x128xf32>
    %384 = vector.broadcast %383 : vector<1x128xf32> to vector<16x128xf32>
    %385 = arith.mulf %374, %384 : vector<16x128xf32>
    %386 = arith.addf %367, %385 : vector<16x128xf32>
    %387 = vector.extract_strided_slice %193 {offsets = [6, 0], sizes = [1, 128], strides = [1, 1]} : vector<7x128xf32> to vector<1x128xf32>
    %388 = vector.shape_cast %387 : vector<1x128xf32> to vector<128xf32>
    %389 = vector.shape_cast %388 : vector<128xf32> to vector<1x128xf32>
    %390 = vector.broadcast %389 : vector<1x128xf32> to vector<16x128xf32>
    %391 = arith.mulf %374, %390 : vector<16x128xf32>
    %392 = arith.addf %373, %391 : vector<16x128xf32>
    %393 = vector.extract_strided_slice %192 {offsets = [0, 112], sizes = [16, 128], strides = [1, 1]} : vector<16x288xf32> to vector<16x128xf32>
    %394 = vector.extract_strided_slice %195 {offsets = [14, 0], sizes = [1, 128], strides = [1, 1]} : vector<21x128xf32> to vector<1x128xf32>
    %395 = vector.shape_cast %394 : vector<1x128xf32> to vector<128xf32>
    %396 = vector.shape_cast %395 : vector<128xf32> to vector<1x128xf32>
    %397 = vector.broadcast %396 : vector<1x128xf32> to vector<16x128xf32>
    %398 = arith.mulf %393, %397 : vector<16x128xf32>
    %399 = arith.addf %380, %398 : vector<16x128xf32>
    %400 = vector.extract_strided_slice %194 {offsets = [9, 0], sizes = [1, 128], strides = [1, 1]} : vector<11x128xf32> to vector<1x128xf32>
    %401 = vector.shape_cast %400 : vector<1x128xf32> to vector<128xf32>
    %402 = vector.shape_cast %401 : vector<128xf32> to vector<1x128xf32>
    %403 = vector.broadcast %402 : vector<1x128xf32> to vector<16x128xf32>
    %404 = arith.mulf %393, %403 : vector<16x128xf32>
    %405 = arith.addf %386, %404 : vector<16x128xf32>
    %406 = vector.extract_strided_slice %192 {offsets = [0, 120], sizes = [16, 128], strides = [1, 1]} : vector<16x288xf32> to vector<16x128xf32>
    %407 = vector.extract_strided_slice %195 {offsets = [15, 0], sizes = [1, 128], strides = [1, 1]} : vector<21x128xf32> to vector<1x128xf32>
    %408 = vector.shape_cast %407 : vector<1x128xf32> to vector<128xf32>
    %409 = vector.shape_cast %408 : vector<128xf32> to vector<1x128xf32>
    %410 = vector.broadcast %409 : vector<1x128xf32> to vector<16x128xf32>
    %411 = arith.mulf %406, %410 : vector<16x128xf32>
    %412 = arith.addf %399, %411 : vector<16x128xf32>
    %413 = vector.extract_strided_slice %194 {offsets = [10, 0], sizes = [1, 128], strides = [1, 1]} : vector<11x128xf32> to vector<1x128xf32>
    %414 = vector.shape_cast %413 : vector<1x128xf32> to vector<128xf32>
    %415 = vector.shape_cast %414 : vector<128xf32> to vector<1x128xf32>
    %416 = vector.broadcast %415 : vector<1x128xf32> to vector<16x128xf32>
    %417 = arith.mulf %406, %416 : vector<16x128xf32>
    %418 = arith.addf %405, %417 : vector<16x128xf32>
    %419 = vector.extract_strided_slice %192 {offsets = [0, 128], sizes = [16, 128], strides = [1, 1]} : vector<16x288xf32> to vector<16x128xf32>
    %420 = vector.extract_strided_slice %195 {offsets = [16, 0], sizes = [1, 128], strides = [1, 1]} : vector<21x128xf32> to vector<1x128xf32>
    %421 = vector.shape_cast %420 : vector<1x128xf32> to vector<128xf32>
    %422 = vector.shape_cast %421 : vector<128xf32> to vector<1x128xf32>
    %423 = vector.broadcast %422 : vector<1x128xf32> to vector<16x128xf32>
    %424 = arith.mulf %419, %423 : vector<16x128xf32>
    %425 = arith.addf %412, %424 : vector<16x128xf32>
    %426 = vector.extract_strided_slice %192 {offsets = [0, 136], sizes = [16, 128], strides = [1, 1]} : vector<16x288xf32> to vector<16x128xf32>
    %427 = vector.extract_strided_slice %195 {offsets = [17, 0], sizes = [1, 128], strides = [1, 1]} : vector<21x128xf32> to vector<1x128xf32>
    %428 = vector.shape_cast %427 : vector<1x128xf32> to vector<128xf32>
    %429 = vector.shape_cast %428 : vector<128xf32> to vector<1x128xf32>
    %430 = vector.broadcast %429 : vector<1x128xf32> to vector<16x128xf32>
    %431 = arith.mulf %426, %430 : vector<16x128xf32>
    %432 = arith.addf %425, %431 : vector<16x128xf32>
    %433 = vector.extract_strided_slice %192 {offsets = [0, 144], sizes = [16, 128], strides = [1, 1]} : vector<16x288xf32> to vector<16x128xf32>
    %434 = vector.extract_strided_slice %195 {offsets = [18, 0], sizes = [1, 128], strides = [1, 1]} : vector<21x128xf32> to vector<1x128xf32>
    %435 = vector.shape_cast %434 : vector<1x128xf32> to vector<128xf32>
    %436 = vector.shape_cast %435 : vector<128xf32> to vector<1x128xf32>
    %437 = vector.broadcast %436 : vector<1x128xf32> to vector<16x128xf32>
    %438 = arith.mulf %433, %437 : vector<16x128xf32>
    %439 = arith.addf %432, %438 : vector<16x128xf32>
    %440 = vector.extract_strided_slice %192 {offsets = [0, 152], sizes = [16, 128], strides = [1, 1]} : vector<16x288xf32> to vector<16x128xf32>
    %441 = vector.extract_strided_slice %195 {offsets = [19, 0], sizes = [1, 128], strides = [1, 1]} : vector<21x128xf32> to vector<1x128xf32>
    %442 = vector.shape_cast %441 : vector<1x128xf32> to vector<128xf32>
    %443 = vector.shape_cast %442 : vector<128xf32> to vector<1x128xf32>
    %444 = vector.broadcast %443 : vector<1x128xf32> to vector<16x128xf32>
    %445 = arith.mulf %440, %444 : vector<16x128xf32>
    %446 = arith.addf %439, %445 : vector<16x128xf32>
    %447 = vector.extract_strided_slice %192 {offsets = [0, 160], sizes = [16, 128], strides = [1, 1]} : vector<16x288xf32> to vector<16x128xf32>
    %448 = vector.extract_strided_slice %195 {offsets = [20, 0], sizes = [1, 128], strides = [1, 1]} : vector<21x128xf32> to vector<1x128xf32>
    %449 = vector.shape_cast %448 : vector<1x128xf32> to vector<128xf32>
    %450 = vector.shape_cast %449 : vector<128xf32> to vector<1x128xf32>
    %451 = vector.broadcast %450 : vector<1x128xf32> to vector<16x128xf32>
    %452 = arith.mulf %447, %451 : vector<16x128xf32>
    %453 = arith.addf %446, %452 : vector<16x128xf32>
    %c0_18 = arith.constant 0 : index
    %c0_19 = arith.constant 0 : index
    %454 = vector.load %arg5[%c0_18, %c0_19] : memref<1x128xf32, #tpu.memory_space<vmem>>, vector<1x128xf32>
    %455 = vector.broadcast %454 : vector<1x128xf32> to vector<16x128xf32>
    %456 = arith.addf %392, %455 : vector<16x128xf32>
    %c0_20 = arith.constant 0 : index
    %c0_21 = arith.constant 0 : index
    %457 = vector.load %arg6[%c0_20, %c0_21] : memref<7x128xf32, #tpu.memory_space<vmem>>, vector<7x128xf32>
    %cst_22 = arith.constant 0.000000e+00 : f32
    %458 = vector.broadcast %cst_22 : f32 to vector<3x128xf32>
    %459 = tpu.concatenate %458, %456, %458 in 0 : vector<3x128xf32>, vector<16x128xf32>, vector<3x128xf32> -> vector<22x128xf32>
    %cst_23 = arith.constant 0.000000e+00 : f32
    %460 = vector.broadcast %cst_23 : f32 to vector<16x128xf32>
    %461 = vector.extract_strided_slice %459 {offsets = [0, 0], sizes = [16, 128], strides = [1, 1]} : vector<22x128xf32> to vector<16x128xf32>
    %462 = vector.extract_strided_slice %457 {offsets = [0, 0], sizes = [1, 128], strides = [1, 1]} : vector<7x128xf32> to vector<1x128xf32>
    %463 = vector.shape_cast %462 : vector<1x128xf32> to vector<128xf32>
    %464 = vector.shape_cast %463 : vector<128xf32> to vector<1x128xf32>
    %465 = vector.broadcast %464 : vector<1x128xf32> to vector<16x128xf32>
    %466 = arith.mulf %461, %465 : vector<16x128xf32>
    %467 = arith.addf %460, %466 : vector<16x128xf32>
    %468 = vector.extract_strided_slice %459 {offsets = [1, 0], sizes = [16, 128], strides = [1, 1]} : vector<22x128xf32> to vector<16x128xf32>
    %469 = vector.extract_strided_slice %457 {offsets = [1, 0], sizes = [1, 128], strides = [1, 1]} : vector<7x128xf32> to vector<1x128xf32>
    %470 = vector.shape_cast %469 : vector<1x128xf32> to vector<128xf32>
    %471 = vector.shape_cast %470 : vector<128xf32> to vector<1x128xf32>
    %472 = vector.broadcast %471 : vector<1x128xf32> to vector<16x128xf32>
    %473 = arith.mulf %468, %472 : vector<16x128xf32>
    %474 = arith.addf %467, %473 : vector<16x128xf32>
    %475 = vector.extract_strided_slice %459 {offsets = [2, 0], sizes = [16, 128], strides = [1, 1]} : vector<22x128xf32> to vector<16x128xf32>
    %476 = vector.extract_strided_slice %457 {offsets = [2, 0], sizes = [1, 128], strides = [1, 1]} : vector<7x128xf32> to vector<1x128xf32>
    %477 = vector.shape_cast %476 : vector<1x128xf32> to vector<128xf32>
    %478 = vector.shape_cast %477 : vector<128xf32> to vector<1x128xf32>
    %479 = vector.broadcast %478 : vector<1x128xf32> to vector<16x128xf32>
    %480 = arith.mulf %475, %479 : vector<16x128xf32>
    %481 = arith.addf %474, %480 : vector<16x128xf32>
    %482 = vector.extract_strided_slice %459 {offsets = [3, 0], sizes = [16, 128], strides = [1, 1]} : vector<22x128xf32> to vector<16x128xf32>
    %483 = vector.extract_strided_slice %457 {offsets = [3, 0], sizes = [1, 128], strides = [1, 1]} : vector<7x128xf32> to vector<1x128xf32>
    %484 = vector.shape_cast %483 : vector<1x128xf32> to vector<128xf32>
    %485 = vector.shape_cast %484 : vector<128xf32> to vector<1x128xf32>
    %486 = vector.broadcast %485 : vector<1x128xf32> to vector<16x128xf32>
    %487 = arith.mulf %482, %486 : vector<16x128xf32>
    %488 = arith.addf %481, %487 : vector<16x128xf32>
    %489 = vector.extract_strided_slice %459 {offsets = [4, 0], sizes = [16, 128], strides = [1, 1]} : vector<22x128xf32> to vector<16x128xf32>
    %490 = vector.extract_strided_slice %457 {offsets = [4, 0], sizes = [1, 128], strides = [1, 1]} : vector<7x128xf32> to vector<1x128xf32>
    %491 = vector.shape_cast %490 : vector<1x128xf32> to vector<128xf32>
    %492 = vector.shape_cast %491 : vector<128xf32> to vector<1x128xf32>
    %493 = vector.broadcast %492 : vector<1x128xf32> to vector<16x128xf32>
    %494 = arith.mulf %489, %493 : vector<16x128xf32>
    %495 = arith.addf %488, %494 : vector<16x128xf32>
    %496 = vector.extract_strided_slice %459 {offsets = [5, 0], sizes = [16, 128], strides = [1, 1]} : vector<22x128xf32> to vector<16x128xf32>
    %497 = vector.extract_strided_slice %457 {offsets = [5, 0], sizes = [1, 128], strides = [1, 1]} : vector<7x128xf32> to vector<1x128xf32>
    %498 = vector.shape_cast %497 : vector<1x128xf32> to vector<128xf32>
    %499 = vector.shape_cast %498 : vector<128xf32> to vector<1x128xf32>
    %500 = vector.broadcast %499 : vector<1x128xf32> to vector<16x128xf32>
    %501 = arith.mulf %496, %500 : vector<16x128xf32>
    %502 = arith.addf %495, %501 : vector<16x128xf32>
    %503 = vector.extract_strided_slice %459 {offsets = [6, 0], sizes = [16, 128], strides = [1, 1]} : vector<22x128xf32> to vector<16x128xf32>
    %504 = vector.extract_strided_slice %457 {offsets = [6, 0], sizes = [1, 128], strides = [1, 1]} : vector<7x128xf32> to vector<1x128xf32>
    %505 = vector.shape_cast %504 : vector<1x128xf32> to vector<128xf32>
    %506 = vector.shape_cast %505 : vector<128xf32> to vector<1x128xf32>
    %507 = vector.broadcast %506 : vector<1x128xf32> to vector<16x128xf32>
    %508 = arith.mulf %503, %507 : vector<16x128xf32>
    %509 = arith.addf %502, %508 : vector<16x128xf32>
    %510 = arith.addf %190, %509 : vector<16x128xf32>
    %c0_24 = arith.constant 0 : index
    %c0_25 = arith.constant 0 : index
    %511 = vector.load %arg7[%c0_24, %c0_25] : memref<1x128xf32, #tpu.memory_space<vmem>>, vector<1x128xf32>
    %512 = vector.broadcast %511 : vector<1x128xf32> to vector<16x128xf32>
    %513 = arith.addf %510, %512 : vector<16x128xf32>
    %c0_26 = arith.constant 0 : index
    %c0_27 = arith.constant 0 : index
    %514 = vector.load %arg9[%c0_26, %c0_27] : memref<1x128xf32, #tpu.memory_space<vmem>>, vector<1x128xf32>
    %515 = vector.broadcast %514 : vector<1x128xf32> to vector<16x128xf32>
    %516 = arith.addf %418, %515 : vector<16x128xf32>
    %c0_28 = arith.constant 0 : index
    %c0_29 = arith.constant 0 : index
    %517 = vector.load %arg10[%c0_28, %c0_29] : memref<11x128xf32, #tpu.memory_space<vmem>>, vector<11x128xf32>
    %cst_30 = arith.constant 0.000000e+00 : f32
    %518 = vector.broadcast %cst_30 : f32 to vector<5x128xf32>
    %519 = tpu.concatenate %518, %516, %518 in 0 : vector<5x128xf32>, vector<16x128xf32>, vector<5x128xf32> -> vector<26x128xf32>
    %cst_31 = arith.constant 0.000000e+00 : f32
    %520 = vector.broadcast %cst_31 : f32 to vector<16x128xf32>
    %521 = vector.extract_strided_slice %519 {offsets = [0, 0], sizes = [16, 128], strides = [1, 1]} : vector<26x128xf32> to vector<16x128xf32>
    %522 = vector.extract_strided_slice %517 {offsets = [0, 0], sizes = [1, 128], strides = [1, 1]} : vector<11x128xf32> to vector<1x128xf32>
    %523 = vector.shape_cast %522 : vector<1x128xf32> to vector<128xf32>
    %524 = vector.shape_cast %523 : vector<128xf32> to vector<1x128xf32>
    %525 = vector.broadcast %524 : vector<1x128xf32> to vector<16x128xf32>
    %526 = arith.mulf %521, %525 : vector<16x128xf32>
    %527 = arith.addf %520, %526 : vector<16x128xf32>
    %528 = vector.extract_strided_slice %519 {offsets = [1, 0], sizes = [16, 128], strides = [1, 1]} : vector<26x128xf32> to vector<16x128xf32>
    %529 = vector.extract_strided_slice %517 {offsets = [1, 0], sizes = [1, 128], strides = [1, 1]} : vector<11x128xf32> to vector<1x128xf32>
    %530 = vector.shape_cast %529 : vector<1x128xf32> to vector<128xf32>
    %531 = vector.shape_cast %530 : vector<128xf32> to vector<1x128xf32>
    %532 = vector.broadcast %531 : vector<1x128xf32> to vector<16x128xf32>
    %533 = arith.mulf %528, %532 : vector<16x128xf32>
    %534 = arith.addf %527, %533 : vector<16x128xf32>
    %535 = vector.extract_strided_slice %519 {offsets = [2, 0], sizes = [16, 128], strides = [1, 1]} : vector<26x128xf32> to vector<16x128xf32>
    %536 = vector.extract_strided_slice %517 {offsets = [2, 0], sizes = [1, 128], strides = [1, 1]} : vector<11x128xf32> to vector<1x128xf32>
    %537 = vector.shape_cast %536 : vector<1x128xf32> to vector<128xf32>
    %538 = vector.shape_cast %537 : vector<128xf32> to vector<1x128xf32>
    %539 = vector.broadcast %538 : vector<1x128xf32> to vector<16x128xf32>
    %540 = arith.mulf %535, %539 : vector<16x128xf32>
    %541 = arith.addf %534, %540 : vector<16x128xf32>
    %542 = vector.extract_strided_slice %519 {offsets = [3, 0], sizes = [16, 128], strides = [1, 1]} : vector<26x128xf32> to vector<16x128xf32>
    %543 = vector.extract_strided_slice %517 {offsets = [3, 0], sizes = [1, 128], strides = [1, 1]} : vector<11x128xf32> to vector<1x128xf32>
    %544 = vector.shape_cast %543 : vector<1x128xf32> to vector<128xf32>
    %545 = vector.shape_cast %544 : vector<128xf32> to vector<1x128xf32>
    %546 = vector.broadcast %545 : vector<1x128xf32> to vector<16x128xf32>
    %547 = arith.mulf %542, %546 : vector<16x128xf32>
    %548 = arith.addf %541, %547 : vector<16x128xf32>
    %549 = vector.extract_strided_slice %519 {offsets = [4, 0], sizes = [16, 128], strides = [1, 1]} : vector<26x128xf32> to vector<16x128xf32>
    %550 = vector.extract_strided_slice %517 {offsets = [4, 0], sizes = [1, 128], strides = [1, 1]} : vector<11x128xf32> to vector<1x128xf32>
    %551 = vector.shape_cast %550 : vector<1x128xf32> to vector<128xf32>
    %552 = vector.shape_cast %551 : vector<128xf32> to vector<1x128xf32>
    %553 = vector.broadcast %552 : vector<1x128xf32> to vector<16x128xf32>
    %554 = arith.mulf %549, %553 : vector<16x128xf32>
    %555 = arith.addf %548, %554 : vector<16x128xf32>
    %556 = vector.extract_strided_slice %519 {offsets = [5, 0], sizes = [16, 128], strides = [1, 1]} : vector<26x128xf32> to vector<16x128xf32>
    %557 = vector.extract_strided_slice %517 {offsets = [5, 0], sizes = [1, 128], strides = [1, 1]} : vector<11x128xf32> to vector<1x128xf32>
    %558 = vector.shape_cast %557 : vector<1x128xf32> to vector<128xf32>
    %559 = vector.shape_cast %558 : vector<128xf32> to vector<1x128xf32>
    %560 = vector.broadcast %559 : vector<1x128xf32> to vector<16x128xf32>
    %561 = arith.mulf %556, %560 : vector<16x128xf32>
    %562 = arith.addf %555, %561 : vector<16x128xf32>
    %563 = vector.extract_strided_slice %519 {offsets = [6, 0], sizes = [16, 128], strides = [1, 1]} : vector<26x128xf32> to vector<16x128xf32>
    %564 = vector.extract_strided_slice %517 {offsets = [6, 0], sizes = [1, 128], strides = [1, 1]} : vector<11x128xf32> to vector<1x128xf32>
    %565 = vector.shape_cast %564 : vector<1x128xf32> to vector<128xf32>
    %566 = vector.shape_cast %565 : vector<128xf32> to vector<1x128xf32>
    %567 = vector.broadcast %566 : vector<1x128xf32> to vector<16x128xf32>
    %568 = arith.mulf %563, %567 : vector<16x128xf32>
    %569 = arith.addf %562, %568 : vector<16x128xf32>
    %570 = vector.extract_strided_slice %519 {offsets = [7, 0], sizes = [16, 128], strides = [1, 1]} : vector<26x128xf32> to vector<16x128xf32>
    %571 = vector.extract_strided_slice %517 {offsets = [7, 0], sizes = [1, 128], strides = [1, 1]} : vector<11x128xf32> to vector<1x128xf32>
    %572 = vector.shape_cast %571 : vector<1x128xf32> to vector<128xf32>
    %573 = vector.shape_cast %572 : vector<128xf32> to vector<1x128xf32>
    %574 = vector.broadcast %573 : vector<1x128xf32> to vector<16x128xf32>
    %575 = arith.mulf %570, %574 : vector<16x128xf32>
    %576 = arith.addf %569, %575 : vector<16x128xf32>
    %577 = vector.extract_strided_slice %519 {offsets = [8, 0], sizes = [16, 128], strides = [1, 1]} : vector<26x128xf32> to vector<16x128xf32>
    %578 = vector.extract_strided_slice %517 {offsets = [8, 0], sizes = [1, 128], strides = [1, 1]} : vector<11x128xf32> to vector<1x128xf32>
    %579 = vector.shape_cast %578 : vector<1x128xf32> to vector<128xf32>
    %580 = vector.shape_cast %579 : vector<128xf32> to vector<1x128xf32>
    %581 = vector.broadcast %580 : vector<1x128xf32> to vector<16x128xf32>
    %582 = arith.mulf %577, %581 : vector<16x128xf32>
    %583 = arith.addf %576, %582 : vector<16x128xf32>
    %584 = vector.extract_strided_slice %519 {offsets = [9, 0], sizes = [16, 128], strides = [1, 1]} : vector<26x128xf32> to vector<16x128xf32>
    %585 = vector.extract_strided_slice %517 {offsets = [9, 0], sizes = [1, 128], strides = [1, 1]} : vector<11x128xf32> to vector<1x128xf32>
    %586 = vector.shape_cast %585 : vector<1x128xf32> to vector<128xf32>
    %587 = vector.shape_cast %586 : vector<128xf32> to vector<1x128xf32>
    %588 = vector.broadcast %587 : vector<1x128xf32> to vector<16x128xf32>
    %589 = arith.mulf %584, %588 : vector<16x128xf32>
    %590 = arith.addf %583, %589 : vector<16x128xf32>
    %591 = vector.extract_strided_slice %519 {offsets = [10, 0], sizes = [16, 128], strides = [1, 1]} : vector<26x128xf32> to vector<16x128xf32>
    %592 = vector.extract_strided_slice %517 {offsets = [10, 0], sizes = [1, 128], strides = [1, 1]} : vector<11x128xf32> to vector<1x128xf32>
    %593 = vector.shape_cast %592 : vector<1x128xf32> to vector<128xf32>
    %594 = vector.shape_cast %593 : vector<128xf32> to vector<1x128xf32>
    %595 = vector.broadcast %594 : vector<1x128xf32> to vector<16x128xf32>
    %596 = arith.mulf %591, %595 : vector<16x128xf32>
    %597 = arith.addf %590, %596 : vector<16x128xf32>
    %598 = arith.addf %513, %597 : vector<16x128xf32>
    %c0_32 = arith.constant 0 : index
    %c0_33 = arith.constant 0 : index
    %599 = vector.load %arg11[%c0_32, %c0_33] : memref<1x128xf32, #tpu.memory_space<vmem>>, vector<1x128xf32>
    %600 = vector.broadcast %599 : vector<1x128xf32> to vector<16x128xf32>
    %601 = arith.addf %598, %600 : vector<16x128xf32>
    %c0_34 = arith.constant 0 : index
    %c0_35 = arith.constant 0 : index
    %602 = vector.load %arg13[%c0_34, %c0_35] : memref<1x128xf32, #tpu.memory_space<vmem>>, vector<1x128xf32>
    %603 = vector.broadcast %602 : vector<1x128xf32> to vector<16x128xf32>
    %604 = arith.addf %453, %603 : vector<16x128xf32>
    %c0_36 = arith.constant 0 : index
    %c0_37 = arith.constant 0 : index
    %605 = vector.load %arg14[%c0_36, %c0_37] : memref<21x128xf32, #tpu.memory_space<vmem>>, vector<21x128xf32>
    %cst_38 = arith.constant 0.000000e+00 : f32
    %606 = vector.broadcast %cst_38 : f32 to vector<10x128xf32>
    %607 = tpu.concatenate %606, %604, %606 in 0 : vector<10x128xf32>, vector<16x128xf32>, vector<10x128xf32> -> vector<36x128xf32>
    %cst_39 = arith.constant 0.000000e+00 : f32
    %608 = vector.broadcast %cst_39 : f32 to vector<16x128xf32>
    %609 = vector.extract_strided_slice %607 {offsets = [0, 0], sizes = [16, 128], strides = [1, 1]} : vector<36x128xf32> to vector<16x128xf32>
    %610 = vector.extract_strided_slice %605 {offsets = [0, 0], sizes = [1, 128], strides = [1, 1]} : vector<21x128xf32> to vector<1x128xf32>
    %611 = vector.shape_cast %610 : vector<1x128xf32> to vector<128xf32>
    %612 = vector.shape_cast %611 : vector<128xf32> to vector<1x128xf32>
    %613 = vector.broadcast %612 : vector<1x128xf32> to vector<16x128xf32>
    %614 = arith.mulf %609, %613 : vector<16x128xf32>
    %615 = arith.addf %608, %614 : vector<16x128xf32>
    %616 = vector.extract_strided_slice %607 {offsets = [1, 0], sizes = [16, 128], strides = [1, 1]} : vector<36x128xf32> to vector<16x128xf32>
    %617 = vector.extract_strided_slice %605 {offsets = [1, 0], sizes = [1, 128], strides = [1, 1]} : vector<21x128xf32> to vector<1x128xf32>
    %618 = vector.shape_cast %617 : vector<1x128xf32> to vector<128xf32>
    %619 = vector.shape_cast %618 : vector<128xf32> to vector<1x128xf32>
    %620 = vector.broadcast %619 : vector<1x128xf32> to vector<16x128xf32>
    %621 = arith.mulf %616, %620 : vector<16x128xf32>
    %622 = arith.addf %615, %621 : vector<16x128xf32>
    %623 = vector.extract_strided_slice %607 {offsets = [2, 0], sizes = [16, 128], strides = [1, 1]} : vector<36x128xf32> to vector<16x128xf32>
    %624 = vector.extract_strided_slice %605 {offsets = [2, 0], sizes = [1, 128], strides = [1, 1]} : vector<21x128xf32> to vector<1x128xf32>
    %625 = vector.shape_cast %624 : vector<1x128xf32> to vector<128xf32>
    %626 = vector.shape_cast %625 : vector<128xf32> to vector<1x128xf32>
    %627 = vector.broadcast %626 : vector<1x128xf32> to vector<16x128xf32>
    %628 = arith.mulf %623, %627 : vector<16x128xf32>
    %629 = arith.addf %622, %628 : vector<16x128xf32>
    %630 = vector.extract_strided_slice %607 {offsets = [3, 0], sizes = [16, 128], strides = [1, 1]} : vector<36x128xf32> to vector<16x128xf32>
    %631 = vector.extract_strided_slice %605 {offsets = [3, 0], sizes = [1, 128], strides = [1, 1]} : vector<21x128xf32> to vector<1x128xf32>
    %632 = vector.shape_cast %631 : vector<1x128xf32> to vector<128xf32>
    %633 = vector.shape_cast %632 : vector<128xf32> to vector<1x128xf32>
    %634 = vector.broadcast %633 : vector<1x128xf32> to vector<16x128xf32>
    %635 = arith.mulf %630, %634 : vector<16x128xf32>
    %636 = arith.addf %629, %635 : vector<16x128xf32>
    %637 = vector.extract_strided_slice %607 {offsets = [4, 0], sizes = [16, 128], strides = [1, 1]} : vector<36x128xf32> to vector<16x128xf32>
    %638 = vector.extract_strided_slice %605 {offsets = [4, 0], sizes = [1, 128], strides = [1, 1]} : vector<21x128xf32> to vector<1x128xf32>
    %639 = vector.shape_cast %638 : vector<1x128xf32> to vector<128xf32>
    %640 = vector.shape_cast %639 : vector<128xf32> to vector<1x128xf32>
    %641 = vector.broadcast %640 : vector<1x128xf32> to vector<16x128xf32>
    %642 = arith.mulf %637, %641 : vector<16x128xf32>
    %643 = arith.addf %636, %642 : vector<16x128xf32>
    %644 = vector.extract_strided_slice %607 {offsets = [5, 0], sizes = [16, 128], strides = [1, 1]} : vector<36x128xf32> to vector<16x128xf32>
    %645 = vector.extract_strided_slice %605 {offsets = [5, 0], sizes = [1, 128], strides = [1, 1]} : vector<21x128xf32> to vector<1x128xf32>
    %646 = vector.shape_cast %645 : vector<1x128xf32> to vector<128xf32>
    %647 = vector.shape_cast %646 : vector<128xf32> to vector<1x128xf32>
    %648 = vector.broadcast %647 : vector<1x128xf32> to vector<16x128xf32>
    %649 = arith.mulf %644, %648 : vector<16x128xf32>
    %650 = arith.addf %643, %649 : vector<16x128xf32>
    %651 = vector.extract_strided_slice %607 {offsets = [6, 0], sizes = [16, 128], strides = [1, 1]} : vector<36x128xf32> to vector<16x128xf32>
    %652 = vector.extract_strided_slice %605 {offsets = [6, 0], sizes = [1, 128], strides = [1, 1]} : vector<21x128xf32> to vector<1x128xf32>
    %653 = vector.shape_cast %652 : vector<1x128xf32> to vector<128xf32>
    %654 = vector.shape_cast %653 : vector<128xf32> to vector<1x128xf32>
    %655 = vector.broadcast %654 : vector<1x128xf32> to vector<16x128xf32>
    %656 = arith.mulf %651, %655 : vector<16x128xf32>
    %657 = arith.addf %650, %656 : vector<16x128xf32>
    %658 = vector.extract_strided_slice %607 {offsets = [7, 0], sizes = [16, 128], strides = [1, 1]} : vector<36x128xf32> to vector<16x128xf32>
    %659 = vector.extract_strided_slice %605 {offsets = [7, 0], sizes = [1, 128], strides = [1, 1]} : vector<21x128xf32> to vector<1x128xf32>
    %660 = vector.shape_cast %659 : vector<1x128xf32> to vector<128xf32>
    %661 = vector.shape_cast %660 : vector<128xf32> to vector<1x128xf32>
    %662 = vector.broadcast %661 : vector<1x128xf32> to vector<16x128xf32>
    %663 = arith.mulf %658, %662 : vector<16x128xf32>
    %664 = arith.addf %657, %663 : vector<16x128xf32>
    %665 = vector.extract_strided_slice %607 {offsets = [8, 0], sizes = [16, 128], strides = [1, 1]} : vector<36x128xf32> to vector<16x128xf32>
    %666 = vector.extract_strided_slice %605 {offsets = [8, 0], sizes = [1, 128], strides = [1, 1]} : vector<21x128xf32> to vector<1x128xf32>
    %667 = vector.shape_cast %666 : vector<1x128xf32> to vector<128xf32>
    %668 = vector.shape_cast %667 : vector<128xf32> to vector<1x128xf32>
    %669 = vector.broadcast %668 : vector<1x128xf32> to vector<16x128xf32>
    %670 = arith.mulf %665, %669 : vector<16x128xf32>
    %671 = arith.addf %664, %670 : vector<16x128xf32>
    %672 = vector.extract_strided_slice %607 {offsets = [9, 0], sizes = [16, 128], strides = [1, 1]} : vector<36x128xf32> to vector<16x128xf32>
    %673 = vector.extract_strided_slice %605 {offsets = [9, 0], sizes = [1, 128], strides = [1, 1]} : vector<21x128xf32> to vector<1x128xf32>
    %674 = vector.shape_cast %673 : vector<1x128xf32> to vector<128xf32>
    %675 = vector.shape_cast %674 : vector<128xf32> to vector<1x128xf32>
    %676 = vector.broadcast %675 : vector<1x128xf32> to vector<16x128xf32>
    %677 = arith.mulf %672, %676 : vector<16x128xf32>
    %678 = arith.addf %671, %677 : vector<16x128xf32>
    %679 = vector.extract_strided_slice %607 {offsets = [10, 0], sizes = [16, 128], strides = [1, 1]} : vector<36x128xf32> to vector<16x128xf32>
    %680 = vector.extract_strided_slice %605 {offsets = [10, 0], sizes = [1, 128], strides = [1, 1]} : vector<21x128xf32> to vector<1x128xf32>
    %681 = vector.shape_cast %680 : vector<1x128xf32> to vector<128xf32>
    %682 = vector.shape_cast %681 : vector<128xf32> to vector<1x128xf32>
    %683 = vector.broadcast %682 : vector<1x128xf32> to vector<16x128xf32>
    %684 = arith.mulf %679, %683 : vector<16x128xf32>
    %685 = arith.addf %678, %684 : vector<16x128xf32>
    %686 = vector.extract_strided_slice %607 {offsets = [11, 0], sizes = [16, 128], strides = [1, 1]} : vector<36x128xf32> to vector<16x128xf32>
    %687 = vector.extract_strided_slice %605 {offsets = [11, 0], sizes = [1, 128], strides = [1, 1]} : vector<21x128xf32> to vector<1x128xf32>
    %688 = vector.shape_cast %687 : vector<1x128xf32> to vector<128xf32>
    %689 = vector.shape_cast %688 : vector<128xf32> to vector<1x128xf32>
    %690 = vector.broadcast %689 : vector<1x128xf32> to vector<16x128xf32>
    %691 = arith.mulf %686, %690 : vector<16x128xf32>
    %692 = arith.addf %685, %691 : vector<16x128xf32>
    %693 = vector.extract_strided_slice %607 {offsets = [12, 0], sizes = [16, 128], strides = [1, 1]} : vector<36x128xf32> to vector<16x128xf32>
    %694 = vector.extract_strided_slice %605 {offsets = [12, 0], sizes = [1, 128], strides = [1, 1]} : vector<21x128xf32> to vector<1x128xf32>
    %695 = vector.shape_cast %694 : vector<1x128xf32> to vector<128xf32>
    %696 = vector.shape_cast %695 : vector<128xf32> to vector<1x128xf32>
    %697 = vector.broadcast %696 : vector<1x128xf32> to vector<16x128xf32>
    %698 = arith.mulf %693, %697 : vector<16x128xf32>
    %699 = arith.addf %692, %698 : vector<16x128xf32>
    %700 = vector.extract_strided_slice %607 {offsets = [13, 0], sizes = [16, 128], strides = [1, 1]} : vector<36x128xf32> to vector<16x128xf32>
    %701 = vector.extract_strided_slice %605 {offsets = [13, 0], sizes = [1, 128], strides = [1, 1]} : vector<21x128xf32> to vector<1x128xf32>
    %702 = vector.shape_cast %701 : vector<1x128xf32> to vector<128xf32>
    %703 = vector.shape_cast %702 : vector<128xf32> to vector<1x128xf32>
    %704 = vector.broadcast %703 : vector<1x128xf32> to vector<16x128xf32>
    %705 = arith.mulf %700, %704 : vector<16x128xf32>
    %706 = arith.addf %699, %705 : vector<16x128xf32>
    %707 = vector.extract_strided_slice %607 {offsets = [14, 0], sizes = [16, 128], strides = [1, 1]} : vector<36x128xf32> to vector<16x128xf32>
    %708 = vector.extract_strided_slice %605 {offsets = [14, 0], sizes = [1, 128], strides = [1, 1]} : vector<21x128xf32> to vector<1x128xf32>
    %709 = vector.shape_cast %708 : vector<1x128xf32> to vector<128xf32>
    %710 = vector.shape_cast %709 : vector<128xf32> to vector<1x128xf32>
    %711 = vector.broadcast %710 : vector<1x128xf32> to vector<16x128xf32>
    %712 = arith.mulf %707, %711 : vector<16x128xf32>
    %713 = arith.addf %706, %712 : vector<16x128xf32>
    %714 = vector.extract_strided_slice %607 {offsets = [15, 0], sizes = [16, 128], strides = [1, 1]} : vector<36x128xf32> to vector<16x128xf32>
    %715 = vector.extract_strided_slice %605 {offsets = [15, 0], sizes = [1, 128], strides = [1, 1]} : vector<21x128xf32> to vector<1x128xf32>
    %716 = vector.shape_cast %715 : vector<1x128xf32> to vector<128xf32>
    %717 = vector.shape_cast %716 : vector<128xf32> to vector<1x128xf32>
    %718 = vector.broadcast %717 : vector<1x128xf32> to vector<16x128xf32>
    %719 = arith.mulf %714, %718 : vector<16x128xf32>
    %720 = arith.addf %713, %719 : vector<16x128xf32>
    %721 = vector.extract_strided_slice %607 {offsets = [16, 0], sizes = [16, 128], strides = [1, 1]} : vector<36x128xf32> to vector<16x128xf32>
    %722 = vector.extract_strided_slice %605 {offsets = [16, 0], sizes = [1, 128], strides = [1, 1]} : vector<21x128xf32> to vector<1x128xf32>
    %723 = vector.shape_cast %722 : vector<1x128xf32> to vector<128xf32>
    %724 = vector.shape_cast %723 : vector<128xf32> to vector<1x128xf32>
    %725 = vector.broadcast %724 : vector<1x128xf32> to vector<16x128xf32>
    %726 = arith.mulf %721, %725 : vector<16x128xf32>
    %727 = arith.addf %720, %726 : vector<16x128xf32>
    %728 = vector.extract_strided_slice %607 {offsets = [17, 0], sizes = [16, 128], strides = [1, 1]} : vector<36x128xf32> to vector<16x128xf32>
    %729 = vector.extract_strided_slice %605 {offsets = [17, 0], sizes = [1, 128], strides = [1, 1]} : vector<21x128xf32> to vector<1x128xf32>
    %730 = vector.shape_cast %729 : vector<1x128xf32> to vector<128xf32>
    %731 = vector.shape_cast %730 : vector<128xf32> to vector<1x128xf32>
    %732 = vector.broadcast %731 : vector<1x128xf32> to vector<16x128xf32>
    %733 = arith.mulf %728, %732 : vector<16x128xf32>
    %734 = arith.addf %727, %733 : vector<16x128xf32>
    %735 = vector.extract_strided_slice %607 {offsets = [18, 0], sizes = [16, 128], strides = [1, 1]} : vector<36x128xf32> to vector<16x128xf32>
    %736 = vector.extract_strided_slice %605 {offsets = [18, 0], sizes = [1, 128], strides = [1, 1]} : vector<21x128xf32> to vector<1x128xf32>
    %737 = vector.shape_cast %736 : vector<1x128xf32> to vector<128xf32>
    %738 = vector.shape_cast %737 : vector<128xf32> to vector<1x128xf32>
    %739 = vector.broadcast %738 : vector<1x128xf32> to vector<16x128xf32>
    %740 = arith.mulf %735, %739 : vector<16x128xf32>
    %741 = arith.addf %734, %740 : vector<16x128xf32>
    %742 = vector.extract_strided_slice %607 {offsets = [19, 0], sizes = [16, 128], strides = [1, 1]} : vector<36x128xf32> to vector<16x128xf32>
    %743 = vector.extract_strided_slice %605 {offsets = [19, 0], sizes = [1, 128], strides = [1, 1]} : vector<21x128xf32> to vector<1x128xf32>
    %744 = vector.shape_cast %743 : vector<1x128xf32> to vector<128xf32>
    %745 = vector.shape_cast %744 : vector<128xf32> to vector<1x128xf32>
    %746 = vector.broadcast %745 : vector<1x128xf32> to vector<16x128xf32>
    %747 = arith.mulf %742, %746 : vector<16x128xf32>
    %748 = arith.addf %741, %747 : vector<16x128xf32>
    %749 = vector.extract_strided_slice %607 {offsets = [20, 0], sizes = [16, 128], strides = [1, 1]} : vector<36x128xf32> to vector<16x128xf32>
    %750 = vector.extract_strided_slice %605 {offsets = [20, 0], sizes = [1, 128], strides = [1, 1]} : vector<21x128xf32> to vector<1x128xf32>
    %751 = vector.shape_cast %750 : vector<1x128xf32> to vector<128xf32>
    %752 = vector.shape_cast %751 : vector<128xf32> to vector<1x128xf32>
    %753 = vector.broadcast %752 : vector<1x128xf32> to vector<16x128xf32>
    %754 = arith.mulf %749, %753 : vector<16x128xf32>
    %755 = arith.addf %748, %754 : vector<16x128xf32>
    %756 = arith.addf %601, %755 : vector<16x128xf32>
    %c0_40 = arith.constant 0 : index
    %c0_41 = arith.constant 0 : index
    %757 = vector.load %arg15[%c0_40, %c0_41] : memref<1x128xf32, #tpu.memory_space<vmem>>, vector<1x128xf32>
    %758 = vector.broadcast %757 : vector<1x128xf32> to vector<16x128xf32>
    %759 = arith.addf %756, %758 : vector<16x128xf32>
    %c0_42 = arith.constant 0 : index
    %c0_43 = arith.constant 0 : index
    %760 = vector.load %arg16[%c0_42, %c0_43] : memref<128x128xf32, #tpu.memory_space<vmem>>, vector<128x128xf32>
    %cst_44 = arith.constant dense<0.000000e+00> : vector<16x128xf32>
    %761 = tpu.matmul %759, %760, %cst_44 {dimension_numbers = #tpu.dot_dimension_numbers<[1], [0], [0], [1], [0, 0, 1, 1], [], []>} : vector<16x128xf32>, vector<128x128xf32>, vector<16x128xf32> -> vector<16x128xf32>
    %c0_45 = arith.constant 0 : index
    %c0_46 = arith.constant 0 : index
    %762 = vector.load %arg17[%c0_45, %c0_46] : memref<1x128xf32, #tpu.memory_space<vmem>>, vector<1x128xf32>
    %763 = vector.broadcast %762 : vector<1x128xf32> to vector<16x128xf32>
    %764 = arith.addf %761, %763 : vector<16x128xf32>
    %765 = arith.mulf %764, %1 : vector<16x128xf32>
    %c0_47 = arith.constant 0 : index
    %c0_48 = arith.constant 0 : index
    %c0_49 = arith.constant 0 : index
    %766 = vector.load %arg18[%c0_47, %c0_48, %c0_49] : memref<1x16x128xf32, #tpu.memory_space<vmem>>, vector<1x16x128xf32>
    %767 = vector.shape_cast %766 : vector<1x16x128xf32> to vector<16x128xf32>
    %768 = vector.shape_cast %765 : vector<16x128xf32> to vector<1x16x128xf32>
    tpu.vector_store %arg18[%c0_47, %c0_48, %c0_49], %768 {strides = array<i32>} : memref<1x16x128xf32, #tpu.memory_space<vmem>>, vector<1x16x128xf32>,
    return
  }
  func.func @transform_0(%arg0: i32) -> (i32, i32, i32) {
    %c0_i32 = arith.constant 0 : i32
    %c0_i32_0 = arith.constant 0 : i32
    %c0_i32_1 = arith.constant 0 : i32
    return %arg0, %c0_i32, %c0_i32_0 : i32, i32, i32
  }
  func.func @transform_1(%arg0: i32) -> (i32, i32) {
    %c0_i32 = arith.constant 0 : i32
    %c0_i32_0 = arith.constant 0 : i32
    %c0_i32_1 = arith.constant 0 : i32
    return %c0_i32, %c0_i32_0 : i32, i32
  }
  func.func @transform_2(%arg0: i32) -> (i32, i32) {
    %c0_i32 = arith.constant 0 : i32
    %c0_i32_0 = arith.constant 0 : i32
    %c0_i32_1 = arith.constant 0 : i32
    return %c0_i32, %c0_i32_0 : i32, i32
  }
  func.func @transform_3(%arg0: i32) -> (i32, i32) {
    %c0_i32 = arith.constant 0 : i32
    %c0_i32_0 = arith.constant 0 : i32
    %c0_i32_1 = arith.constant 0 : i32
    return %c0_i32, %c0_i32_0 : i32, i32
  }
  func.func @transform_4(%arg0: i32) -> (i32, i32) {
    %c0_i32 = arith.constant 0 : i32
    %c0_i32_0 = arith.constant 0 : i32
    %c0_i32_1 = arith.constant 0 : i32
    return %c0_i32, %c0_i32_0 : i32, i32
  }
  func.func @transform_5(%arg0: i32) -> (i32, i32) {
    %c0_i32 = arith.constant 0 : i32
    %c0_i32_0 = arith.constant 0 : i32
    %c0_i32_1 = arith.constant 0 : i32
    return %c0_i32, %c0_i32_0 : i32, i32
  }
  func.func @transform_6(%arg0: i32) -> (i32, i32) {
    %c0_i32 = arith.constant 0 : i32
    %c0_i32_0 = arith.constant 0 : i32
    %c0_i32_1 = arith.constant 0 : i32
    return %c0_i32, %c0_i32_0 : i32, i32
  }
  func.func @transform_7(%arg0: i32) -> (i32, i32) {
    %c0_i32 = arith.constant 0 : i32
    %c0_i32_0 = arith.constant 0 : i32
    %c0_i32_1 = arith.constant 0 : i32
    return %c0_i32, %c0_i32_0 : i32, i32
  }
  func.func @transform_8(%arg0: i32) -> (i32, i32) {
    %c0_i32 = arith.constant 0 : i32
    %c0_i32_0 = arith.constant 0 : i32
    %c0_i32_1 = arith.constant 0 : i32
    return %c0_i32, %c0_i32_0 : i32, i32
  }
  func.func @transform_9(%arg0: i32) -> (i32, i32) {
    %c0_i32 = arith.constant 0 : i32
    %c0_i32_0 = arith.constant 0 : i32
    %c0_i32_1 = arith.constant 0 : i32
    return %c0_i32, %c0_i32_0 : i32, i32
  }
  func.func @transform_10(%arg0: i32) -> (i32, i32) {
    %c0_i32 = arith.constant 0 : i32
    %c0_i32_0 = arith.constant 0 : i32
    %c0_i32_1 = arith.constant 0 : i32
    return %c0_i32, %c0_i32_0 : i32, i32
  }
  func.func @transform_11(%arg0: i32) -> (i32, i32) {
    %c0_i32 = arith.constant 0 : i32
    %c0_i32_0 = arith.constant 0 : i32
    %c0_i32_1 = arith.constant 0 : i32
    return %c0_i32, %c0_i32_0 : i32, i32
  }
  func.func @transform_12(%arg0: i32) -> (i32, i32) {
    %c0_i32 = arith.constant 0 : i32
    %c0_i32_0 = arith.constant 0 : i32
    %c0_i32_1 = arith.constant 0 : i32
    return %c0_i32, %c0_i32_0 : i32, i32
  }
  func.func @transform_13(%arg0: i32) -> (i32, i32) {
    %c0_i32 = arith.constant 0 : i32
    %c0_i32_0 = arith.constant 0 : i32
    %c0_i32_1 = arith.constant 0 : i32
    return %c0_i32, %c0_i32_0 : i32, i32
  }
  func.func @transform_14(%arg0: i32) -> (i32, i32) {
    %c0_i32 = arith.constant 0 : i32
    %c0_i32_0 = arith.constant 0 : i32
    %c0_i32_1 = arith.constant 0 : i32
    return %c0_i32, %c0_i32_0 : i32, i32
  }
  func.func @transform_15(%arg0: i32) -> (i32, i32) {
    %c0_i32 = arith.constant 0 : i32
    %c0_i32_0 = arith.constant 0 : i32
    %c0_i32_1 = arith.constant 0 : i32
    return %c0_i32, %c0_i32_0 : i32, i32
  }
  func.func @transform_16(%arg0: i32) -> (i32, i32) {
    %c0_i32 = arith.constant 0 : i32
    %c0_i32_0 = arith.constant 0 : i32
    %c0_i32_1 = arith.constant 0 : i32
    return %c0_i32, %c0_i32_0 : i32, i32
  }
  func.func @transform_17(%arg0: i32) -> (i32, i32, i32) {
    %c0_i32 = arith.constant 0 : i32
    %c0_i32_0 = arith.constant 0 : i32
    %c0_i32_1 = arith.constant 0 : i32
    return %arg0, %c0_i32, %c0_i32_0 : i32, i32, i32
  }
}

</mosaic_0001>

<llo_original>
// kernel: tpu_custom_call.1
$region0: #{tpu_custom_call.1}
  #allocation0 [shape = 'u32[]', space=smem, size = 0x4, offset = 0x4, fixed_abs, tag = 'smem constant byte address 0x4 - core index']
  #allocation1 [shape = 'u32[144,128]{1,0:T(1,128)}', space=vmem, size = 0x12000, scoped, tag = 'internal scratch']
  %s0 = inlined_call_operand.hbm [shape: f32[2,16,128], index: 0, kind: input, shape index: {}]
  %s1 = inlined_call_operand.hbm [shape: f32[25,128], index: 1, kind: input, shape index: {}]
  %s2 = inlined_call_operand.vmem [shape: f32[1,128], index: 2, kind: input, shape index: {}]
  %s3 = inlined_call_operand.hbm [shape: f32[7,128], index: 3, kind: input, shape index: {}]
  %s4 = inlined_call_operand.hbm [shape: f32[1,128], index: 4, kind: input, shape index: {}]
  %s5 = inlined_call_operand.hbm [shape: f32[7,128], index: 5, kind: input, shape index: {}]
  %s6 = inlined_call_operand.hbm [shape: f32[1,128], index: 6, kind: input, shape index: {}]
  %s7 = inlined_call_operand.hbm [shape: f32[11,128], index: 7, kind: input, shape index: {}]
  %s8 = inlined_call_operand.hbm [shape: f32[1,128], index: 8, kind: input, shape index: {}]
  %s9 = inlined_call_operand.hbm [shape: f32[11,128], index: 9, kind: input, shape index: {}]
  %s10 = inlined_call_operand.hbm [shape: f32[1,128], index: 10, kind: input, shape index: {}]
  %s11 = inlined_call_operand.vmem [shape: f32[21,128], index: 11, kind: input, shape index: {}]
  %s12 = inlined_call_operand.hbm [shape: f32[1,128], index: 12, kind: input, shape index: {}]
  %s13 = inlined_call_operand.vmem [shape: f32[21,128], index: 13, kind: input, shape index: {}]
  %s14 = inlined_call_operand.vmem [shape: f32[1,128], index: 14, kind: input, shape index: {}]
  %s15 = inlined_call_operand.hbm [shape: f32[128,128], index: 15, kind: input, shape index: {}]
  %s16 = inlined_call_operand.vmem [shape: f32[1,128], index: 16, kind: input, shape index: {}]
  %s17 = inlined_call_operand.hbm [shape: f32[2,16,128], index: 17, kind: output, shape index: {}]
  %s18 = sld [smem:[#allocation0]]
  $region149: #{tpu_custom_call.1} parent=0
    _
  %s20 = ssub.s32 1, %s18
  %s21 = scalar_select 0, %s20, %s18
  $region1: #{tpu_custom_call.1} parent=0
    #allocation2 [shape = 'u8[16384]{0}', space=vmem, size = 0x4000, scoped, tag = 'input window, operand 0']
    #allocation3 [shape = 's32[2]{0}', space=sflag, size = 0x8, scoped, tag = 'scoped memory for tpu_custom_call.1']
    #allocation4 [shape = 's32[2]{0}', space=sflag, size = 0x8, scoped, tag = 'scoped memory for tpu_custom_call.1']
    #allocation5 [shape = 'u8[16384]{0}', space=vmem, size = 0x4000, scoped, tag = 'input window, operand 1, single buffered']
    #allocation6 [shape = 's32[1]{0}', space=sflag, size = 0x4, scoped, tag = 'scoped memory for tpu_custom_call.1']
    #allocation7 [shape = 'u8[4096]{0}', space=vmem, size = 0x1000, scoped, tag = 'input window, operand 3, single buffered']
    #allocation8 [shape = 'u8[512]{0}', space=vmem, size = 0x400, scoped, tag = 'input window, operand 4, single buffered']
    #allocation9 [shape = 's32[1]{0}', space=sflag, size = 0x4, scoped, tag = 'scoped memory for tpu_custom_call.1']
    #allocation10 [shape = 'u8[4096]{0}', space=vmem, size = 0x1000, scoped, tag = 'input window, operand 5, single buffered']
    #allocation11 [shape = 'u8[512]{0}', space=vmem, size = 0x400, scoped, tag = 'input window, operand 6, single buffered']
    #allocation12 [shape = 's32[1]{0}', space=sflag, size = 0x4, scoped, tag = 'scoped memory for tpu_custom_call.1']
    #allocation13 [shape = 'u8[8192]{0}', space=vmem, size = 0x2000, scoped, tag = 'input window, operand 7, single buffered']
    #allocation14 [shape = 'u8[512]{0}', space=vmem, size = 0x400, scoped, tag = 'input window, operand 8, single buffered']
    #allocation15 [shape = 's32[1]{0}', space=sflag, size = 0x4, scoped, tag = 'scoped memory for tpu_custom_call.1']
    #allocation16 [shape = 'u8[8192]{0}', space=vmem, size = 0x2000, scoped, tag = 'input window, operand 9, single buffered']
    #allocation17 [shape = 'u8[512]{0}', space=vmem, size = 0x400, scoped, tag = 'input window, operand 10, single buffered']
    #allocation18 [shape = 's32[1]{0}', space=sflag, size = 0x4, scoped, tag = 'scoped memory for tpu_custom_call.1']
    #allocation19 [shape = 'u8[512]{0}', space=vmem, size = 0x400, scoped, tag = 'input window, operand 12, single buffered']
    #allocation20 [shape = 'u8[65536]{0}', space=vmem, size = 0x10000, scoped, tag = 'input window, operand 15, single buffered']
    #allocation21 [shape = 's32[1]{0}', space=sflag, size = 0x4, scoped, tag = 'scoped memory for tpu_custom_call.1']
    #allocation22 [shape = 'u8[16384]{0}', space=vmem, size = 0x4000, scoped, tag = 'output window, operand 0']
    %22 = vsyncpa [#allocation3], 0
    %s23 = scalar_lea.sflag [#allocation3], 1
    %24 = vsyncpa %s23, 0
    %25 = vsyncpa [#allocation6], 0
    %26 = vsyncpa [#allocation9], 0
    %27 = vsyncpa [#allocation12], 0
    %28 = vsyncpa [#allocation15], 0
    %29 = vsyncpa [#allocation18], 0
    %30 = vsyncpa [#allocation21], 0
    %31 = vsyncpa [#allocation4], 0
    %s32 = scalar_lea.sflag [#allocation4], 1
    %33 = vsyncpa %s32, 0
    loop: start=0, step=1, limit=4
    $region2: #{tpu_custom_call.1} parent=1 // loop_pre_header
      _
    $region3: #{tpu_custom_call.1} parent=1 // loop_header
      %s35 = sphi 0, %s39
      %p36 = scmp.ge.s32.totalorder %s35, 4
      %s45 = sphi 0, %s47
      %s48 = sphi 0, %s45
      %s49 = sphi 0, %s48
      %s65 = sphi 0, %s49
      %s69 = sphi 0, %s69
      %s71 = sphi 0, %s69
      %s72 = sphi 0, %s71
      %s86 = sphi 0, %s72
      %s90 = sphi 0, %s90
      %s92 = sphi 0, %s90
      %s93 = sphi 0, %s92
      %s107 = sphi 0, %s93
      %s111 = sphi 0, %s111
      %s113 = sphi 0, %s111
      %s114 = sphi 0, %s113
      %s128 = sphi 0, %s114
      %s132 = sphi 0, %s132
      %s134 = sphi 0, %s132
      %s135 = sphi 0, %s134
      %s149 = sphi 0, %s135
      %s153 = sphi 0, %s153
      %s155 = sphi 0, %s153
      %s156 = sphi 0, %s155
      %s170 = sphi 0, %s156
      %s174 = sphi 0, %s174
      %s176 = sphi 0, %s174
      %s177 = sphi 0, %s176
      %s191 = sphi 0, %s177
      %s195 = sphi 0, %s195
      %s197 = sphi 0, %s195
      %s198 = sphi 0, %s197
      %s212 = sphi 0, %s198
      %s216 = sphi 0, %s216
      %s218 = sphi 0, %s216
      %s219 = sphi 0, %s218
      %s233 = sphi 0, %s219
      %s237 = sphi 0, %s237
      %s239 = sphi 0, %s237
      %s240 = sphi 0, %s239
      %s254 = sphi 0, %s240
      %s258 = sphi 0, %s258
      %s260 = sphi 0, %s258
      %s261 = sphi 0, %s260
      %s275 = sphi 0, %s261
      %s279 = sphi 0, %s279
      %s281 = sphi 0, %s279
      %s282 = sphi 0, %s281
      %s296 = sphi 0, %s282
      %s300 = sphi 0, %s300
      %s302 = sphi 0, %s300
      %s303 = sphi 0, %s302
      %s317 = sphi 0, %s303
      %s321 = sphi 0, %s321
      %s323 = sphi 0, %s321
      %s324 = sphi 0, %s323
      %s338 = sphi 0, %s324
      %s342 = sphi 0, %s342
      %s344 = sphi 0, %s342
      %s345 = sphi 0, %s344
      %s359 = sphi 0, %s345
      %s363 = sphi 0, %s363
      %s365 = sphi 0, %s363
      %s366 = sphi 0, %s365
      %s380 = sphi 0, %s366
      %s384 = sphi 0, %s384
      %s386 = sphi 0, %s384
      %s387 = sphi 0, %s386
      %s401 = sphi 0, %s387
      %s407 = sphi 0, %s409
      %s410 = sphi 0, %s407
      %s411 = sphi 0, %s410
      %s427 = sphi 0, %s411
    $region4: #{tpu_custom_call.1} parent=1 // loop_header_branch
      %38 = sbr.rel (%p36) target = $region8
    $region5: #{tpu_custom_call.1} parent=1 // loop_body
      %s40 = ssub.s32 %s35, 1
      %s41 = ssub.s32 %s35, 2
      %s42 = sadd.s32 %s35, 1
      %s43 = ssub.s32 %s35, %s42
      %p44 = scmp.eq.s32.totalorder %s43, 0
      %s46 = sadd.s32 %s45, 1
      %s47 = scalar_select %p44, %s45, %s46
      %p50 = pneg %p44
      %p51 = scmp.eq.s32.totalorder %s35, 1
      %p52 = por %p50, %p51
      %p53 = scmp.ne.s32.totalorder %s45, %s48
      %p54 = scmp.eq.s32.totalorder %s35, 0
      %p55 = por %p53, %p54
      %p56 = scmp.ne.s32.totalorder %s45, %s48
      %p57 = scmp.eq.s32.totalorder %s40, 1
      %p58 = por %p56, %p57
      %p59 = scmp.ne.s32.totalorder %s48, %s49
      %p60 = scmp.eq.s32.totalorder %s40, 0
      %p61 = por %p59, %p60
      %p62 = scmp.ne.s32.totalorder %s48, %s49
      %p63 = scmp.eq.s32.totalorder %s41, 1
      %p64 = por %p62, %p63
      %p66 = scmp.ne.s32.totalorder %s49, %s65
      %p67 = scmp.eq.s32.totalorder %s41, 0
      %p68 = por %p66, %p67
      %s70 = sadd.s32 %s69, 1
      %p73 = scmp.eq.s32.totalorder %s35, 1
      %p74 = scmp.ne.s32.totalorder %s69, %s71
      %p75 = scmp.eq.s32.totalorder %s35, 0
      %p76 = por %p74, %p75
      %p77 = scmp.ne.s32.totalorder %s69, %s71
      %p78 = scmp.eq.s32.totalorder %s40, 1
      %p79 = por %p77, %p78
      %p80 = scmp.ne.s32.totalorder %s71, %s72
      %p81 = scmp.eq.s32.totalorder %s40, 0
      %p82 = por %p80, %p81
      %p83 = scmp.ne.s32.totalorder %s71, %s72
      %p84 = scmp.eq.s32.totalorder %s41, 1
      %p85 = por %p83, %p84
      %p87 = scmp.ne.s32.totalorder %s72, %s86
      %p88 = scmp.eq.s32.totalorder %s41, 0
      %p89 = por %p87, %p88
      %s91 = sadd.s32 %s90, 1
      %p94 = scmp.eq.s32.totalorder %s35, 1
      %p95 = scmp.ne.s32.totalorder %s90, %s92
      %p96 = scmp.eq.s32.totalorder %s35, 0
      %p97 = por %p95, %p96
      %p98 = scmp.ne.s32.totalorder %s90, %s92
      %p99 = scmp.eq.s32.totalorder %s40, 1
      %p100 = por %p98, %p99
      %p101 = scmp.ne.s32.totalorder %s92, %s93
      %p102 = scmp.eq.s32.totalorder %s40, 0
      %p103 = por %p101, %p102
      %p104 = scmp.ne.s32.totalorder %s92, %s93
      %p105 = scmp.eq.s32.totalorder %s41, 1
      %p106 = por %p104, %p105
      %p108 = scmp.ne.s32.totalorder %s93, %s107
      %p109 = scmp.eq.s32.totalorder %s41, 0
      %p110 = por %p108, %p109
      %s112 = sadd.s32 %s111, 1
      %p115 = scmp.eq.s32.totalorder %s35, 1
      %p116 = scmp.ne.s32.totalorder %s111, %s113
      %p117 = scmp.eq.s32.totalorder %s35, 0
      %p118 = por %p116, %p117
      %p119 = scmp.ne.s32.totalorder %s111, %s113
      %p120 = scmp.eq.s32.totalorder %s40, 1
      %p121 = por %p119, %p120
      %p122 = scmp.ne.s32.totalorder %s113, %s114
      %p123 = scmp.eq.s32.totalorder %s40, 0
      %p124 = por %p122, %p123
      %p125 = scmp.ne.s32.totalorder %s113, %s114
      %p126 = scmp.eq.s32.totalorder %s41, 1
      %p127 = por %p125, %p126
      %p129 = scmp.ne.s32.totalorder %s114, %s128
      %p130 = scmp.eq.s32.totalorder %s41, 0
      %p131 = por %p129, %p130
      %s133 = sadd.s32 %s132, 1
      %p136 = scmp.eq.s32.totalorder %s35, 1
      %p137 = scmp.ne.s32.totalorder %s132, %s134
      %p138 = scmp.eq.s32.totalorder %s35, 0
      %p139 = por %p137, %p138
      %p140 = scmp.ne.s32.totalorder %s132, %s134
      %p141 = scmp.eq.s32.totalorder %s40, 1
      %p142 = por %p140, %p141
      %p143 = scmp.ne.s32.totalorder %s134, %s135
      %p144 = scmp.eq.s32.totalorder %s40, 0
      %p145 = por %p143, %p144
      %p146 = scmp.ne.s32.totalorder %s134, %s135
      %p147 = scmp.eq.s32.totalorder %s41, 1
      %p148 = por %p146, %p147
      %p150 = scmp.ne.s32.totalorder %s135, %s149
      %p151 = scmp.eq.s32.totalorder %s41, 0
      %p152 = por %p150, %p151
      %s154 = sadd.s32 %s153, 1
      %p157 = scmp.eq.s32.totalorder %s35, 1
      %p158 = scmp.ne.s32.totalorder %s153, %s155
      %p159 = scmp.eq.s32.totalorder %s35, 0
      %p160 = por %p158, %p159
      %p161 = scmp.ne.s32.totalorder %s153, %s155
      %p162 = scmp.eq.s32.totalorder %s40, 1
      %p163 = por %p161, %p162
      %p164 = scmp.ne.s32.totalorder %s155, %s156
      %p165 = scmp.eq.s32.totalorder %s40, 0
      %p166 = por %p164, %p165
      %p167 = scmp.ne.s32.totalorder %s155, %s156
      %p168 = scmp.eq.s32.totalorder %s41, 1
      %p169 = por %p167, %p168
      %p171 = scmp.ne.s32.totalorder %s156, %s170
      %p172 = scmp.eq.s32.totalorder %s41, 0
      %p173 = por %p171, %p172
      %s175 = sadd.s32 %s174, 1
      %p178 = scmp.eq.s32.totalorder %s35, 1
      %p179 = scmp.ne.s32.totalorder %s174, %s176
      %p180 = scmp.eq.s32.totalorder %s35, 0
      %p181 = por %p179, %p180
      %p182 = scmp.ne.s32.totalorder %s174, %s176
      %p183 = scmp.eq.s32.totalorder %s40, 1
      %p184 = por %p182, %p183
      %p185 = scmp.ne.s32.totalorder %s176, %s177
      %p186 = scmp.eq.s32.totalorder %s40, 0
      %p187 = por %p185, %p186
      %p188 = scmp.ne.s32.totalorder %s176, %s177
      %p189 = scmp.eq.s32.totalorder %s41, 1
      %p190 = por %p188, %p189
      %p192 = scmp.ne.s32.totalorder %s177, %s191
      %p193 = scmp.eq.s32.totalorder %s41, 0
      %p194 = por %p192, %p193
      %s196 = sadd.s32 %s195, 1
      %p199 = scmp.eq.s32.totalorder %s35, 1
      %p200 = scmp.ne.s32.totalorder %s195, %s197
      %p201 = scmp.eq.s32.totalorder %s35, 0
      %p202 = por %p200, %p201
      %p203 = scmp.ne.s32.totalorder %s195, %s197
      %p204 = scmp.eq.s32.totalorder %s40, 1
      %p205 = por %p203, %p204
      %p206 = scmp.ne.s32.totalorder %s197, %s198
      %p207 = scmp.eq.s32.totalorder %s40, 0
      %p208 = por %p206, %p207
      %p209 = scmp.ne.s32.totalorder %s197, %s198
      %p210 = scmp.eq.s32.totalorder %s41, 1
      %p211 = por %p209, %p210
      %p213 = scmp.ne.s32.totalorder %s198, %s212
      %p214 = scmp.eq.s32.totalorder %s41, 0
      %p215 = por %p213, %p214
      %s217 = sadd.s32 %s216, 1
      %p220 = scmp.eq.s32.totalorder %s35, 1
      %p221 = scmp.ne.s32.totalorder %s216, %s218
      %p222 = scmp.eq.s32.totalorder %s35, 0
      %p223 = por %p221, %p222
      %p224 = scmp.ne.s32.totalorder %s216, %s218
      %p225 = scmp.eq.s32.totalorder %s40, 1
      %p226 = por %p224, %p225
      %p227 = scmp.ne.s32.totalorder %s218, %s219
      %p228 = scmp.eq.s32.totalorder %s40, 0
      %p229 = por %p227, %p228
      %p230 = scmp.ne.s32.totalorder %s218, %s219
      %p231 = scmp.eq.s32.totalorder %s41, 1
      %p232 = por %p230, %p231
      %p234 = scmp.ne.s32.totalorder %s219, %s233
      %p235 = scmp.eq.s32.totalorder %s41, 0
      %p236 = por %p234, %p235
      %s238 = sadd.s32 %s237, 1
      %p241 = scmp.eq.s32.totalorder %s35, 1
      %p242 = scmp.ne.s32.totalorder %s237, %s239
      %p243 = scmp.eq.s32.totalorder %s35, 0
      %p244 = por %p242, %p243
      %p245 = scmp.ne.s32.totalorder %s237, %s239
      %p246 = scmp.eq.s32.totalorder %s40, 1
      %p247 = por %p245, %p246
      %p248 = scmp.ne.s32.totalorder %s239, %s240
      %p249 = scmp.eq.s32.totalorder %s40, 0
      %p250 = por %p248, %p249
      %p251 = scmp.ne.s32.totalorder %s239, %s240
      %p252 = scmp.eq.s32.totalorder %s41, 1
      %p253 = por %p251, %p252
      %p255 = scmp.ne.s32.totalorder %s240, %s254
      %p256 = scmp.eq.s32.totalorder %s41, 0
      %p257 = por %p255, %p256
      %s259 = sadd.s32 %s258, 1
      %p262 = scmp.eq.s32.totalorder %s35, 1
      %p263 = scmp.ne.s32.totalorder %s258, %s260
      %p264 = scmp.eq.s32.totalorder %s35, 0
      %p265 = por %p263, %p264
      %p266 = scmp.ne.s32.totalorder %s258, %s260
      %p267 = scmp.eq.s32.totalorder %s40, 1
      %p268 = por %p266, %p267
      %p269 = scmp.ne.s32.totalorder %s260, %s261
      %p270 = scmp.eq.s32.totalorder %s40, 0
      %p271 = por %p269, %p270
      %p272 = scmp.ne.s32.totalorder %s260, %s261
      %p273 = scmp.eq.s32.totalorder %s41, 1
      %p274 = por %p272, %p273
      %p276 = scmp.ne.s32.totalorder %s261, %s275
      %p277 = scmp.eq.s32.totalorder %s41, 0
      %p278 = por %p276, %p277
      %s280 = sadd.s32 %s279, 1
      %p283 = scmp.eq.s32.totalorder %s35, 1
      %p284 = scmp.ne.s32.totalorder %s279, %s281
      %p285 = scmp.eq.s32.totalorder %s35, 0
      %p286 = por %p284, %p285
      %p287 = scmp.ne.s32.totalorder %s279, %s281
      %p288 = scmp.eq.s32.totalorder %s40, 1
      %p289 = por %p287, %p288
      %p290 = scmp.ne.s32.totalorder %s281, %s282
      %p291 = scmp.eq.s32.totalorder %s40, 0
      %p292 = por %p290, %p291
      %p293 = scmp.ne.s32.totalorder %s281, %s282
      %p294 = scmp.eq.s32.totalorder %s41, 1
      %p295 = por %p293, %p294
      %p297 = scmp.ne.s32.totalorder %s282, %s296
      %p298 = scmp.eq.s32.totalorder %s41, 0
      %p299 = por %p297, %p298
      %s301 = sadd.s32 %s300, 1
      %p304 = scmp.eq.s32.totalorder %s35, 1
      %p305 = scmp.ne.s32.totalorder %s300, %s302
      %p306 = scmp.eq.s32.totalorder %s35, 0
      %p307 = por %p305, %p306
      %p308 = scmp.ne.s32.totalorder %s300, %s302
      %p309 = scmp.eq.s32.totalorder %s40, 1
      %p310 = por %p308, %p309
      %p311 = scmp.ne.s32.totalorder %s302, %s303
      %p312 = scmp.eq.s32.totalorder %s40, 0
      %p313 = por %p311, %p312
      %p314 = scmp.ne.s32.totalorder %s302, %s303
      %p315 = scmp.eq.s32.totalorder %s41, 1
      %p316 = por %p314, %p315
      %p318 = scmp.ne.s32.totalorder %s303, %s317
      %p319 = scmp.eq.s32.totalorder %s41, 0
      %p320 = por %p318, %p319
      %s322 = sadd.s32 %s321, 1
      %p325 = scmp.eq.s32.totalorder %s35, 1
      %p326 = scmp.ne.s32.totalorder %s321, %s323
      %p327 = scmp.eq.s32.totalorder %s35, 0
      %p328 = por %p326, %p327
      %p329 = scmp.ne.s32.totalorder %s321, %s323
      %p330 = scmp.eq.s32.totalorder %s40, 1
      %p331 = por %p329, %p330
      %p332 = scmp.ne.s32.totalorder %s323, %s324
      %p333 = scmp.eq.s32.totalorder %s40, 0
      %p334 = por %p332, %p333
      %p335 = scmp.ne.s32.totalorder %s323, %s324
      %p336 = scmp.eq.s32.totalorder %s41, 1
      %p337 = por %p335, %p336
      %p339 = scmp.ne.s32.totalorder %s324, %s338
      %p340 = scmp.eq.s32.totalorder %s41, 0
      %p341 = por %p339, %p340
      %s343 = sadd.s32 %s342, 1
      %p346 = scmp.eq.s32.totalorder %s35, 1
      %p347 = scmp.ne.s32.totalorder %s342, %s344
      %p348 = scmp.eq.s32.totalorder %s35, 0
      %p349 = por %p347, %p348
      %p350 = scmp.ne.s32.totalorder %s342, %s344
      %p351 = scmp.eq.s32.totalorder %s40, 1
      %p352 = por %p350, %p351
      %p353 = scmp.ne.s32.totalorder %s344, %s345
      %p354 = scmp.eq.s32.totalorder %s40, 0
      %p355 = por %p353, %p354
      %p356 = scmp.ne.s32.totalorder %s344, %s345
      %p357 = scmp.eq.s32.totalorder %s41, 1
      %p358 = por %p356, %p357
      %p360 = scmp.ne.s32.totalorder %s345, %s359
      %p361 = scmp.eq.s32.totalorder %s41, 0
      %p362 = por %p360, %p361
      %s364 = sadd.s32 %s363, 1
      %p367 = scmp.eq.s32.totalorder %s35, 1
      %p368 = scmp.ne.s32.totalorder %s363, %s365
      %p369 = scmp.eq.s32.totalorder %s35, 0
      %p370 = por %p368, %p369
      %p371 = scmp.ne.s32.totalorder %s363, %s365
      %p372 = scmp.eq.s32.totalorder %s40, 1
      %p373 = por %p371, %p372
      %p374 = scmp.ne.s32.totalorder %s365, %s366
      %p375 = scmp.eq.s32.totalorder %s40, 0
      %p376 = por %p374, %p375
      %p377 = scmp.ne.s32.totalorder %s365, %s366
      %p378 = scmp.eq.s32.totalorder %s41, 1
      %p379 = por %p377, %p378
      %p381 = scmp.ne.s32.totalorder %s366, %s380
      %p382 = scmp.eq.s32.totalorder %s41, 0
      %p383 = por %p381, %p382
      %s385 = sadd.s32 %s384, 1
      %p388 = scmp.eq.s32.totalorder %s35, 1
      %p389 = scmp.ne.s32.totalorder %s384, %s386
      %p390 = scmp.eq.s32.totalorder %s35, 0
      %p391 = por %p389, %p390
      %p392 = scmp.ne.s32.totalorder %s384, %s386
      %p393 = scmp.eq.s32.totalorder %s40, 1
      %p394 = por %p392, %p393
      %p395 = scmp.ne.s32.totalorder %s386, %s387
      %p396 = scmp.eq.s32.totalorder %s40, 0
      %p397 = por %p395, %p396
      %p398 = scmp.ne.s32.totalorder %s386, %s387
      %p399 = scmp.eq.s32.totalorder %s41, 1
      %p400 = por %p398, %p399
      %p402 = scmp.ne.s32.totalorder %s387, %s401
      %p403 = scmp.eq.s32.totalorder %s41, 0
      %p404 = por %p402, %p403
      %s405 = ssub.s32 %s35, %s42
      %p406 = scmp.eq.s32.totalorder %s405, 0
      %s408 = sadd.s32 %s407, 1
      %s409 = scalar_select %p406, %s407, %s408
      %p412 = pneg %p406
      %p413 = scmp.eq.s32.totalorder %s35, 1
      %p414 = por %p412, %p413
      %p415 = scmp.ne.s32.totalorder %s407, %s410
      %p416 = scmp.eq.s32.totalorder %s35, 0
      %p417 = por %p415, %p416
      %p418 = scmp.ne.s32.totalorder %s407, %s410
      %p419 = scmp.eq.s32.totalorder %s40, 1
      %p420 = por %p418, %p419
      %p421 = scmp.ne.s32.totalorder %s410, %s411
      %p422 = scmp.eq.s32.totalorder %s40, 0
      %p423 = por %p421, %p422
      %p424 = scmp.ne.s32.totalorder %s410, %s411
      %p425 = scmp.eq.s32.totalorder %s41, 1
      %p426 = por %p424, %p425
      %p428 = scmp.ne.s32.totalorder %s411, %s427
      %p429 = scmp.eq.s32.totalorder %s41, 0
      %p430 = por %p428, %p429
      %p431 = scmp.le.s32.totalorder 1, %s35
      %p432 = scmp.lt.s32.totalorder %s35, 3
      %p433 = pnand %p431, %p432
      %p434 = pneg %p433
      // Predicated region
      $region9: #{tpu_custom_call.1} parent=5 // pred_check
        _
      $region10: #{tpu_custom_call.1} parent=5 // pred_check_branch
        %436 = sbr.rel (%p433) target = $region12
      $region11: #{tpu_custom_call.1} parent=5 // pred_region
        %s437 = ssub.s32 %s35, 1
        // Predicated region
        $region13: #{tpu_custom_call.1} parent=11 // pred_check
          %p438 = pneg %p82
        $region14: #{tpu_custom_call.1} parent=11 // pred_check_branch
          %440 = sbr.rel (%p438) target = $region16
        $region15: #{tpu_custom_call.1} parent=11 // pred_region
          %s442 = ssub.s32 512, 512
          %443 = vsyncadd [#allocation6], %s442
          %s444 = sshll.u32 [#allocation5], 4
          %s445 = int_to_ptr.vmem [resolvable:$true] %s444
          %450 = dma.hbm_to_vmem [thread:$0]  %s1, 512, %s445, [#allocation6], 128, 128, 8
        $region16: #{tpu_custom_call.1} parent=11 // pred_fallthru
          _
        // Predicated region
        $region17: #{tpu_custom_call.1} parent=11 // pred_check
          %p451 = pneg %p103
        $region18: #{tpu_custom_call.1} parent=11 // pred_check_branch
          %453 = sbr.rel (%p451) target = $region20
        $region19: #{tpu_custom_call.1} parent=11 // pred_region
          _
        $region20: #{tpu_custom_call.1} parent=11 // pred_fallthru
          _
        // Predicated region
        $region21: #{tpu_custom_call.1} parent=11 // pred_check
          %p454 = pneg %p124
        $region22: #{tpu_custom_call.1} parent=11 // pred_check_branch
          %456 = sbr.rel (%p454) target = $region24
        $region23: #{tpu_custom_call.1} parent=11 // pred_region
          %s458 = ssub.s32 128, 128
          %459 = vsyncadd [#allocation6], %s458
          %s461 = sshll.u32 [#allocation7], 4
          %s462 = int_to_ptr.vmem [resolvable:$true] %s461
          %464 = dma.hbm_to_vmem [thread:$0]  %s3, 128, %s462, [#allocation6]
        $region24: #{tpu_custom_call.1} parent=11 // pred_fallthru
          _
        // Predicated region
        $region25: #{tpu_custom_call.1} parent=11 // pred_check
          %p465 = pneg %p145
        $region26: #{tpu_custom_call.1} parent=11 // pred_check_branch
          %467 = sbr.rel (%p465) target = $region28
        $region27: #{tpu_custom_call.1} parent=11 // pred_region
          %s469 = ssub.s32 16, 16
          %470 = vsyncadd [#allocation9], %s469
          %s472 = sshll.u32 [#allocation8], 4
          %s473 = int_to_ptr.vmem [resolvable:$true] %s472
          %475 = dma.hbm_to_vmem [thread:$0]  %s4, 16, %s473, [#allocation9]
        $region28: #{tpu_custom_call.1} parent=11 // pred_fallthru
          _
        // Predicated region
        $region29: #{tpu_custom_call.1} parent=11 // pred_check
          %p476 = pneg %p166
        $region30: #{tpu_custom_call.1} parent=11 // pred_check_branch
          %478 = sbr.rel (%p476) target = $region32
        $region31: #{tpu_custom_call.1} parent=11 // pred_region
          %s480 = ssub.s32 128, 128
          %481 = vsyncadd [#allocation9], %s480
          %s483 = sshll.u32 [#allocation10], 4
          %s484 = int_to_ptr.vmem [resolvable:$true] %s483
          %486 = dma.hbm_to_vmem [thread:$0]  %s5, 128, %s484, [#allocation9]
        $region32: #{tpu_custom_call.1} parent=11 // pred_fallthru
          _
        // Predicated region
        $region33: #{tpu_custom_call.1} parent=11 // pred_check
          %p487 = pneg %p187
        $region34: #{tpu_custom_call.1} parent=11 // pred_check_branch
          %489 = sbr.rel (%p487) target = $region36
        $region35: #{tpu_custom_call.1} parent=11 // pred_region
          %s491 = ssub.s32 16, 16
          %492 = vsyncadd [#allocation12], %s491
          %s494 = sshll.u32 [#allocation11], 4
          %s495 = int_to_ptr.vmem [resolvable:$true] %s494
          %497 = dma.hbm_to_vmem [thread:$0]  %s6, 16, %s495, [#allocation12]
        $region36: #{tpu_custom_call.1} parent=11 // pred_fallthru
          _
        // Predicated region
        $region37: #{tpu_custom_call.1} parent=11 // pred_check
          %p498 = pneg %p208
        $region38: #{tpu_custom_call.1} parent=11 // pred_check_branch
          %500 = sbr.rel (%p498) target = $region40
        $region39: #{tpu_custom_call.1} parent=11 // pred_region
          %s502 = ssub.s32 256, 256
          %503 = vsyncadd [#allocation12], %s502
          %s504 = sshll.u32 [#allocation13], 4
          %s505 = int_to_ptr.vmem [resolvable:$true] %s504
          %510 = dma.hbm_to_vmem [thread:$0]  %s7, 256, %s505, [#allocation12], 128, 128, 8
        $region40: #{tpu_custom_call.1} parent=11 // pred_fallthru
          _
        // Predicated region
        $region41: #{tpu_custom_call.1} parent=11 // pred_check
          %p511 = pneg %p229
        $region42: #{tpu_custom_call.1} parent=11 // pred_check_branch
          %513 = sbr.rel (%p511) target = $region44
        $region43: #{tpu_custom_call.1} parent=11 // pred_region
          %s515 = ssub.s32 16, 16
          %516 = vsyncadd [#allocation15], %s515
          %s518 = sshll.u32 [#allocation14], 4
          %s519 = int_to_ptr.vmem [resolvable:$true] %s518
          %521 = dma.hbm_to_vmem [thread:$0]  %s8, 16, %s519, [#allocation15]
        $region44: #{tpu_custom_call.1} parent=11 // pred_fallthru
          _
        // Predicated region
        $region45: #{tpu_custom_call.1} parent=11 // pred_check
          %p522 = pneg %p250
        $region46: #{tpu_custom_call.1} parent=11 // pred_check_branch
          %524 = sbr.rel (%p522) target = $region48
        $region47: #{tpu_custom_call.1} parent=11 // pred_region
          %s526 = ssub.s32 256, 256
          %527 = vsyncadd [#allocation15], %s526
          %s528 = sshll.u32 [#allocation16], 4
          %s529 = int_to_ptr.vmem [resolvable:$true] %s528
          %534 = dma.hbm_to_vmem [thread:$0]  %s9, 256, %s529, [#allocation15], 128, 128, 8
        $region48: #{tpu_custom_call.1} parent=11 // pred_fallthru
          _
        // Predicated region
        $region49: #{tpu_custom_call.1} parent=11 // pred_check
          %p535 = pneg %p271
        $region50: #{tpu_custom_call.1} parent=11 // pred_check_branch
          %537 = sbr.rel (%p535) target = $region52
        $region51: #{tpu_custom_call.1} parent=11 // pred_region
          %s539 = ssub.s32 16, 16
          %540 = vsyncadd [#allocation18], %s539
          %s542 = sshll.u32 [#allocation17], 4
          %s543 = int_to_ptr.vmem [resolvable:$true] %s542
          %545 = dma.hbm_to_vmem [thread:$0]  %s10, 16, %s543, [#allocation18]
        $region52: #{tpu_custom_call.1} parent=11 // pred_fallthru
          _
        // Predicated region
        $region53: #{tpu_custom_call.1} parent=11 // pred_check
          %p546 = pneg %p292
        $region54: #{tpu_custom_call.1} parent=11 // pred_check_branch
          %548 = sbr.rel (%p546) target = $region56
        $region55: #{tpu_custom_call.1} parent=11 // pred_region
          _
        $region56: #{tpu_custom_call.1} parent=11 // pred_fallthru
          _
        // Predicated region
        $region57: #{tpu_custom_call.1} parent=11 // pred_check
          %p549 = pneg %p313
        $region58: #{tpu_custom_call.1} parent=11 // pred_check_branch
          %551 = sbr.rel (%p549) target = $region60
        $region59: #{tpu_custom_call.1} parent=11 // pred_region
          %s553 = ssub.s32 16, 16
          %554 = vsyncadd [#allocation18], %s553
          %s556 = sshll.u32 [#allocation19], 4
          %s557 = int_to_ptr.vmem [resolvable:$true] %s556
          %559 = dma.hbm_to_vmem [thread:$0]  %s12, 16, %s557, [#allocation18]
        $region60: #{tpu_custom_call.1} parent=11 // pred_fallthru
          _
        // Predicated region
        $region61: #{tpu_custom_call.1} parent=11 // pred_check
          %p560 = pneg %p334
        $region62: #{tpu_custom_call.1} parent=11 // pred_check_branch
          %562 = sbr.rel (%p560) target = $region64
        $region63: #{tpu_custom_call.1} parent=11 // pred_region
          _
        $region64: #{tpu_custom_call.1} parent=11 // pred_fallthru
          _
        // Predicated region
        $region65: #{tpu_custom_call.1} parent=11 // pred_check
          %p563 = pneg %p355
        $region66: #{tpu_custom_call.1} parent=11 // pred_check_branch
          %565 = sbr.rel (%p563) target = $region68
        $region67: #{tpu_custom_call.1} parent=11 // pred_region
          _
        $region68: #{tpu_custom_call.1} parent=11 // pred_fallthru
          _
        // Predicated region
        $region69: #{tpu_custom_call.1} parent=11 // pred_check
          %p566 = pneg %p376
        $region70: #{tpu_custom_call.1} parent=11 // pred_check_branch
          %568 = sbr.rel (%p566) target = $region72
        $region71: #{tpu_custom_call.1} parent=11 // pred_region
          %s570 = ssub.s32 2048, 2048
          %571 = vsyncadd [#allocation21], %s570
          %s572 = sshll.u32 [#allocation20], 4
          %s573 = int_to_ptr.vmem [resolvable:$true] %s572
          %578 = dma.hbm_to_vmem [thread:$0]  %s15, 2048, %s573, [#allocation21], 128, 128, 8
        $region72: #{tpu_custom_call.1} parent=11 // pred_fallthru
          _
        // Predicated region
        $region73: #{tpu_custom_call.1} parent=11 // pred_check
          %p579 = pneg %p397
        $region74: #{tpu_custom_call.1} parent=11 // pred_check_branch
          %581 = sbr.rel (%p579) target = $region76
        $region75: #{tpu_custom_call.1} parent=11 // pred_region
          _
        $region76: #{tpu_custom_call.1} parent=11 // pred_fallthru
          _
      $region12: #{tpu_custom_call.1} parent=5 // pred_fallthru
        _
      %p582 = scmp.lt.s32.totalorder %s35, 2
      // Predicated region
      $region77: #{tpu_custom_call.1} parent=5 // pred_check
        %p583 = pneg %p582
      $region78: #{tpu_custom_call.1} parent=5 // pred_check_branch
        %585 = sbr.rel (%p583) target = $region80
      $region79: #{tpu_custom_call.1} parent=5 // pred_region
        // Predicated region
        $region81: #{tpu_custom_call.1} parent=79 // pred_check
          %p586 = pneg %p55
        $region82: #{tpu_custom_call.1} parent=79 // pred_check_branch
          %588 = sbr.rel (%p586) target = $region84
        $region83: #{tpu_custom_call.1} parent=79 // pred_region
          %s589 = sand.u32 %s45, 1
          %s590 = scalar_lea.sflag [#allocation3], %s589
          %s591 = sand.u32 %s45, 1
          %s592 = smul.addr %s591, 16
          %s593 = scalar_lea.vmem [#allocation2], %s592
          %s595 = ssub.s32 256, 256
          %596 = vsyncadd %s590, %s595
          %s597 = smul.addr %s35, 2
          %s598 = smul.addr %s597, 128
          %s599 = scalar_lea.hbm %s0, %s598
          %s600 = sshll.u32 %s593, 4
          %s601 = int_to_ptr.vmem [resolvable:$true] %s600
          %606 = dma.hbm_to_vmem [thread:$0]  %s599, 256, %s601, %s590, 128, 128, 8
        $region84: #{tpu_custom_call.1} parent=79 // pred_fallthru
          _
      $region80: #{tpu_custom_call.1} parent=5 // pred_fallthru
        _
      %p607 = scmp.le.s32.totalorder 1, %s35
      %p608 = scmp.lt.s32.totalorder %s35, 3
      %p609 = pnand %p607, %p608
      %p610 = pneg %p609
      // Predicated region
      $region85: #{tpu_custom_call.1} parent=5 // pred_check
        _
      $region86: #{tpu_custom_call.1} parent=5 // pred_check_branch
        %612 = sbr.rel (%p609) target = $region88
      $region87: #{tpu_custom_call.1} parent=5 // pred_region
        %s613 = ssub.s32 %s35, 1
        %s614 = sand.u32 %s48, 1
        %s615 = scalar_lea.sflag [#allocation3], %s614
        %s616 = sand.u32 %s48, 1
        %s617 = smul.addr %s616, 16
        %s618 = scalar_lea.vmem [#allocation2], %s617
        // Predicated region
        $region89: #{tpu_custom_call.1} parent=87 // pred_check
          %p619 = pneg %p61
        $region90: #{tpu_custom_call.1} parent=87 // pred_check_branch
          %621 = sbr.rel (%p619) target = $region92
        $region91: #{tpu_custom_call.1} parent=87 // pred_region
          %622 = dma.done %s615, 256
        $region92: #{tpu_custom_call.1} parent=87 // pred_fallthru
          _
        // Predicated region
        $region93: #{tpu_custom_call.1} parent=87 // pred_check
          %p623 = pneg %p82
        $region94: #{tpu_custom_call.1} parent=87 // pred_check_branch
          %625 = sbr.rel (%p623) target = $region96
        $region95: #{tpu_custom_call.1} parent=87 // pred_region
          %626 = dma.done [#allocation6], 512
        $region96: #{tpu_custom_call.1} parent=87 // pred_fallthru
          _
        // Predicated region
        $region97: #{tpu_custom_call.1} parent=87 // pred_check
          %p627 = pneg %p124
        $region98: #{tpu_custom_call.1} parent=87 // pred_check_branch
          %629 = sbr.rel (%p627) target = $region100
        $region99: #{tpu_custom_call.1} parent=87 // pred_region
          %630 = dma.done [#allocation6], 128
        $region100: #{tpu_custom_call.1} parent=87 // pred_fallthru
          _
        // Predicated region
        $region101: #{tpu_custom_call.1} parent=87 // pred_check
          %p631 = pneg %p145
        $region102: #{tpu_custom_call.1} parent=87 // pred_check_branch
          %633 = sbr.rel (%p631) target = $region104
        $region103: #{tpu_custom_call.1} parent=87 // pred_region
          %634 = dma.done [#allocation9], 16
        $region104: #{tpu_custom_call.1} parent=87 // pred_fallthru
          _
        // Predicated region
        $region105: #{tpu_custom_call.1} parent=87 // pred_check
          %p635 = pneg %p166
        $region106: #{tpu_custom_call.1} parent=87 // pred_check_branch
          %637 = sbr.rel (%p635) target = $region108
        $region107: #{tpu_custom_call.1} parent=87 // pred_region
          %638 = dma.done [#allocation9], 128
        $region108: #{tpu_custom_call.1} parent=87 // pred_fallthru
          _
        // Predicated region
        $region109: #{tpu_custom_call.1} parent=87 // pred_check
          %p639 = pneg %p187
        $region110: #{tpu_custom_call.1} parent=87 // pred_check_branch
          %641 = sbr.rel (%p639) target = $region112
        $region111: #{tpu_custom_call.1} parent=87 // pred_region
          %642 = dma.done [#allocation12], 16
        $region112: #{tpu_custom_call.1} parent=87 // pred_fallthru
          _
        // Predicated region
        $region113: #{tpu_custom_call.1} parent=87 // pred_check
          %p643 = pneg %p208
        $region114: #{tpu_custom_call.1} parent=87 // pred_check_branch
          %645 = sbr.rel (%p643) target = $region116
        $region115: #{tpu_custom_call.1} parent=87 // pred_region
          %646 = dma.done [#allocation12], 256
        $region116: #{tpu_custom_call.1} parent=87 // pred_fallthru
          _
        // Predicated region
        $region117: #{tpu_custom_call.1} parent=87 // pred_check
          %p647 = pneg %p229
        $region118: #{tpu_custom_call.1} parent=87 // pred_check_branch
          %649 = sbr.rel (%p647) target = $region120
        $region119: #{tpu_custom_call.1} parent=87 // pred_region
          %650 = dma.done [#allocation15], 16
        $region120: #{tpu_custom_call.1} parent=87 // pred_fallthru
          _
        // Predicated region
        $region121: #{tpu_custom_call.1} parent=87 // pred_check
          %p651 = pneg %p250
        $region122: #{tpu_custom_call.1} parent=87 // pred_check_branch
          %653 = sbr.rel (%p651) target = $region124
        $region123: #{tpu_custom_call.1} parent=87 // pred_region
          %654 = dma.done [#allocation15], 256
        $region124: #{tpu_custom_call.1} parent=87 // pred_fallthru
          _
        // Predicated region
        $region125: #{tpu_custom_call.1} parent=87 // pred_check
          %p655 = pneg %p271
        $region126: #{tpu_custom_call.1} parent=87 // pred_check_branch
          %657 = sbr.rel (%p655) target = $region128
        $region127: #{tpu_custom_call.1} parent=87 // pred_region
          %658 = dma.done [#allocation18], 16
        $region128: #{tpu_custom_call.1} parent=87 // pred_fallthru
          _
        // Predicated region
        $region129: #{tpu_custom_call.1} parent=87 // pred_check
          %p659 = pneg %p313
        $region130: #{tpu_custom_call.1} parent=87 // pred_check_branch
          %661 = sbr.rel (%p659) target = $region132
        $region131: #{tpu_custom_call.1} parent=87 // pred_region
          %662 = dma.done [#allocation18], 16
        $region132: #{tpu_custom_call.1} parent=87 // pred_fallthru
          _
        // Predicated region
        $region133: #{tpu_custom_call.1} parent=87 // pred_check
          %p663 = pneg %p376
        $region134: #{tpu_custom_call.1} parent=87 // pred_check_branch
          %665 = sbr.rel (%p663) target = $region136
        $region135: #{tpu_custom_call.1} parent=87 // pred_region
          %666 = dma.done [#allocation21], 2048
        $region136: #{tpu_custom_call.1} parent=87 // pred_fallthru
          _
        %s667 = sand.u32 %s48, 1
        %s668 = scalar_lea.sflag [#allocation3], %s667
        %s669 = sand.u32 %s48, 1
        %s670 = smul.addr %s669, 16
        %s671 = scalar_lea.vmem [#allocation2], %s670
        %p672 = pneg %p61
        %p673 = pneg %p58
        %p674 = pneg %p82
        %p675 = pneg %p79
        %p676 = pneg %p103
        %p677 = pneg %p100
        %p678 = pneg %p124
        %p679 = pneg %p121
        %p680 = pneg %p145
        %p681 = pneg %p142
        %p682 = pneg %p166
        %p683 = pneg %p163
        %p684 = pneg %p187
        %p685 = pneg %p184
        %p686 = pneg %p208
        %p687 = pneg %p205
        %p688 = pneg %p229
        %p689 = pneg %p226
        %p690 = pneg %p250
        %p691 = pneg %p247
        %p692 = pneg %p271
        %p693 = pneg %p268
        %p694 = pneg %p292
        %p695 = pneg %p289
        %p696 = pneg %p313
        %p697 = pneg %p310
        %p698 = pneg %p334
        %p699 = pneg %p331
        %p700 = pneg %p355
        %p701 = pneg %p352
        %p702 = pneg %p376
        %p703 = pneg %p373
        %p704 = pneg %p397
        %p705 = pneg %p394
        %p706 = pneg %p423
        %p707 = pneg %p420
        %s708 = sand.u32 %s410, 1
        %s709 = scalar_lea.sflag [#allocation4], %s708
        %s710 = sand.u32 %s410, 1
        %s711 = smul.addr %s710, 16
        %s712 = scalar_lea.vmem [#allocation22], %s711
        %v713 = vld [vmem:[%s618] sm:$0xff]
        %v714 = vld [vmem:[%s618 + $0x8] sm:$0xff]
        %v715 = vld [vmem:[#allocation5] sm:$0xff]
        %v716 = vld [vmem:[#allocation5 + $0x8] sm:$0xff]
        %v717 = vld [vmem:[#allocation5 + $0x10] sm:$0xff]
        %v718 = vld [vmem:[#allocation5 + $0x18] sm:$0x1]
        %vm721 = vcmask 1041408
        %v722 = vrot.slane %v713, 6
        %v723 = vrot.slane %v714, 6
        %v724 = vsel %vm721, %v722, %v723
        %v727 = vsel %vm721, 0.0, %v722
        %v728 = vsel %vm721, %v723, 0.0
        %731 = vrot.lane.b32.xlu0 %v727, 16
        %v732 = vpop.permute.xlu0 %731
        %733 = vrot.lane.b32.xlu0 %v724, 16
        %v734 = vpop.permute.xlu0 %733
        %735 = vrot.lane.b32.xlu0 %v728, 16
        %v736 = vpop.permute.xlu0 %735
        %vm740 = vcmask 130048
        %v741 = vsel %vm740, 0.0, %v732
        %v742 = vsel %vm740, 0.0, %v734
        %v743 = vsel %vm740, 0.0, %v736
        %v744 = vsel %vm740, %v732, 0.0
        %v745 = vsel %vm740, %v734, 0.0
        %v746 = vsel %vm740, %v736, 0.0
        %v747 = vlaneseq
        %v748 = vshrl.u32 %v747, 7
        %v749 = vsub.s32 0, %v748
        %v750 = vrot.slane %v715, %v749
        %v751 = vmul.f32 %v741, %v750
        %v752 = vmul.f32 %v742, %v750
        %v753 = vadd.f32 %v751, 0.0
        %v754 = vadd.f32 %v752, 0.0
        %v755 = vlaneseq
        %v756 = vshrl.u32 %v755, 7
        %v757 = vsub.s32 1, %v756
        %v758 = vrot.slane %v715, %v757
        %760 = vrot.lane.b32.xlu0 %v758, 8
        %v761 = vpop.permute.xlu0 %760
        %v763 = vmul.f32 %v741, %v761
        %v764 = vmul.f32 %v744, %v761
        %v765 = vmul.f32 %v742, %v761
        %v766 = vmul.f32 %v745, %v761
        %771 = vrot.lane.b32.xlu0 %v763, 120
        %v772 = vpop.permute.xlu0 %771
        %773 = vrot.lane.b32.xlu0 %v764, 120
        %v774 = vpop.permute.xlu0 %773
        %775 = vrot.lane.b32.xlu0 %v765, 120
        %v776 = vpop.permute.xlu0 %775
        %777 = vrot.lane.b32.xlu0 %v766, 120
        %v778 = vpop.permute.xlu0 %777
        %vm779 = vcmask 982016
        %v780 = vsel %vm779, %v772, %v774
        %v781 = vsel %vm779, %v776, %v778
        %v784 = vadd.f32 %v753, %v780
        %v785 = vadd.f32 %v754, %v781
        %v786 = vlaneseq
        %v787 = vshrl.u32 %v786, 7
        %v788 = vsub.s32 2, %v787
        %v789 = vrot.slane %v715, %v788
        %791 = vrot.lane.b32.xlu0 %v789, 16
        %v792 = vpop.permute.xlu0 %791
        %v794 = vmul.f32 %v741, %v792
        %v795 = vmul.f32 %v744, %v792
        %v796 = vmul.f32 %v742, %v792
        %v797 = vmul.f32 %v745, %v792
        %802 = vrot.lane.b32.xlu0 %v794, 112
        %v803 = vpop.permute.xlu0 %802
        %804 = vrot.lane.b32.xlu0 %v795, 112
        %v805 = vpop.permute.xlu0 %804
        %806 = vrot.lane.b32.xlu0 %v796, 112
        %v807 = vpop.permute.xlu0 %806
        %808 = vrot.lane.b32.xlu0 %v797, 112
        %v809 = vpop.permute.xlu0 %808
        %vm810 = vcmask 916480
        %v811 = vsel %vm810, %v803, %v805
        %v812 = vsel %vm810, %v807, %v809
        %v815 = vadd.f32 %v784, %v811
        %v816 = vadd.f32 %v785, %v812
        %v817 = vlaneseq
        %v818 = vshrl.u32 %v817, 7
        %v819 = vsub.s32 3, %v818
        %v820 = vrot.slane %v715, %v819
        %822 = vrot.lane.b32.xlu0 %v820, 24
        %v823 = vpop.permute.xlu0 %822
        %v825 = vmul.f32 %v741, %v823
        %v826 = vmul.f32 %v744, %v823
        %v827 = vmul.f32 %v742, %v823
        %v828 = vmul.f32 %v745, %v823
        %833 = vrot.lane.b32.xlu0 %v825, 104
        %v834 = vpop.permute.xlu0 %833
        %835 = vrot.lane.b32.xlu0 %v826, 104
        %v836 = vpop.permute.xlu0 %835
        %837 = vrot.lane.b32.xlu0 %v827, 104
        %v838 = vpop.permute.xlu0 %837
        %839 = vrot.lane.b32.xlu0 %v828, 104
        %v840 = vpop.permute.xlu0 %839
        %vm841 = vcmask 850944
        %v842 = vsel %vm841, %v834, %v836
        %v843 = vsel %vm841, %v838, %v840
        %v846 = vadd.f32 %v815, %v842
        %v847 = vadd.f32 %v816, %v843
        %v848 = vlaneseq
        %v849 = vshrl.u32 %v848, 7
        %v850 = vsub.s32 4, %v849
        %v851 = vrot.slane %v715, %v850
        %853 = vrot.lane.b32.xlu0 %v851, 32
        %v854 = vpop.permute.xlu0 %853
        %v856 = vmul.f32 %v741, %v854
        %v857 = vmul.f32 %v744, %v854
        %v858 = vmul.f32 %v742, %v854
        %v859 = vmul.f32 %v745, %v854
        %864 = vrot.lane.b32.xlu0 %v856, 96
        %v865 = vpop.permute.xlu0 %864
        %866 = vrot.lane.b32.xlu0 %v857, 96
        %v867 = vpop.permute.xlu0 %866
        %868 = vrot.lane.b32.xlu0 %v858, 96
        %v869 = vpop.permute.xlu0 %868
        %870 = vrot.lane.b32.xlu0 %v859, 96
        %v871 = vpop.permute.xlu0 %870
        %vm872 = vcmask 785408
        %v873 = vsel %vm872, %v865, %v867
        %v874 = vsel %vm872, %v869, %v871
        %v877 = vadd.f32 %v846, %v873
        %v878 = vadd.f32 %v847, %v874
        %v879 = vlaneseq
        %v880 = vshrl.u32 %v879, 7
        %v881 = vsub.s32 5, %v880
        %v882 = vrot.slane %v715, %v881
        %v883 = vmul.f32 %v741, %v882
        %v884 = vmul.f32 %v742, %v882
        %v885 = vmul.f32 %v743, %v882
        %vm889 = vcmask 1046528
        %v890 = vrot.slane %v883, 1
        %v891 = vrot.slane %v884, 1
        %v892 = vsel %vm889, %v890, %v891
        %v893 = vrot.slane %v885, 1
        %v894 = vsel %vm889, %v891, %v893
        %v897 = vadd.f32 %v877, %v892
        %v898 = vadd.f32 %v878, %v894
        %v899 = vlaneseq
        %v900 = vshrl.u32 %v899, 7
        %v901 = vsub.s32 6, %v900
        %v902 = vrot.slane %v715, %v901
        %904 = vrot.lane.b32.xlu0 %v902, 8
        %v905 = vpop.permute.xlu0 %904
        %v907 = vmul.f32 %v741, %v905
        %v908 = vmul.f32 %v744, %v905
        %v909 = vmul.f32 %v742, %v905
        %v910 = vmul.f32 %v745, %v905
        %v911 = vmul.f32 %v743, %v905
        %v912 = vmul.f32 %v746, %v905
        %v919 = vrot.slane %v907, 1
        %v920 = vrot.slane %v909, 1
        %v921 = vsel %vm889, %v919, %v920
        %v922 = vrot.slane %v908, 1
        %v923 = vrot.slane %v910, 1
        %v924 = vsel %vm889, %v922, %v923
        %v925 = vrot.slane %v911, 1
        %v926 = vsel %vm889, %v920, %v925
        %v927 = vrot.slane %v912, 1
        %v928 = vsel %vm889, %v923, %v927
        %929 = vrot.lane.b32.xlu0 %v921, 120
        %v930 = vpop.permute.xlu0 %929
        %931 = vrot.lane.b32.xlu0 %v924, 120
        %v932 = vpop.permute.xlu0 %931
        %933 = vrot.lane.b32.xlu0 %v926, 120
        %v934 = vpop.permute.xlu0 %933
        %935 = vrot.lane.b32.xlu0 %v928, 120
        %v936 = vpop.permute.xlu0 %935
        %v937 = vsel %vm779, %v930, %v932
        %v938 = vsel %vm779, %v934, %v936
        %v941 = vadd.f32 %v897, %v937
        %v942 = vadd.f32 %v898, %v938
        %v943 = vlaneseq
        %v944 = vshrl.u32 %v943, 7
        %v945 = vsub.s32 7, %v944
        %v946 = vrot.slane %v715, %v945
        %948 = vrot.lane.b32.xlu0 %v946, 16
        %v949 = vpop.permute.xlu0 %948
        %v951 = vmul.f32 %v741, %v949
        %v952 = vmul.f32 %v744, %v949
        %v953 = vmul.f32 %v742, %v949
        %v954 = vmul.f32 %v745, %v949
        %v955 = vmul.f32 %v743, %v949
        %v956 = vmul.f32 %v746, %v949
        %v963 = vrot.slane %v951, 1
        %v964 = vrot.slane %v953, 1
        %v965 = vsel %vm889, %v963, %v964
        %v966 = vrot.slane %v952, 1
        %v967 = vrot.slane %v954, 1
        %v968 = vsel %vm889, %v966, %v967
        %v969 = vrot.slane %v955, 1
        %v970 = vsel %vm889, %v964, %v969
        %v971 = vrot.slane %v956, 1
        %v972 = vsel %vm889, %v967, %v971
        %973 = vrot.lane.b32.xlu0 %v965, 112
        %v974 = vpop.permute.xlu0 %973
        %975 = vrot.lane.b32.xlu0 %v968, 112
        %v976 = vpop.permute.xlu0 %975
        %977 = vrot.lane.b32.xlu0 %v970, 112
        %v978 = vpop.permute.xlu0 %977
        %979 = vrot.lane.b32.xlu0 %v972, 112
        %v980 = vpop.permute.xlu0 %979
        %v981 = vsel %vm810, %v974, %v976
        %v982 = vsel %vm810, %v978, %v980
        %v985 = vadd.f32 %v941, %v981
        %v986 = vadd.f32 %v942, %v982
        %v987 = vlaneseq
        %v988 = vshrl.u32 %v987, 7
        %v989 = vsub.s32 0, %v988
        %v990 = vrot.slane %v716, %v989
        %992 = vrot.lane.b32.xlu0 %v990, 24
        %v993 = vpop.permute.xlu0 %992
        %v995 = vmul.f32 %v741, %v993
        %v996 = vmul.f32 %v744, %v993
        %v997 = vmul.f32 %v742, %v993
        %v998 = vmul.f32 %v745, %v993
        %v999 = vmul.f32 %v743, %v993
        %v1000 = vmul.f32 %v746, %v993
        %v1007 = vrot.slane %v995, 1
        %v1008 = vrot.slane %v997, 1
        %v1009 = vsel %vm889, %v1007, %v1008
        %v1010 = vrot.slane %v996, 1
        %v1011 = vrot.slane %v998, 1
        %v1012 = vsel %vm889, %v1010, %v1011
        %v1013 = vrot.slane %v999, 1
        %v1014 = vsel %vm889, %v1008, %v1013
        %v1015 = vrot.slane %v1000, 1
        %v1016 = vsel %vm889, %v1011, %v1015
        %1017 = vrot.lane.b32.xlu0 %v1009, 104
        %v1018 = vpop.permute.xlu0 %1017
        %1019 = vrot.lane.b32.xlu0 %v1012, 104
        %v1020 = vpop.permute.xlu0 %1019
        %1021 = vrot.lane.b32.xlu0 %v1014, 104
        %v1022 = vpop.permute.xlu0 %1021
        %1023 = vrot.lane.b32.xlu0 %v1016, 104
        %v1024 = vpop.permute.xlu0 %1023
        %v1025 = vsel %vm841, %v1018, %v1020
        %v1026 = vsel %vm841, %v1022, %v1024
        %v1029 = vadd.f32 %v985, %v1025
        %v1030 = vadd.f32 %v986, %v1026
        %v1031 = vlaneseq
        %v1032 = vshrl.u32 %v1031, 7
        %v1033 = vsub.s32 1, %v1032
        %v1034 = vrot.slane %v716, %v1033
        %1036 = vrot.lane.b32.xlu0 %v1034, 32
        %v1037 = vpop.permute.xlu0 %1036
        %v1039 = vmul.f32 %v741, %v1037
        %v1040 = vmul.f32 %v744, %v1037
        %v1041 = vmul.f32 %v742, %v1037
        %v1042 = vmul.f32 %v745, %v1037
        %v1043 = vmul.f32 %v743, %v1037
        %v1044 = vmul.f32 %v746, %v1037
        %v1051 = vrot.slane %v1039, 1
        %v1052 = vrot.slane %v1041, 1
        %v1053 = vsel %vm889, %v1051, %v1052
        %v1054 = vrot.slane %v1040, 1
        %v1055 = vrot.slane %v1042, 1
        %v1056 = vsel %vm889, %v1054, %v1055
        %v1057 = vrot.slane %v1043, 1
        %v1058 = vsel %vm889, %v1052, %v1057
        %v1059 = vrot.slane %v1044, 1
        %v1060 = vsel %vm889, %v1055, %v1059
        %1061 = vrot.lane.b32.xlu0 %v1053, 96
        %v1062 = vpop.permute.xlu0 %1061
        %1063 = vrot.lane.b32.xlu0 %v1056, 96
        %v1064 = vpop.permute.xlu0 %1063
        %1065 = vrot.lane.b32.xlu0 %v1058, 96
        %v1066 = vpop.permute.xlu0 %1065
        %1067 = vrot.lane.b32.xlu0 %v1060, 96
        %v1068 = vpop.permute.xlu0 %1067
        %v1069 = vsel %vm872, %v1062, %v1064
        %v1070 = vsel %vm872, %v1066, %v1068
        %v1073 = vadd.f32 %v1029, %v1069
        %v1074 = vadd.f32 %v1030, %v1070
        %v1075 = vlaneseq
        %v1076 = vshrl.u32 %v1075, 7
        %v1077 = vsub.s32 2, %v1076
        %v1078 = vrot.slane %v716, %v1077
        %v1079 = vmul.f32 %v741, %v1078
        %v1080 = vmul.f32 %v742, %v1078
        %v1081 = vmul.f32 %v743, %v1078
        %vm1085 = vcmask 1045504
        %v1086 = vrot.slane %v1079, 2
        %v1087 = vrot.slane %v1080, 2
        %v1088 = vsel %vm1085, %v1086, %v1087
        %v1089 = vrot.slane %v1081, 2
        %v1090 = vsel %vm1085, %v1087, %v1089
        %v1093 = vadd.f32 %v1073, %v1088
        %v1094 = vadd.f32 %v1074, %v1090
        %v1095 = vlaneseq
        %v1096 = vshrl.u32 %v1095, 7
        %v1097 = vsub.s32 3, %v1096
        %v1098 = vrot.slane %v716, %v1097
        %1100 = vrot.lane.b32.xlu0 %v1098, 8
        %v1101 = vpop.permute.xlu0 %1100
        %v1103 = vmul.f32 %v741, %v1101
        %v1104 = vmul.f32 %v744, %v1101
        %v1105 = vmul.f32 %v742, %v1101
        %v1106 = vmul.f32 %v745, %v1101
        %v1107 = vmul.f32 %v743, %v1101
        %v1108 = vmul.f32 %v746, %v1101
        %v1115 = vrot.slane %v1103, 2
        %v1116 = vrot.slane %v1105, 2
        %v1117 = vsel %vm1085, %v1115, %v1116
        %v1118 = vrot.slane %v1104, 2
        %v1119 = vrot.slane %v1106, 2
        %v1120 = vsel %vm1085, %v1118, %v1119
        %v1121 = vrot.slane %v1107, 2
        %v1122 = vsel %vm1085, %v1116, %v1121
        %v1123 = vrot.slane %v1108, 2
        %v1124 = vsel %vm1085, %v1119, %v1123
        %1125 = vrot.lane.b32.xlu0 %v1117, 120
        %v1126 = vpop.permute.xlu0 %1125
        %1127 = vrot.lane.b32.xlu0 %v1120, 120
        %v1128 = vpop.permute.xlu0 %1127
        %1129 = vrot.lane.b32.xlu0 %v1122, 120
        %v1130 = vpop.permute.xlu0 %1129
        %1131 = vrot.lane.b32.xlu0 %v1124, 120
        %v1132 = vpop.permute.xlu0 %1131
        %v1133 = vsel %vm779, %v1126, %v1128
        %v1134 = vsel %vm779, %v1130, %v1132
        %v1137 = vadd.f32 %v1093, %v1133
        %v1138 = vadd.f32 %v1094, %v1134
        %v1139 = vlaneseq
        %v1140 = vshrl.u32 %v1139, 7
        %v1141 = vsub.s32 4, %v1140
        %v1142 = vrot.slane %v716, %v1141
        %1144 = vrot.lane.b32.xlu0 %v1142, 16
        %v1145 = vpop.permute.xlu0 %1144
        %v1147 = vmul.f32 %v741, %v1145
        %v1148 = vmul.f32 %v744, %v1145
        %v1149 = vmul.f32 %v742, %v1145
        %v1150 = vmul.f32 %v745, %v1145
        %v1151 = vmul.f32 %v743, %v1145
        %v1152 = vmul.f32 %v746, %v1145
        %v1159 = vrot.slane %v1147, 2
        %v1160 = vrot.slane %v1149, 2
        %v1161 = vsel %vm1085, %v1159, %v1160
        %v1162 = vrot.slane %v1148, 2
        %v1163 = vrot.slane %v1150, 2
        %v1164 = vsel %vm1085, %v1162, %v1163
        %v1165 = vrot.slane %v1151, 2
        %v1166 = vsel %vm1085, %v1160, %v1165
        %v1167 = vrot.slane %v1152, 2
        %v1168 = vsel %vm1085, %v1163, %v1167
        %1169 = vrot.lane.b32.xlu0 %v1161, 112
        %v1170 = vpop.permute.xlu0 %1169
        %1171 = vrot.lane.b32.xlu0 %v1164, 112
        %v1172 = vpop.permute.xlu0 %1171
        %1173 = vrot.lane.b32.xlu0 %v1166, 112
        %v1174 = vpop.permute.xlu0 %1173
        %1175 = vrot.lane.b32.xlu0 %v1168, 112
        %v1176 = vpop.permute.xlu0 %1175
        %v1177 = vsel %vm810, %v1170, %v1172
        %v1178 = vsel %vm810, %v1174, %v1176
        %v1181 = vadd.f32 %v1137, %v1177
        %v1182 = vadd.f32 %v1138, %v1178
        %v1183 = vlaneseq
        %v1184 = vshrl.u32 %v1183, 7
        %v1185 = vsub.s32 5, %v1184
        %v1186 = vrot.slane %v716, %v1185
        %1188 = vrot.lane.b32.xlu0 %v1186, 24
        %v1189 = vpop.permute.xlu0 %1188
        %v1191 = vmul.f32 %v741, %v1189
        %v1192 = vmul.f32 %v744, %v1189
        %v1193 = vmul.f32 %v742, %v1189
        %v1194 = vmul.f32 %v745, %v1189
        %v1195 = vmul.f32 %v743, %v1189
        %v1196 = vmul.f32 %v746, %v1189
        %v1203 = vrot.slane %v1191, 2
        %v1204 = vrot.slane %v1193, 2
        %v1205 = vsel %vm1085, %v1203, %v1204
        %v1206 = vrot.slane %v1192, 2
        %v1207 = vrot.slane %v1194, 2
        %v1208 = vsel %vm1085, %v1206, %v1207
        %v1209 = vrot.slane %v1195, 2
        %v1210 = vsel %vm1085, %v1204, %v1209
        %v1211 = vrot.slane %v1196, 2
        %v1212 = vsel %vm1085, %v1207, %v1211
        %1213 = vrot.lane.b32.xlu0 %v1205, 104
        %v1214 = vpop.permute.xlu0 %1213
        %1215 = vrot.lane.b32.xlu0 %v1208, 104
        %v1216 = vpop.permute.xlu0 %1215
        %1217 = vrot.lane.b32.xlu0 %v1210, 104
        %v1218 = vpop.permute.xlu0 %1217
        %1219 = vrot.lane.b32.xlu0 %v1212, 104
        %v1220 = vpop.permute.xlu0 %1219
        %v1221 = vsel %vm841, %v1214, %v1216
        %v1222 = vsel %vm841, %v1218, %v1220
        %v1225 = vadd.f32 %v1181, %v1221
        %v1226 = vadd.f32 %v1182, %v1222
        %v1227 = vlaneseq
        %v1228 = vshrl.u32 %v1227, 7
        %v1229 = vsub.s32 6, %v1228
        %v1230 = vrot.slane %v716, %v1229
        %1232 = vrot.lane.b32.xlu0 %v1230, 32
        %v1233 = vpop.permute.xlu0 %1232
        %v1235 = vmul.f32 %v741, %v1233
        %v1236 = vmul.f32 %v744, %v1233
        %v1237 = vmul.f32 %v742, %v1233
        %v1238 = vmul.f32 %v745, %v1233
        %v1239 = vmul.f32 %v743, %v1233
        %v1240 = vmul.f32 %v746, %v1233
        %v1247 = vrot.slane %v1235, 2
        %v1248 = vrot.slane %v1237, 2
        %v1249 = vsel %vm1085, %v1247, %v1248
        %v1250 = vrot.slane %v1236, 2
        %v1251 = vrot.slane %v1238, 2
        %v1252 = vsel %vm1085, %v1250, %v1251
        %v1253 = vrot.slane %v1239, 2
        %v1254 = vsel %vm1085, %v1248, %v1253
        %v1255 = vrot.slane %v1240, 2
        %v1256 = vsel %vm1085, %v1251, %v1255
        %1257 = vrot.lane.b32.xlu0 %v1249, 96
        %v1258 = vpop.permute.xlu0 %1257
        %1259 = vrot.lane.b32.xlu0 %v1252, 96
        %v1260 = vpop.permute.xlu0 %1259
        %1261 = vrot.lane.b32.xlu0 %v1254, 96
        %v1262 = vpop.permute.xlu0 %1261
        %1263 = vrot.lane.b32.xlu0 %v1256, 96
        %v1264 = vpop.permute.xlu0 %1263
        %v1265 = vsel %vm872, %v1258, %v1260
        %v1266 = vsel %vm872, %v1262, %v1264
        %v1269 = vadd.f32 %v1225, %v1265
        %v1270 = vadd.f32 %v1226, %v1266
        %v1271 = vlaneseq
        %v1272 = vshrl.u32 %v1271, 7
        %v1273 = vsub.s32 7, %v1272
        %v1274 = vrot.slane %v716, %v1273
        %v1275 = vmul.f32 %v741, %v1274
        %v1276 = vmul.f32 %v742, %v1274
        %v1277 = vmul.f32 %v743, %v1274
        %vm1281 = vcmask 1044480
        %v1282 = vrot.slane %v1275, 3
        %v1283 = vrot.slane %v1276, 3
        %v1284 = vsel %vm1281, %v1282, %v1283
        %v1285 = vrot.slane %v1277, 3
        %v1286 = vsel %vm1281, %v1283, %v1285
        %v1289 = vadd.f32 %v1269, %v1284
        %v1290 = vadd.f32 %v1270, %v1286
        %v1291 = vlaneseq
        %v1292 = vshrl.u32 %v1291, 7
        %v1293 = vsub.s32 0, %v1292
        %v1294 = vrot.slane %v717, %v1293
        %1296 = vrot.lane.b32.xlu0 %v1294, 8
        %v1297 = vpop.permute.xlu0 %1296
        %v1299 = vmul.f32 %v741, %v1297
        %v1300 = vmul.f32 %v744, %v1297
        %v1301 = vmul.f32 %v742, %v1297
        %v1302 = vmul.f32 %v745, %v1297
        %v1303 = vmul.f32 %v743, %v1297
        %v1304 = vmul.f32 %v746, %v1297
        %v1311 = vrot.slane %v1299, 3
        %v1312 = vrot.slane %v1301, 3
        %v1313 = vsel %vm1281, %v1311, %v1312
        %v1314 = vrot.slane %v1300, 3
        %v1315 = vrot.slane %v1302, 3
        %v1316 = vsel %vm1281, %v1314, %v1315
        %v1317 = vrot.slane %v1303, 3
        %v1318 = vsel %vm1281, %v1312, %v1317
        %v1319 = vrot.slane %v1304, 3
        %v1320 = vsel %vm1281, %v1315, %v1319
        %1321 = vrot.lane.b32.xlu0 %v1313, 120
        %v1322 = vpop.permute.xlu0 %1321
        %1323 = vrot.lane.b32.xlu0 %v1316, 120
        %v1324 = vpop.permute.xlu0 %1323
        %1325 = vrot.lane.b32.xlu0 %v1318, 120
        %v1326 = vpop.permute.xlu0 %1325
        %1327 = vrot.lane.b32.xlu0 %v1320, 120
        %v1328 = vpop.permute.xlu0 %1327
        %v1329 = vsel %vm779, %v1322, %v1324
        %v1330 = vsel %vm779, %v1326, %v1328
        %v1333 = vadd.f32 %v1289, %v1329
        %v1334 = vadd.f32 %v1290, %v1330
        %v1335 = vlaneseq
        %v1336 = vshrl.u32 %v1335, 7
        %v1337 = vsub.s32 1, %v1336
        %v1338 = vrot.slane %v717, %v1337
        %1340 = vrot.lane.b32.xlu0 %v1338, 16
        %v1341 = vpop.permute.xlu0 %1340
        %v1343 = vmul.f32 %v741, %v1341
        %v1344 = vmul.f32 %v744, %v1341
        %v1345 = vmul.f32 %v742, %v1341
        %v1346 = vmul.f32 %v745, %v1341
        %v1347 = vmul.f32 %v743, %v1341
        %v1348 = vmul.f32 %v746, %v1341
        %v1355 = vrot.slane %v1343, 3
        %v1356 = vrot.slane %v1345, 3
        %v1357 = vsel %vm1281, %v1355, %v1356
        %v1358 = vrot.slane %v1344, 3
        %v1359 = vrot.slane %v1346, 3
        %v1360 = vsel %vm1281, %v1358, %v1359
        %v1361 = vrot.slane %v1347, 3
        %v1362 = vsel %vm1281, %v1356, %v1361
        %v1363 = vrot.slane %v1348, 3
        %v1364 = vsel %vm1281, %v1359, %v1363
        %1365 = vrot.lane.b32.xlu0 %v1357, 112
        %v1366 = vpop.permute.xlu0 %1365
        %1367 = vrot.lane.b32.xlu0 %v1360, 112
        %v1368 = vpop.permute.xlu0 %1367
        %1369 = vrot.lane.b32.xlu0 %v1362, 112
        %v1370 = vpop.permute.xlu0 %1369
        %1371 = vrot.lane.b32.xlu0 %v1364, 112
        %v1372 = vpop.permute.xlu0 %1371
        %v1373 = vsel %vm810, %v1366, %v1368
        %v1374 = vsel %vm810, %v1370, %v1372
        %v1377 = vadd.f32 %v1333, %v1373
        %v1378 = vadd.f32 %v1334, %v1374
        %v1379 = vlaneseq
        %v1380 = vshrl.u32 %v1379, 7
        %v1381 = vsub.s32 2, %v1380
        %v1382 = vrot.slane %v717, %v1381
        %1384 = vrot.lane.b32.xlu0 %v1382, 24
        %v1385 = vpop.permute.xlu0 %1384
        %v1387 = vmul.f32 %v741, %v1385
        %v1388 = vmul.f32 %v744, %v1385
        %v1389 = vmul.f32 %v742, %v1385
        %v1390 = vmul.f32 %v745, %v1385
        %v1391 = vmul.f32 %v743, %v1385
        %v1392 = vmul.f32 %v746, %v1385
        %v1399 = vrot.slane %v1387, 3
        %v1400 = vrot.slane %v1389, 3
        %v1401 = vsel %vm1281, %v1399, %v1400
        %v1402 = vrot.slane %v1388, 3
        %v1403 = vrot.slane %v1390, 3
        %v1404 = vsel %vm1281, %v1402, %v1403
        %v1405 = vrot.slane %v1391, 3
        %v1406 = vsel %vm1281, %v1400, %v1405
        %v1407 = vrot.slane %v1392, 3
        %v1408 = vsel %vm1281, %v1403, %v1407
        %1409 = vrot.lane.b32.xlu0 %v1401, 104
        %v1410 = vpop.permute.xlu0 %1409
        %1411 = vrot.lane.b32.xlu0 %v1404, 104
        %v1412 = vpop.permute.xlu0 %1411
        %1413 = vrot.lane.b32.xlu0 %v1406, 104
        %v1414 = vpop.permute.xlu0 %1413
        %1415 = vrot.lane.b32.xlu0 %v1408, 104
        %v1416 = vpop.permute.xlu0 %1415
        %v1417 = vsel %vm841, %v1410, %v1412
        %v1418 = vsel %vm841, %v1414, %v1416
        %v1421 = vadd.f32 %v1377, %v1417
        %v1422 = vadd.f32 %v1378, %v1418
        %v1423 = vlaneseq
        %v1424 = vshrl.u32 %v1423, 7
        %v1425 = vsub.s32 3, %v1424
        %v1426 = vrot.slane %v717, %v1425
        %1428 = vrot.lane.b32.xlu0 %v1426, 32
        %v1429 = vpop.permute.xlu0 %1428
        %v1431 = vmul.f32 %v741, %v1429
        %v1432 = vmul.f32 %v744, %v1429
        %v1433 = vmul.f32 %v742, %v1429
        %v1434 = vmul.f32 %v745, %v1429
        %v1435 = vmul.f32 %v743, %v1429
        %v1436 = vmul.f32 %v746, %v1429
        %v1443 = vrot.slane %v1431, 3
        %v1444 = vrot.slane %v1433, 3
        %v1445 = vsel %vm1281, %v1443, %v1444
        %v1446 = vrot.slane %v1432, 3
        %v1447 = vrot.slane %v1434, 3
        %v1448 = vsel %vm1281, %v1446, %v1447
        %v1449 = vrot.slane %v1435, 3
        %v1450 = vsel %vm1281, %v1444, %v1449
        %v1451 = vrot.slane %v1436, 3
        %v1452 = vsel %vm1281, %v1447, %v1451
        %1453 = vrot.lane.b32.xlu0 %v1445, 96
        %v1454 = vpop.permute.xlu0 %1453
        %1455 = vrot.lane.b32.xlu0 %v1448, 96
        %v1456 = vpop.permute.xlu0 %1455
        %1457 = vrot.lane.b32.xlu0 %v1450, 96
        %v1458 = vpop.permute.xlu0 %1457
        %1459 = vrot.lane.b32.xlu0 %v1452, 96
        %v1460 = vpop.permute.xlu0 %1459
        %v1461 = vsel %vm872, %v1454, %v1456
        %v1462 = vsel %vm872, %v1458, %v1460
        %v1465 = vadd.f32 %v1421, %v1461
        %v1466 = vadd.f32 %v1422, %v1462
        %v1467 = vlaneseq
        %v1468 = vshrl.u32 %v1467, 7
        %v1469 = vsub.s32 4, %v1468
        %v1470 = vrot.slane %v717, %v1469
        %v1471 = vmul.f32 %v741, %v1470
        %v1472 = vmul.f32 %v742, %v1470
        %v1473 = vmul.f32 %v743, %v1470
        %vm1477 = vcmask 1043456
        %v1478 = vrot.slane %v1471, 4
        %v1479 = vrot.slane %v1472, 4
        %v1480 = vsel %vm1477, %v1478, %v1479
        %v1481 = vrot.slane %v1473, 4
        %v1482 = vsel %vm1477, %v1479, %v1481
        %v1485 = vadd.f32 %v1465, %v1480
        %v1486 = vadd.f32 %v1466, %v1482
        %v1487 = vlaneseq
        %v1488 = vshrl.u32 %v1487, 7
        %v1489 = vsub.s32 5, %v1488
        %v1490 = vrot.slane %v717, %v1489
        %1492 = vrot.lane.b32.xlu0 %v1490, 8
        %v1493 = vpop.permute.xlu0 %1492
        %v1495 = vmul.f32 %v741, %v1493
        %v1496 = vmul.f32 %v744, %v1493
        %v1497 = vmul.f32 %v742, %v1493
        %v1498 = vmul.f32 %v745, %v1493
        %v1499 = vmul.f32 %v743, %v1493
        %v1500 = vmul.f32 %v746, %v1493
        %v1507 = vrot.slane %v1495, 4
        %v1508 = vrot.slane %v1497, 4
        %v1509 = vsel %vm1477, %v1507, %v1508
        %v1510 = vrot.slane %v1496, 4
        %v1511 = vrot.slane %v1498, 4
        %v1512 = vsel %vm1477, %v1510, %v1511
        %v1513 = vrot.slane %v1499, 4
        %v1514 = vsel %vm1477, %v1508, %v1513
        %v1515 = vrot.slane %v1500, 4
        %v1516 = vsel %vm1477, %v1511, %v1515
        %1517 = vrot.lane.b32.xlu0 %v1509, 120
        %v1518 = vpop.permute.xlu0 %1517
        %1519 = vrot.lane.b32.xlu0 %v1512, 120
        %v1520 = vpop.permute.xlu0 %1519
        %1521 = vrot.lane.b32.xlu0 %v1514, 120
        %v1522 = vpop.permute.xlu0 %1521
        %1523 = vrot.lane.b32.xlu0 %v1516, 120
        %v1524 = vpop.permute.xlu0 %1523
        %v1525 = vsel %vm779, %v1518, %v1520
        %v1526 = vsel %vm779, %v1522, %v1524
        %v1529 = vadd.f32 %v1485, %v1525
        %v1530 = vadd.f32 %v1486, %v1526
        %v1531 = vlaneseq
        %v1532 = vshrl.u32 %v1531, 7
        %v1533 = vsub.s32 6, %v1532
        %v1534 = vrot.slane %v717, %v1533
        %1536 = vrot.lane.b32.xlu0 %v1534, 16
        %v1537 = vpop.permute.xlu0 %1536
        %v1539 = vmul.f32 %v741, %v1537
        %v1540 = vmul.f32 %v744, %v1537
        %v1541 = vmul.f32 %v742, %v1537
        %v1542 = vmul.f32 %v745, %v1537
        %v1543 = vmul.f32 %v743, %v1537
        %v1544 = vmul.f32 %v746, %v1537
        %v1551 = vrot.slane %v1539, 4
        %v1552 = vrot.slane %v1541, 4
        %v1553 = vsel %vm1477, %v1551, %v1552
        %v1554 = vrot.slane %v1540, 4
        %v1555 = vrot.slane %v1542, 4
        %v1556 = vsel %vm1477, %v1554, %v1555
        %v1557 = vrot.slane %v1543, 4
        %v1558 = vsel %vm1477, %v1552, %v1557
        %v1559 = vrot.slane %v1544, 4
        %v1560 = vsel %vm1477, %v1555, %v1559
        %1561 = vrot.lane.b32.xlu0 %v1553, 112
        %v1562 = vpop.permute.xlu0 %1561
        %1563 = vrot.lane.b32.xlu0 %v1556, 112
        %v1564 = vpop.permute.xlu0 %1563
        %1565 = vrot.lane.b32.xlu0 %v1558, 112
        %v1566 = vpop.permute.xlu0 %1565
        %1567 = vrot.lane.b32.xlu0 %v1560, 112
        %v1568 = vpop.permute.xlu0 %1567
        %v1569 = vsel %vm810, %v1562, %v1564
        %v1570 = vsel %vm810, %v1566, %v1568
        %v1573 = vadd.f32 %v1529, %v1569
        %v1574 = vadd.f32 %v1530, %v1570
        %v1575 = vlaneseq
        %v1576 = vshrl.u32 %v1575, 7
        %v1577 = vsub.s32 7, %v1576
        %v1578 = vrot.slane %v717, %v1577
        %1580 = vrot.lane.b32.xlu0 %v1578, 24
        %v1581 = vpop.permute.xlu0 %1580
        %v1583 = vmul.f32 %v741, %v1581
        %v1584 = vmul.f32 %v744, %v1581
        %v1585 = vmul.f32 %v742, %v1581
        %v1586 = vmul.f32 %v745, %v1581
        %v1587 = vmul.f32 %v743, %v1581
        %v1588 = vmul.f32 %v746, %v1581
        %v1595 = vrot.slane %v1583, 4
        %v1596 = vrot.slane %v1585, 4
        %v1597 = vsel %vm1477, %v1595, %v1596
        %v1598 = vrot.slane %v1584, 4
        %v1599 = vrot.slane %v1586, 4
        %v1600 = vsel %vm1477, %v1598, %v1599
        %v1601 = vrot.slane %v1587, 4
        %v1602 = vsel %vm1477, %v1596, %v1601
        %v1603 = vrot.slane %v1588, 4
        %v1604 = vsel %vm1477, %v1599, %v1603
        %1605 = vrot.lane.b32.xlu0 %v1597, 104
        %v1606 = vpop.permute.xlu0 %1605
        %1607 = vrot.lane.b32.xlu0 %v1600, 104
        %v1608 = vpop.permute.xlu0 %1607
        %1609 = vrot.lane.b32.xlu0 %v1602, 104
        %v1610 = vpop.permute.xlu0 %1609
        %1611 = vrot.lane.b32.xlu0 %v1604, 104
        %v1612 = vpop.permute.xlu0 %1611
        %v1613 = vsel %vm841, %v1606, %v1608
        %v1614 = vsel %vm841, %v1610, %v1612
        %v1617 = vadd.f32 %v1573, %v1613
        %v1618 = vadd.f32 %v1574, %v1614
        %v1619 = vlaneseq
        %v1620 = vshrl.u32 %v1619, 7
        %v1621 = vsub.s32 0, %v1620
        %v1622 = vrot.slane %v718, %v1621
        %1624 = vrot.lane.b32.xlu0 %v1622, 32
        %v1625 = vpop.permute.xlu0 %1624
        %v1627 = vmul.f32 %v741, %v1625
        %v1628 = vmul.f32 %v744, %v1625
        %v1629 = vmul.f32 %v742, %v1625
        %v1630 = vmul.f32 %v745, %v1625
        %v1631 = vmul.f32 %v743, %v1625
        %v1632 = vmul.f32 %v746, %v1625
        %v1639 = vrot.slane %v1627, 4
        %v1640 = vrot.slane %v1629, 4
        %v1641 = vsel %vm1477, %v1639, %v1640
        %v1642 = vrot.slane %v1628, 4
        %v1643 = vrot.slane %v1630, 4
        %v1644 = vsel %vm1477, %v1642, %v1643
        %v1645 = vrot.slane %v1631, 4
        %v1646 = vsel %vm1477, %v1640, %v1645
        %v1647 = vrot.slane %v1632, 4
        %v1648 = vsel %vm1477, %v1643, %v1647
        %1649 = vrot.lane.b32.xlu0 %v1641, 96
        %v1650 = vpop.permute.xlu0 %1649
        %1651 = vrot.lane.b32.xlu0 %v1644, 96
        %v1652 = vpop.permute.xlu0 %1651
        %1653 = vrot.lane.b32.xlu0 %v1646, 96
        %v1654 = vpop.permute.xlu0 %1653
        %1655 = vrot.lane.b32.xlu0 %v1648, 96
        %v1656 = vpop.permute.xlu0 %1655
        %v1657 = vsel %vm872, %v1650, %v1652
        %v1658 = vsel %vm872, %v1654, %v1656
        %v1661 = vadd.f32 %v1617, %v1657
        %v1662 = vadd.f32 %v1618, %v1658
        %v1663 = vld [vmem:[%s2] sm:$0x1]
        %v1665 = vlaneseq
        %v1666 = vshrl.u32 %v1665, 7
        %v1667 = vsub.s32 0, %v1666
        %v1668 = vrot.slane %v1663, %v1667
        %v1670 = vadd.f32 %v1661, %v1668
        %v1671 = vadd.f32 %v1662, %v1668
        %1674 = vrot.lane.b32.xlu0 %v1670, 80
        %v1675 = vpop.permute.xlu0 %1674
        %1676 = vrot.lane.b32.xlu0 %v1671, 80
        %v1677 = vpop.permute.xlu0 %1676
        %vm1680 = vcmask 654336
        %v1681 = vsel %vm1680, 0.0, %v1675
        %v1682 = vsel %vm1680, 0.0, %v1677
        %v1683 = vsel %vm1680, %v1675, 0.0
        %v1684 = vsel %vm1680, %v1677, 0.0
        %v1685 = vld [vmem:[#allocation7] sm:$0x7f]
        %v1686 = vld [vmem:[#allocation13] sm:$0xff]
        %v1687 = vld [vmem:[#allocation13 + $0x8] sm:$0x7]
        %v1688 = vld [vmem:[%s11] sm:$0xff]
        %v1689 = vld [vmem:[%s11 + $0x8] sm:$0xff]
        %v1690 = vld [vmem:[%s11 + $0x10] sm:$0x1f]
        %v1691 = vlaneseq
        %v1692 = vshrl.u32 %v1691, 7
        %v1693 = vsub.s32 0, %v1692
        %v1694 = vrot.slane %v1688, %v1693
        %v1695 = vmul.f32 %v1681, %v1694
        %v1696 = vmul.f32 %v1682, %v1694
        %v1697 = vadd.f32 %v1695, 0.0
        %v1698 = vadd.f32 %v1696, 0.0
        %v1699 = vlaneseq
        %v1700 = vshrl.u32 %v1699, 7
        %v1701 = vsub.s32 1, %v1700
        %v1702 = vrot.slane %v1688, %v1701
        %1704 = vrot.lane.b32.xlu0 %v1702, 8
        %v1705 = vpop.permute.xlu0 %1704
        %v1707 = vmul.f32 %v1681, %v1705
        %v1708 = vmul.f32 %v1683, %v1705
        %v1709 = vmul.f32 %v1682, %v1705
        %v1710 = vmul.f32 %v1684, %v1705
        %1715 = vrot.lane.b32.xlu0 %v1707, 120
        %v1716 = vpop.permute.xlu0 %1715
        %1717 = vrot.lane.b32.xlu0 %v1708, 120
        %v1718 = vpop.permute.xlu0 %1717
        %1719 = vrot.lane.b32.xlu0 %v1709, 120
        %v1720 = vpop.permute.xlu0 %1719
        %1721 = vrot.lane.b32.xlu0 %v1710, 120
        %v1722 = vpop.permute.xlu0 %1721
        %v1723 = vsel %vm779, %v1716, %v1718
        %v1724 = vsel %vm779, %v1720, %v1722
        %v1727 = vadd.f32 %v1697, %v1723
        %v1728 = vadd.f32 %v1698, %v1724
        %v1729 = vlaneseq
        %v1730 = vshrl.u32 %v1729, 7
        %v1731 = vsub.s32 2, %v1730
        %v1732 = vrot.slane %v1688, %v1731
        %1734 = vrot.lane.b32.xlu0 %v1732, 16
        %v1735 = vpop.permute.xlu0 %1734
        %v1737 = vmul.f32 %v1681, %v1735
        %v1738 = vmul.f32 %v1683, %v1735
        %v1739 = vmul.f32 %v1682, %v1735
        %v1740 = vmul.f32 %v1684, %v1735
        %1745 = vrot.lane.b32.xlu0 %v1737, 112
        %v1746 = vpop.permute.xlu0 %1745
        %1747 = vrot.lane.b32.xlu0 %v1738, 112
        %v1748 = vpop.permute.xlu0 %1747
        %1749 = vrot.lane.b32.xlu0 %v1739, 112
        %v1750 = vpop.permute.xlu0 %1749
        %1751 = vrot.lane.b32.xlu0 %v1740, 112
        %v1752 = vpop.permute.xlu0 %1751
        %v1753 = vsel %vm810, %v1746, %v1748
        %v1754 = vsel %vm810, %v1750, %v1752
        %v1757 = vadd.f32 %v1727, %v1753
        %v1758 = vadd.f32 %v1728, %v1754
        %v1759 = vlaneseq
        %v1760 = vshrl.u32 %v1759, 7
        %v1761 = vsub.s32 3, %v1760
        %v1762 = vrot.slane %v1688, %v1761
        %1764 = vrot.lane.b32.xlu0 %v1762, 24
        %v1765 = vpop.permute.xlu0 %1764
        %v1767 = vmul.f32 %v1681, %v1765
        %v1768 = vmul.f32 %v1683, %v1765
        %v1769 = vmul.f32 %v1682, %v1765
        %v1770 = vmul.f32 %v1684, %v1765
        %1775 = vrot.lane.b32.xlu0 %v1767, 104
        %v1776 = vpop.permute.xlu0 %1775
        %1777 = vrot.lane.b32.xlu0 %v1768, 104
        %v1778 = vpop.permute.xlu0 %1777
        %1779 = vrot.lane.b32.xlu0 %v1769, 104
        %v1780 = vpop.permute.xlu0 %1779
        %1781 = vrot.lane.b32.xlu0 %v1770, 104
        %v1782 = vpop.permute.xlu0 %1781
        %v1783 = vsel %vm841, %v1776, %v1778
        %v1784 = vsel %vm841, %v1780, %v1782
        %v1787 = vadd.f32 %v1757, %v1783
        %v1788 = vadd.f32 %v1758, %v1784
        %v1789 = vlaneseq
        %v1790 = vshrl.u32 %v1789, 7
        %v1791 = vsub.s32 4, %v1790
        %v1792 = vrot.slane %v1688, %v1791
        %1794 = vrot.lane.b32.xlu0 %v1792, 32
        %v1795 = vpop.permute.xlu0 %1794
        %v1797 = vmul.f32 %v1681, %v1795
        %v1798 = vmul.f32 %v1683, %v1795
        %v1799 = vmul.f32 %v1682, %v1795
        %v1800 = vmul.f32 %v1684, %v1795
        %1805 = vrot.lane.b32.xlu0 %v1797, 96
        %v1806 = vpop.permute.xlu0 %1805
        %1807 = vrot.lane.b32.xlu0 %v1798, 96
        %v1808 = vpop.permute.xlu0 %1807
        %1809 = vrot.lane.b32.xlu0 %v1799, 96
        %v1810 = vpop.permute.xlu0 %1809
        %1811 = vrot.lane.b32.xlu0 %v1800, 96
        %v1812 = vpop.permute.xlu0 %1811
        %v1813 = vsel %vm872, %v1806, %v1808
        %v1814 = vsel %vm872, %v1810, %v1812
        %v1817 = vadd.f32 %v1787, %v1813
        %v1818 = vadd.f32 %v1788, %v1814
        %v1819 = vlaneseq
        %v1820 = vshrl.u32 %v1819, 7
        %v1821 = vsub.s32 5, %v1820
        %v1822 = vrot.slane %v1688, %v1821
        %1824 = vrot.lane.b32.xlu0 %v1822, 40
        %v1825 = vpop.permute.xlu0 %1824
        %v1827 = vmul.f32 %v1681, %v1825
        %v1828 = vmul.f32 %v1683, %v1825
        %v1829 = vmul.f32 %v1682, %v1825
        %v1830 = vmul.f32 %v1684, %v1825
        %1835 = vrot.lane.b32.xlu0 %v1827, 88
        %v1836 = vpop.permute.xlu0 %1835
        %1837 = vrot.lane.b32.xlu0 %v1828, 88
        %v1838 = vpop.permute.xlu0 %1837
        %1839 = vrot.lane.b32.xlu0 %v1829, 88
        %v1840 = vpop.permute.xlu0 %1839
        %1841 = vrot.lane.b32.xlu0 %v1830, 88
        %v1842 = vpop.permute.xlu0 %1841
        %vm1843 = vcmask 719872
        %v1844 = vsel %vm1843, %v1836, %v1838
        %v1845 = vsel %vm1843, %v1840, %v1842
        %v1848 = vadd.f32 %v1817, %v1844
        %v1849 = vadd.f32 %v1818, %v1845
        %v1850 = vlaneseq
        %v1851 = vshrl.u32 %v1850, 7
        %v1852 = vsub.s32 0, %v1851
        %v1853 = vrot.slane %v1686, %v1852
        %1855 = vrot.lane.b32.xlu0 %v1853, 40
        %v1856 = vpop.permute.xlu0 %1855
        %v1858 = vmul.f32 %v1681, %v1856
        %v1859 = vmul.f32 %v1683, %v1856
        %v1860 = vmul.f32 %v1682, %v1856
        %v1861 = vmul.f32 %v1684, %v1856
        %v1862 = vadd.f32 %v1858, 0.0
        %v1863 = vadd.f32 %v1859, 0.0
        %v1864 = vadd.f32 %v1860, 0.0
        %v1865 = vadd.f32 %v1861, 0.0
        %v1866 = vlaneseq
        %v1867 = vshrl.u32 %v1866, 7
        %v1868 = vsub.s32 6, %v1867
        %v1869 = vrot.slane %v1688, %v1868
        %1871 = vrot.lane.b32.xlu0 %v1869, 48
        %v1872 = vpop.permute.xlu0 %1871
        %v1874 = vmul.f32 %v1681, %v1872
        %v1875 = vmul.f32 %v1683, %v1872
        %v1876 = vmul.f32 %v1682, %v1872
        %v1877 = vmul.f32 %v1684, %v1872
        %1882 = vrot.lane.b32.xlu0 %v1874, 80
        %v1883 = vpop.permute.xlu0 %1882
        %1884 = vrot.lane.b32.xlu0 %v1875, 80
        %v1885 = vpop.permute.xlu0 %1884
        %1886 = vrot.lane.b32.xlu0 %v1876, 80
        %v1887 = vpop.permute.xlu0 %1886
        %1888 = vrot.lane.b32.xlu0 %v1877, 80
        %v1889 = vpop.permute.xlu0 %1888
        %v1890 = vsel %vm1680, %v1883, %v1885
        %v1891 = vsel %vm1680, %v1887, %v1889
        %v1894 = vadd.f32 %v1848, %v1890
        %v1895 = vadd.f32 %v1849, %v1891
        %v1896 = vlaneseq
        %v1897 = vshrl.u32 %v1896, 7
        %v1898 = vsub.s32 1, %v1897
        %v1899 = vrot.slane %v1686, %v1898
        %1901 = vrot.lane.b32.xlu0 %v1899, 48
        %v1902 = vpop.permute.xlu0 %1901
        %v1904 = vmul.f32 %v1681, %v1902
        %v1905 = vmul.f32 %v1683, %v1902
        %v1906 = vmul.f32 %v1682, %v1902
        %v1907 = vmul.f32 %v1684, %v1902
        %1912 = vrot.lane.b32.xlu0 %v1904, 120
        %v1913 = vpop.permute.xlu0 %1912
        %1914 = vrot.lane.b32.xlu0 %v1905, 120
        %v1915 = vpop.permute.xlu0 %1914
        %1916 = vrot.lane.b32.xlu0 %v1906, 120
        %v1917 = vpop.permute.xlu0 %1916
        %1918 = vrot.lane.b32.xlu0 %v1907, 120
        %v1919 = vpop.permute.xlu0 %1918
        %v1920 = vsel %vm779, %v1913, %v1915
        %v1921 = vsel %vm779, %v1917, %v1919
        %v1926 = vadd.f32 %v1862, %v1920
        %v1927 = vadd.f32 %v1863, %v1915
        %v1928 = vadd.f32 %v1864, %v1921
        %v1929 = vadd.f32 %v1865, %v1919
        %v1930 = vlaneseq
        %v1931 = vshrl.u32 %v1930, 7
        %v1932 = vsub.s32 7, %v1931
        %v1933 = vrot.slane %v1688, %v1932
        %1935 = vrot.lane.b32.xlu0 %v1933, 56
        %v1936 = vpop.permute.xlu0 %1935
        %v1938 = vmul.f32 %v1681, %v1936
        %v1939 = vmul.f32 %v1683, %v1936
        %v1940 = vmul.f32 %v1682, %v1936
        %v1941 = vmul.f32 %v1684, %v1936
        %1946 = vrot.lane.b32.xlu0 %v1938, 72
        %v1947 = vpop.permute.xlu0 %1946
        %1948 = vrot.lane.b32.xlu0 %v1939, 72
        %v1949 = vpop.permute.xlu0 %1948
        %1950 = vrot.lane.b32.xlu0 %v1940, 72
        %v1951 = vpop.permute.xlu0 %1950
        %1952 = vrot.lane.b32.xlu0 %v1941, 72
        %v1953 = vpop.permute.xlu0 %1952
        %vm1954 = vcmask 588800
        %v1955 = vsel %vm1954, %v1947, %v1949
        %v1956 = vsel %vm1954, %v1951, %v1953
        %v1959 = vadd.f32 %v1894, %v1955
        %v1960 = vadd.f32 %v1895, %v1956
        %v1961 = vlaneseq
        %v1962 = vshrl.u32 %v1961, 7
        %v1963 = vsub.s32 2, %v1962
        %v1964 = vrot.slane %v1686, %v1963
        %1966 = vrot.lane.b32.xlu0 %v1964, 56
        %v1967 = vpop.permute.xlu0 %1966
        %v1969 = vmul.f32 %v1681, %v1967
        %v1970 = vmul.f32 %v1683, %v1967
        %v1971 = vmul.f32 %v1682, %v1967
        %v1972 = vmul.f32 %v1684, %v1967
        %1977 = vrot.lane.b32.xlu0 %v1969, 112
        %v1978 = vpop.permute.xlu0 %1977
        %1979 = vrot.lane.b32.xlu0 %v1970, 112
        %v1980 = vpop.permute.xlu0 %1979
        %1981 = vrot.lane.b32.xlu0 %v1971, 112
        %v1982 = vpop.permute.xlu0 %1981
        %1983 = vrot.lane.b32.xlu0 %v1972, 112
        %v1984 = vpop.permute.xlu0 %1983
        %v1985 = vsel %vm810, %v1978, %v1980
        %v1986 = vsel %vm810, %v1982, %v1984
        %v1991 = vadd.f32 %v1926, %v1985
        %v1992 = vadd.f32 %v1927, %v1980
        %v1993 = vadd.f32 %v1928, %v1986
        %v1994 = vadd.f32 %v1929, %v1984
        %v1995 = vlaneseq
        %v1996 = vshrl.u32 %v1995, 7
        %v1997 = vsub.s32 0, %v1996
        %v1998 = vrot.slane %v1685, %v1997
        %2000 = vrot.lane.b32.xlu0 %v1998, 56
        %v2001 = vpop.permute.xlu0 %2000
        %v2003 = vmul.f32 %v1681, %v2001
        %v2004 = vmul.f32 %v1683, %v2001
        %v2005 = vmul.f32 %v1682, %v2001
        %v2006 = vmul.f32 %v1684, %v2001
        %v2007 = vadd.f32 %v2003, 0.0
        %v2008 = vadd.f32 %v2004, 0.0
        %v2009 = vadd.f32 %v2005, 0.0
        %v2010 = vadd.f32 %v2006, 0.0
        %v2011 = vlaneseq
        %v2012 = vshrl.u32 %v2011, 7
        %v2013 = vsub.s32 0, %v2012
        %v2014 = vrot.slane %v1689, %v2013
        %2016 = vrot.lane.b32.xlu0 %v2014, 64
        %v2017 = vpop.permute.xlu0 %2016
        %v2019 = vmul.f32 %v1681, %v2017
        %v2020 = vmul.f32 %v1683, %v2017
        %v2021 = vmul.f32 %v1682, %v2017
        %v2022 = vmul.f32 %v1684, %v2017
        %2027 = vrot.lane.b32.xlu0 %v2019, 64
        %v2028 = vpop.permute.xlu0 %2027
        %2029 = vrot.lane.b32.xlu0 %v2020, 64
        %v2030 = vpop.permute.xlu0 %2029
        %2031 = vrot.lane.b32.xlu0 %v2021, 64
        %v2032 = vpop.permute.xlu0 %2031
        %2033 = vrot.lane.b32.xlu0 %v2022, 64
        %v2034 = vpop.permute.xlu0 %2033
        %vm2035 = vcmask 523264
        %v2036 = vsel %vm2035, %v2028, %v2030
        %v2037 = vsel %vm2035, %v2032, %v2034
        %v2040 = vadd.f32 %v1959, %v2036
        %v2041 = vadd.f32 %v1960, %v2037
        %v2042 = vlaneseq
        %v2043 = vshrl.u32 %v2042, 7
        %v2044 = vsub.s32 3, %v2043
        %v2045 = vrot.slane %v1686, %v2044
        %2047 = vrot.lane.b32.xlu0 %v2045, 64
        %v2048 = vpop.permute.xlu0 %2047
        %v2050 = vmul.f32 %v1681, %v2048
        %v2051 = vmul.f32 %v1683, %v2048
        %v2052 = vmul.f32 %v1682, %v2048
        %v2053 = vmul.f32 %v1684, %v2048
        %2058 = vrot.lane.b32.xlu0 %v2050, 104
        %v2059 = vpop.permute.xlu0 %2058
        %2060 = vrot.lane.b32.xlu0 %v2051, 104
        %v2061 = vpop.permute.xlu0 %2060
        %2062 = vrot.lane.b32.xlu0 %v2052, 104
        %v2063 = vpop.permute.xlu0 %2062
        %2064 = vrot.lane.b32.xlu0 %v2053, 104
        %v2065 = vpop.permute.xlu0 %2064
        %v2066 = vsel %vm841, %v2059, %v2061
        %v2067 = vsel %vm841, %v2063, %v2065
        %v2072 = vadd.f32 %v1991, %v2066
        %v2073 = vadd.f32 %v1992, %v2061
        %v2074 = vadd.f32 %v1993, %v2067
        %v2075 = vadd.f32 %v1994, %v2065
        %v2076 = vlaneseq
        %v2077 = vshrl.u32 %v2076, 7
        %v2078 = vsub.s32 1, %v2077
        %v2079 = vrot.slane %v1685, %v2078
        %2081 = vrot.lane.b32.xlu0 %v2079, 64
        %v2082 = vpop.permute.xlu0 %2081
        %v2084 = vmul.f32 %v1681, %v2082
        %v2085 = vmul.f32 %v1683, %v2082
        %v2086 = vmul.f32 %v1682, %v2082
        %v2087 = vmul.f32 %v1684, %v2082
        %2092 = vrot.lane.b32.xlu0 %v2084, 120
        %v2093 = vpop.permute.xlu0 %2092
        %2094 = vrot.lane.b32.xlu0 %v2085, 120
        %v2095 = vpop.permute.xlu0 %2094
        %2096 = vrot.lane.b32.xlu0 %v2086, 120
        %v2097 = vpop.permute.xlu0 %2096
        %2098 = vrot.lane.b32.xlu0 %v2087, 120
        %v2099 = vpop.permute.xlu0 %2098
        %v2100 = vsel %vm779, %v2093, %v2095
        %v2101 = vsel %vm779, %v2097, %v2099
        %v2106 = vadd.f32 %v2007, %v2100
        %v2107 = vadd.f32 %v2008, %v2095
        %v2108 = vadd.f32 %v2009, %v2101
        %v2109 = vadd.f32 %v2010, %v2099
        %v2110 = vlaneseq
        %v2111 = vshrl.u32 %v2110, 7
        %v2112 = vsub.s32 1, %v2111
        %v2113 = vrot.slane %v1689, %v2112
        %2115 = vrot.lane.b32.xlu0 %v2113, 72
        %v2116 = vpop.permute.xlu0 %2115
        %v2118 = vmul.f32 %v1681, %v2116
        %v2119 = vmul.f32 %v1683, %v2116
        %v2120 = vmul.f32 %v1682, %v2116
        %v2121 = vmul.f32 %v1684, %v2116
        %2126 = vrot.lane.b32.xlu0 %v2118, 56
        %v2127 = vpop.permute.xlu0 %2126
        %2128 = vrot.lane.b32.xlu0 %v2119, 56
        %v2129 = vpop.permute.xlu0 %2128
        %2130 = vrot.lane.b32.xlu0 %v2120, 56
        %v2131 = vpop.permute.xlu0 %2130
        %2132 = vrot.lane.b32.xlu0 %v2121, 56
        %v2133 = vpop.permute.xlu0 %2132
        %vm2134 = vcmask 457728
        %v2135 = vsel %vm2134, %v2127, %v2129
        %v2136 = vsel %vm2134, %v2131, %v2133
        %v2139 = vadd.f32 %v2040, %v2135
        %v2140 = vadd.f32 %v2041, %v2136
        %v2141 = vlaneseq
        %v2142 = vshrl.u32 %v2141, 7
        %v2143 = vsub.s32 4, %v2142
        %v2144 = vrot.slane %v1686, %v2143
        %2146 = vrot.lane.b32.xlu0 %v2144, 72
        %v2147 = vpop.permute.xlu0 %2146
        %v2149 = vmul.f32 %v1681, %v2147
        %v2150 = vmul.f32 %v1683, %v2147
        %v2151 = vmul.f32 %v1682, %v2147
        %v2152 = vmul.f32 %v1684, %v2147
        %2157 = vrot.lane.b32.xlu0 %v2149, 96
        %v2158 = vpop.permute.xlu0 %2157
        %2159 = vrot.lane.b32.xlu0 %v2150, 96
        %v2160 = vpop.permute.xlu0 %2159
        %2161 = vrot.lane.b32.xlu0 %v2151, 96
        %v2162 = vpop.permute.xlu0 %2161
        %2163 = vrot.lane.b32.xlu0 %v2152, 96
        %v2164 = vpop.permute.xlu0 %2163
        %v2165 = vsel %vm872, %v2158, %v2160
        %v2166 = vsel %vm872, %v2162, %v2164
        %v2171 = vadd.f32 %v2072, %v2165
        %v2172 = vadd.f32 %v2073, %v2160
        %v2173 = vadd.f32 %v2074, %v2166
        %v2174 = vadd.f32 %v2075, %v2164
        %v2175 = vlaneseq
        %v2176 = vshrl.u32 %v2175, 7
        %v2177 = vsub.s32 2, %v2176
        %v2178 = vrot.slane %v1685, %v2177
        %2180 = vrot.lane.b32.xlu0 %v2178, 72
        %v2181 = vpop.permute.xlu0 %2180
        %v2183 = vmul.f32 %v1681, %v2181
        %v2184 = vmul.f32 %v1683, %v2181
        %v2185 = vmul.f32 %v1682, %v2181
        %v2186 = vmul.f32 %v1684, %v2181
        %2191 = vrot.lane.b32.xlu0 %v2183, 112
        %v2192 = vpop.permute.xlu0 %2191
        %2193 = vrot.lane.b32.xlu0 %v2184, 112
        %v2194 = vpop.permute.xlu0 %2193
        %2195 = vrot.lane.b32.xlu0 %v2185, 112
        %v2196 = vpop.permute.xlu0 %2195
        %2197 = vrot.lane.b32.xlu0 %v2186, 112
        %v2198 = vpop.permute.xlu0 %2197
        %v2199 = vsel %vm810, %v2192, %v2194
        %v2200 = vsel %vm810, %v2196, %v2198
        %v2205 = vadd.f32 %v2106, %v2199
        %v2206 = vadd.f32 %v2107, %v2194
        %v2207 = vadd.f32 %v2108, %v2200
        %v2208 = vadd.f32 %v2109, %v2198
        %v2209 = vlaneseq
        %v2210 = vshrl.u32 %v2209, 7
        %v2211 = vsub.s32 2, %v2210
        %v2212 = vrot.slane %v1689, %v2211
        %2214 = vrot.lane.b32.xlu0 %v2212, 80
        %v2215 = vpop.permute.xlu0 %2214
        %v2217 = vmul.f32 %v1681, %v2215
        %v2218 = vmul.f32 %v1683, %v2215
        %v2219 = vmul.f32 %v1682, %v2215
        %v2220 = vmul.f32 %v1684, %v2215
        %2225 = vrot.lane.b32.xlu0 %v2217, 48
        %v2226 = vpop.permute.xlu0 %2225
        %2227 = vrot.lane.b32.xlu0 %v2218, 48
        %v2228 = vpop.permute.xlu0 %2227
        %2229 = vrot.lane.b32.xlu0 %v2219, 48
        %v2230 = vpop.permute.xlu0 %2229
        %2231 = vrot.lane.b32.xlu0 %v2220, 48
        %v2232 = vpop.permute.xlu0 %2231
        %vm2233 = vcmask 392192
        %v2234 = vsel %vm2233, %v2226, %v2228
        %v2235 = vsel %vm2233, %v2230, %v2232
        %v2238 = vadd.f32 %v2139, %v2234
        %v2239 = vadd.f32 %v2140, %v2235
        %v2240 = vlaneseq
        %v2241 = vshrl.u32 %v2240, 7
        %v2242 = vsub.s32 5, %v2241
        %v2243 = vrot.slane %v1686, %v2242
        %2245 = vrot.lane.b32.xlu0 %v2243, 80
        %v2246 = vpop.permute.xlu0 %2245
        %v2248 = vmul.f32 %v1681, %v2246
        %v2249 = vmul.f32 %v1683, %v2246
        %v2250 = vmul.f32 %v1682, %v2246
        %v2251 = vmul.f32 %v1684, %v2246
        %2256 = vrot.lane.b32.xlu0 %v2248, 88
        %v2257 = vpop.permute.xlu0 %2256
        %2258 = vrot.lane.b32.xlu0 %v2249, 88
        %v2259 = vpop.permute.xlu0 %2258
        %2260 = vrot.lane.b32.xlu0 %v2250, 88
        %v2261 = vpop.permute.xlu0 %2260
        %2262 = vrot.lane.b32.xlu0 %v2251, 88
        %v2263 = vpop.permute.xlu0 %2262
        %v2264 = vsel %vm1843, %v2257, %v2259
        %v2265 = vsel %vm1843, %v2261, %v2263
        %v2270 = vadd.f32 %v2171, %v2264
        %v2271 = vadd.f32 %v2172, %v2259
        %v2272 = vadd.f32 %v2173, %v2265
        %v2273 = vadd.f32 %v2174, %v2263
        %v2274 = vlaneseq
        %v2275 = vshrl.u32 %v2274, 7
        %v2276 = vsub.s32 3, %v2275
        %v2277 = vrot.slane %v1685, %v2276
        %2279 = vrot.lane.b32.xlu0 %v2277, 80
        %v2280 = vpop.permute.xlu0 %2279
        %v2282 = vmul.f32 %v1681, %v2280
        %v2283 = vmul.f32 %v1683, %v2280
        %v2284 = vmul.f32 %v1682, %v2280
        %v2285 = vmul.f32 %v1684, %v2280
        %2290 = vrot.lane.b32.xlu0 %v2282, 104
        %v2291 = vpop.permute.xlu0 %2290
        %2292 = vrot.lane.b32.xlu0 %v2283, 104
        %v2293 = vpop.permute.xlu0 %2292
        %2294 = vrot.lane.b32.xlu0 %v2284, 104
        %v2295 = vpop.permute.xlu0 %2294
        %2296 = vrot.lane.b32.xlu0 %v2285, 104
        %v2297 = vpop.permute.xlu0 %2296
        %v2298 = vsel %vm841, %v2291, %v2293
        %v2299 = vsel %vm841, %v2295, %v2297
        %v2304 = vadd.f32 %v2205, %v2298
        %v2305 = vadd.f32 %v2206, %v2293
        %v2306 = vadd.f32 %v2207, %v2299
        %v2307 = vadd.f32 %v2208, %v2297
        %v2308 = vlaneseq
        %v2309 = vshrl.u32 %v2308, 7
        %v2310 = vsub.s32 3, %v2309
        %v2311 = vrot.slane %v1689, %v2310
        %2313 = vrot.lane.b32.xlu0 %v2311, 88
        %v2314 = vpop.permute.xlu0 %2313
        %v2316 = vmul.f32 %v1681, %v2314
        %v2317 = vmul.f32 %v1683, %v2314
        %v2318 = vmul.f32 %v1682, %v2314
        %v2319 = vmul.f32 %v1684, %v2314
        %2324 = vrot.lane.b32.xlu0 %v2316, 40
        %v2325 = vpop.permute.xlu0 %2324
        %2326 = vrot.lane.b32.xlu0 %v2317, 40
        %v2327 = vpop.permute.xlu0 %2326
        %2328 = vrot.lane.b32.xlu0 %v2318, 40
        %v2329 = vpop.permute.xlu0 %2328
        %2330 = vrot.lane.b32.xlu0 %v2319, 40
        %v2331 = vpop.permute.xlu0 %2330
        %vm2332 = vcmask 326656
        %v2333 = vsel %vm2332, %v2325, %v2327
        %v2334 = vsel %vm2332, %v2329, %v2331
        %v2337 = vadd.f32 %v2238, %v2333
        %v2338 = vadd.f32 %v2239, %v2334
        %v2339 = vlaneseq
        %v2340 = vshrl.u32 %v2339, 7
        %v2341 = vsub.s32 6, %v2340
        %v2342 = vrot.slane %v1686, %v2341
        %2344 = vrot.lane.b32.xlu0 %v2342, 88
        %v2345 = vpop.permute.xlu0 %2344
        %v2347 = vmul.f32 %v1681, %v2345
        %v2348 = vmul.f32 %v1683, %v2345
        %v2349 = vmul.f32 %v1682, %v2345
        %v2350 = vmul.f32 %v1684, %v2345
        %2355 = vrot.lane.b32.xlu0 %v2347, 80
        %v2356 = vpop.permute.xlu0 %2355
        %2357 = vrot.lane.b32.xlu0 %v2348, 80
        %v2358 = vpop.permute.xlu0 %2357
        %2359 = vrot.lane.b32.xlu0 %v2349, 80
        %v2360 = vpop.permute.xlu0 %2359
        %2361 = vrot.lane.b32.xlu0 %v2350, 80
        %v2362 = vpop.permute.xlu0 %2361
        %v2363 = vsel %vm1680, %v2356, %v2358
        %v2364 = vsel %vm1680, %v2360, %v2362
        %v2369 = vadd.f32 %v2270, %v2363
        %v2370 = vadd.f32 %v2271, %v2358
        %v2371 = vadd.f32 %v2272, %v2364
        %v2372 = vadd.f32 %v2273, %v2362
        %v2373 = vlaneseq
        %v2374 = vshrl.u32 %v2373, 7
        %v2375 = vsub.s32 4, %v2374
        %v2376 = vrot.slane %v1685, %v2375
        %2378 = vrot.lane.b32.xlu0 %v2376, 88
        %v2379 = vpop.permute.xlu0 %2378
        %v2381 = vmul.f32 %v1681, %v2379
        %v2382 = vmul.f32 %v1683, %v2379
        %v2383 = vmul.f32 %v1682, %v2379
        %v2384 = vmul.f32 %v1684, %v2379
        %2389 = vrot.lane.b32.xlu0 %v2381, 96
        %v2390 = vpop.permute.xlu0 %2389
        %2391 = vrot.lane.b32.xlu0 %v2382, 96
        %v2392 = vpop.permute.xlu0 %2391
        %2393 = vrot.lane.b32.xlu0 %v2383, 96
        %v2394 = vpop.permute.xlu0 %2393
        %2395 = vrot.lane.b32.xlu0 %v2384, 96
        %v2396 = vpop.permute.xlu0 %2395
        %v2397 = vsel %vm872, %v2390, %v2392
        %v2398 = vsel %vm872, %v2394, %v2396
        %v2403 = vadd.f32 %v2304, %v2397
        %v2404 = vadd.f32 %v2305, %v2392
        %v2405 = vadd.f32 %v2306, %v2398
        %v2406 = vadd.f32 %v2307, %v2396
        %v2407 = vlaneseq
        %v2408 = vshrl.u32 %v2407, 7
        %v2409 = vsub.s32 4, %v2408
        %v2410 = vrot.slane %v1689, %v2409
        %2412 = vrot.lane.b32.xlu0 %v2410, 96
        %v2413 = vpop.permute.xlu0 %2412
        %v2415 = vmul.f32 %v1681, %v2413
        %v2416 = vmul.f32 %v1683, %v2413
        %v2417 = vmul.f32 %v1682, %v2413
        %v2418 = vmul.f32 %v1684, %v2413
        %2423 = vrot.lane.b32.xlu0 %v2415, 32
        %v2424 = vpop.permute.xlu0 %2423
        %2425 = vrot.lane.b32.xlu0 %v2416, 32
        %v2426 = vpop.permute.xlu0 %2425
        %2427 = vrot.lane.b32.xlu0 %v2417, 32
        %v2428 = vpop.permute.xlu0 %2427
        %2429 = vrot.lane.b32.xlu0 %v2418, 32
        %v2430 = vpop.permute.xlu0 %2429
        %vm2431 = vcmask 261120
        %v2432 = vsel %vm2431, %v2424, %v2426
        %v2433 = vsel %vm2431, %v2428, %v2430
        %v2436 = vadd.f32 %v2337, %v2432
        %v2437 = vadd.f32 %v2338, %v2433
        %v2438 = vlaneseq
        %v2439 = vshrl.u32 %v2438, 7
        %v2440 = vsub.s32 7, %v2439
        %v2441 = vrot.slane %v1686, %v2440
        %2443 = vrot.lane.b32.xlu0 %v2441, 96
        %v2444 = vpop.permute.xlu0 %2443
        %v2446 = vmul.f32 %v1681, %v2444
        %v2447 = vmul.f32 %v1683, %v2444
        %v2448 = vmul.f32 %v1682, %v2444
        %v2449 = vmul.f32 %v1684, %v2444
        %2454 = vrot.lane.b32.xlu0 %v2446, 72
        %v2455 = vpop.permute.xlu0 %2454
        %2456 = vrot.lane.b32.xlu0 %v2447, 72
        %v2457 = vpop.permute.xlu0 %2456
        %2458 = vrot.lane.b32.xlu0 %v2448, 72
        %v2459 = vpop.permute.xlu0 %2458
        %2460 = vrot.lane.b32.xlu0 %v2449, 72
        %v2461 = vpop.permute.xlu0 %2460
        %v2462 = vsel %vm1954, %v2455, %v2457
        %v2463 = vsel %vm1954, %v2459, %v2461
        %v2468 = vadd.f32 %v2369, %v2462
        %v2469 = vadd.f32 %v2370, %v2457
        %v2470 = vadd.f32 %v2371, %v2463
        %v2471 = vadd.f32 %v2372, %v2461
        %v2472 = vlaneseq
        %v2473 = vshrl.u32 %v2472, 7
        %v2474 = vsub.s32 5, %v2473
        %v2475 = vrot.slane %v1685, %v2474
        %2477 = vrot.lane.b32.xlu0 %v2475, 96
        %v2478 = vpop.permute.xlu0 %2477
        %v2480 = vmul.f32 %v1681, %v2478
        %v2481 = vmul.f32 %v1683, %v2478
        %v2482 = vmul.f32 %v1682, %v2478
        %v2483 = vmul.f32 %v1684, %v2478
        %2488 = vrot.lane.b32.xlu0 %v2480, 88
        %v2489 = vpop.permute.xlu0 %2488
        %2490 = vrot.lane.b32.xlu0 %v2481, 88
        %v2491 = vpop.permute.xlu0 %2490
        %2492 = vrot.lane.b32.xlu0 %v2482, 88
        %v2493 = vpop.permute.xlu0 %2492
        %2494 = vrot.lane.b32.xlu0 %v2483, 88
        %v2495 = vpop.permute.xlu0 %2494
        %v2496 = vsel %vm1843, %v2489, %v2491
        %v2497 = vsel %vm1843, %v2493, %v2495
        %v2502 = vadd.f32 %v2403, %v2496
        %v2503 = vadd.f32 %v2404, %v2491
        %v2504 = vadd.f32 %v2405, %v2497
        %v2505 = vadd.f32 %v2406, %v2495
        %v2506 = vlaneseq
        %v2507 = vshrl.u32 %v2506, 7
        %v2508 = vsub.s32 5, %v2507
        %v2509 = vrot.slane %v1689, %v2508
        %2511 = vrot.lane.b32.xlu0 %v2509, 104
        %v2512 = vpop.permute.xlu0 %2511
        %v2514 = vmul.f32 %v1681, %v2512
        %v2515 = vmul.f32 %v1683, %v2512
        %v2516 = vmul.f32 %v1682, %v2512
        %v2517 = vmul.f32 %v1684, %v2512
        %2522 = vrot.lane.b32.xlu0 %v2514, 24
        %v2523 = vpop.permute.xlu0 %2522
        %2524 = vrot.lane.b32.xlu0 %v2515, 24
        %v2525 = vpop.permute.xlu0 %2524
        %2526 = vrot.lane.b32.xlu0 %v2516, 24
        %v2527 = vpop.permute.xlu0 %2526
        %2528 = vrot.lane.b32.xlu0 %v2517, 24
        %v2529 = vpop.permute.xlu0 %2528
        %vm2530 = vcmask 195584
        %v2531 = vsel %vm2530, %v2523, %v2525
        %v2532 = vsel %vm2530, %v2527, %v2529
        %v2535 = vadd.f32 %v2436, %v2531
        %v2536 = vadd.f32 %v2437, %v2532
        %v2537 = vlaneseq
        %v2538 = vshrl.u32 %v2537, 7
        %v2539 = vsub.s32 0, %v2538
        %v2540 = vrot.slane %v1687, %v2539
        %2542 = vrot.lane.b32.xlu0 %v2540, 104
        %v2543 = vpop.permute.xlu0 %2542
        %v2545 = vmul.f32 %v1681, %v2543
        %v2546 = vmul.f32 %v1683, %v2543
        %v2547 = vmul.f32 %v1682, %v2543
        %v2548 = vmul.f32 %v1684, %v2543
        %2553 = vrot.lane.b32.xlu0 %v2545, 64
        %v2554 = vpop.permute.xlu0 %2553
        %2555 = vrot.lane.b32.xlu0 %v2546, 64
        %v2556 = vpop.permute.xlu0 %2555
        %2557 = vrot.lane.b32.xlu0 %v2547, 64
        %v2558 = vpop.permute.xlu0 %2557
        %2559 = vrot.lane.b32.xlu0 %v2548, 64
        %v2560 = vpop.permute.xlu0 %2559
        %v2561 = vsel %vm2035, %v2554, %v2556
        %v2562 = vsel %vm2035, %v2558, %v2560
        %v2567 = vadd.f32 %v2468, %v2561
        %v2568 = vadd.f32 %v2469, %v2556
        %v2569 = vadd.f32 %v2470, %v2562
        %v2570 = vadd.f32 %v2471, %v2560
        %v2571 = vlaneseq
        %v2572 = vshrl.u32 %v2571, 7
        %v2573 = vsub.s32 6, %v2572
        %v2574 = vrot.slane %v1685, %v2573
        %2576 = vrot.lane.b32.xlu0 %v2574, 104
        %v2577 = vpop.permute.xlu0 %2576
        %v2579 = vmul.f32 %v1681, %v2577
        %v2580 = vmul.f32 %v1683, %v2577
        %v2581 = vmul.f32 %v1682, %v2577
        %v2582 = vmul.f32 %v1684, %v2577
        %2587 = vrot.lane.b32.xlu0 %v2579, 80
        %v2588 = vpop.permute.xlu0 %2587
        %2589 = vrot.lane.b32.xlu0 %v2580, 80
        %v2590 = vpop.permute.xlu0 %2589
        %2591 = vrot.lane.b32.xlu0 %v2581, 80
        %v2592 = vpop.permute.xlu0 %2591
        %2593 = vrot.lane.b32.xlu0 %v2582, 80
        %v2594 = vpop.permute.xlu0 %2593
        %v2595 = vsel %vm1680, %v2588, %v2590
        %v2596 = vsel %vm1680, %v2592, %v2594
        %v2601 = vadd.f32 %v2502, %v2595
        %v2602 = vadd.f32 %v2503, %v2590
        %v2603 = vadd.f32 %v2504, %v2596
        %v2604 = vadd.f32 %v2505, %v2594
        %v2605 = vlaneseq
        %v2606 = vshrl.u32 %v2605, 7
        %v2607 = vsub.s32 6, %v2606
        %v2608 = vrot.slane %v1689, %v2607
        %2610 = vrot.lane.b32.xlu0 %v2608, 112
        %v2611 = vpop.permute.xlu0 %2610
        %v2613 = vmul.f32 %v1681, %v2611
        %v2614 = vmul.f32 %v1683, %v2611
        %v2615 = vmul.f32 %v1682, %v2611
        %v2616 = vmul.f32 %v1684, %v2611
        %2621 = vrot.lane.b32.xlu0 %v2613, 16
        %v2622 = vpop.permute.xlu0 %2621
        %2623 = vrot.lane.b32.xlu0 %v2614, 16
        %v2624 = vpop.permute.xlu0 %2623
        %2625 = vrot.lane.b32.xlu0 %v2615, 16
        %v2626 = vpop.permute.xlu0 %2625
        %2627 = vrot.lane.b32.xlu0 %v2616, 16
        %v2628 = vpop.permute.xlu0 %2627
        %v2629 = vsel %vm740, %v2622, %v2624
        %v2630 = vsel %vm740, %v2626, %v2628
        %v2633 = vadd.f32 %v2535, %v2629
        %v2634 = vadd.f32 %v2536, %v2630
        %v2635 = vlaneseq
        %v2636 = vshrl.u32 %v2635, 7
        %v2637 = vsub.s32 1, %v2636
        %v2638 = vrot.slane %v1687, %v2637
        %2640 = vrot.lane.b32.xlu0 %v2638, 112
        %v2641 = vpop.permute.xlu0 %2640
        %v2643 = vmul.f32 %v1681, %v2641
        %v2644 = vmul.f32 %v1683, %v2641
        %v2645 = vmul.f32 %v1682, %v2641
        %v2646 = vmul.f32 %v1684, %v2641
        %2651 = vrot.lane.b32.xlu0 %v2643, 56
        %v2652 = vpop.permute.xlu0 %2651
        %2653 = vrot.lane.b32.xlu0 %v2644, 56
        %v2654 = vpop.permute.xlu0 %2653
        %2655 = vrot.lane.b32.xlu0 %v2645, 56
        %v2656 = vpop.permute.xlu0 %2655
        %2657 = vrot.lane.b32.xlu0 %v2646, 56
        %v2658 = vpop.permute.xlu0 %2657
        %v2659 = vsel %vm2134, %v2652, %v2654
        %v2660 = vsel %vm2134, %v2656, %v2658
        %v2665 = vadd.f32 %v2567, %v2659
        %v2666 = vadd.f32 %v2568, %v2654
        %v2667 = vadd.f32 %v2569, %v2660
        %v2668 = vadd.f32 %v2570, %v2658
        %v2669 = vlaneseq
        %v2670 = vshrl.u32 %v2669, 7
        %v2671 = vsub.s32 7, %v2670
        %v2672 = vrot.slane %v1689, %v2671
        %2674 = vrot.lane.b32.xlu0 %v2672, 120
        %v2675 = vpop.permute.xlu0 %2674
        %v2677 = vmul.f32 %v1681, %v2675
        %v2678 = vmul.f32 %v1683, %v2675
        %v2679 = vmul.f32 %v1682, %v2675
        %v2680 = vmul.f32 %v1684, %v2675
        %2685 = vrot.lane.b32.xlu0 %v2677, 8
        %v2686 = vpop.permute.xlu0 %2685
        %2687 = vrot.lane.b32.xlu0 %v2678, 8
        %v2688 = vpop.permute.xlu0 %2687
        %2689 = vrot.lane.b32.xlu0 %v2679, 8
        %v2690 = vpop.permute.xlu0 %2689
        %2691 = vrot.lane.b32.xlu0 %v2680, 8
        %v2692 = vpop.permute.xlu0 %2691
        %vm2693 = vcmask 64512
        %v2694 = vsel %vm2693, %v2686, %v2688
        %v2695 = vsel %vm2693, %v2690, %v2692
        %v2698 = vadd.f32 %v2633, %v2694
        %v2699 = vadd.f32 %v2634, %v2695
        %v2700 = vlaneseq
        %v2701 = vshrl.u32 %v2700, 7
        %v2702 = vsub.s32 2, %v2701
        %v2703 = vrot.slane %v1687, %v2702
        %2705 = vrot.lane.b32.xlu0 %v2703, 120
        %v2706 = vpop.permute.xlu0 %2705
        %v2708 = vmul.f32 %v1681, %v2706
        %v2709 = vmul.f32 %v1683, %v2706
        %v2710 = vmul.f32 %v1682, %v2706
        %v2711 = vmul.f32 %v1684, %v2706
        %2716 = vrot.lane.b32.xlu0 %v2708, 48
        %v2717 = vpop.permute.xlu0 %2716
        %2718 = vrot.lane.b32.xlu0 %v2709, 48
        %v2719 = vpop.permute.xlu0 %2718
        %2720 = vrot.lane.b32.xlu0 %v2710, 48
        %v2721 = vpop.permute.xlu0 %2720
        %2722 = vrot.lane.b32.xlu0 %v2711, 48
        %v2723 = vpop.permute.xlu0 %2722
        %v2724 = vsel %vm2233, %v2717, %v2719
        %v2725 = vsel %vm2233, %v2721, %v2723
        %v2730 = vadd.f32 %v2665, %v2724
        %v2731 = vadd.f32 %v2666, %v2719
        %v2732 = vadd.f32 %v2667, %v2725
        %v2733 = vadd.f32 %v2668, %v2723
        %v2734 = vlaneseq
        %v2735 = vshrl.u32 %v2734, 7
        %v2736 = vsub.s32 0, %v2735
        %v2737 = vrot.slane %v1690, %v2736
        %v2738 = vmul.f32 %v1683, %v2737
        %v2739 = vmul.f32 %v1684, %v2737
        %v2740 = vadd.f32 %v2698, %v2738
        %v2741 = vadd.f32 %v2699, %v2739
        %v2742 = vlaneseq
        %v2743 = vshrl.u32 %v2742, 7
        %v2744 = vsub.s32 1, %v2743
        %v2745 = vrot.slane %v1690, %v2744
        %2747 = vrot.lane.b32.xlu0 %v2745, 8
        %v2748 = vpop.permute.xlu0 %2747
        %v2750 = vmul.f32 %v1683, %v2748
        %v2751 = vmul.f32 %v2748, 0.0
        %v2752 = vmul.f32 %v1684, %v2748
        %2756 = vrot.lane.b32.xlu0 %v2750, 120
        %v2757 = vpop.permute.xlu0 %2756
        %2758 = vrot.lane.b32.xlu0 %v2751, 120
        %v2759 = vpop.permute.xlu0 %2758
        %2760 = vrot.lane.b32.xlu0 %v2752, 120
        %v2761 = vpop.permute.xlu0 %2760
        %v2762 = vsel %vm779, %v2757, %v2759
        %v2763 = vsel %vm779, %v2761, %v2759
        %v2766 = vadd.f32 %v2740, %v2762
        %v2767 = vadd.f32 %v2741, %v2763
        %v2768 = vlaneseq
        %v2769 = vshrl.u32 %v2768, 7
        %v2770 = vsub.s32 2, %v2769
        %v2771 = vrot.slane %v1690, %v2770
        %2773 = vrot.lane.b32.xlu0 %v2771, 16
        %v2774 = vpop.permute.xlu0 %2773
        %v2776 = vmul.f32 %v1683, %v2774
        %v2777 = vmul.f32 %v2774, 0.0
        %v2778 = vmul.f32 %v1684, %v2774
        %2782 = vrot.lane.b32.xlu0 %v2776, 112
        %v2783 = vpop.permute.xlu0 %2782
        %2784 = vrot.lane.b32.xlu0 %v2777, 112
        %v2785 = vpop.permute.xlu0 %2784
        %2786 = vrot.lane.b32.xlu0 %v2778, 112
        %v2787 = vpop.permute.xlu0 %2786
        %v2788 = vsel %vm810, %v2783, %v2785
        %v2789 = vsel %vm810, %v2787, %v2785
        %v2792 = vadd.f32 %v2766, %v2788
        %v2793 = vadd.f32 %v2767, %v2789
        %v2794 = vlaneseq
        %v2795 = vshrl.u32 %v2794, 7
        %v2796 = vsub.s32 3, %v2795
        %v2797 = vrot.slane %v1690, %v2796
        %2799 = vrot.lane.b32.xlu0 %v2797, 24
        %v2800 = vpop.permute.xlu0 %2799
        %v2802 = vmul.f32 %v1683, %v2800
        %v2803 = vmul.f32 %v2800, 0.0
        %v2804 = vmul.f32 %v1684, %v2800
        %2808 = vrot.lane.b32.xlu0 %v2802, 104
        %v2809 = vpop.permute.xlu0 %2808
        %2810 = vrot.lane.b32.xlu0 %v2803, 104
        %v2811 = vpop.permute.xlu0 %2810
        %2812 = vrot.lane.b32.xlu0 %v2804, 104
        %v2813 = vpop.permute.xlu0 %2812
        %v2814 = vsel %vm841, %v2809, %v2811
        %v2815 = vsel %vm841, %v2813, %v2811
        %v2818 = vadd.f32 %v2792, %v2814
        %v2819 = vadd.f32 %v2793, %v2815
        %v2820 = vlaneseq
        %v2821 = vshrl.u32 %v2820, 7
        %v2822 = vsub.s32 4, %v2821
        %v2823 = vrot.slane %v1690, %v2822
        %2825 = vrot.lane.b32.xlu0 %v2823, 32
        %v2826 = vpop.permute.xlu0 %2825
        %v2828 = vmul.f32 %v1683, %v2826
        %v2829 = vmul.f32 %v2826, 0.0
        %v2830 = vmul.f32 %v1684, %v2826
        %2834 = vrot.lane.b32.xlu0 %v2828, 96
        %v2835 = vpop.permute.xlu0 %2834
        %2836 = vrot.lane.b32.xlu0 %v2829, 96
        %v2837 = vpop.permute.xlu0 %2836
        %2838 = vrot.lane.b32.xlu0 %v2830, 96
        %v2839 = vpop.permute.xlu0 %2838
        %v2840 = vsel %vm872, %v2835, %v2837
        %v2841 = vsel %vm872, %v2839, %v2837
        %v2844 = vadd.f32 %v2818, %v2840
        %v2845 = vadd.f32 %v2819, %v2841
        %v2846 = vld [vmem:[#allocation8] sm:$0x1]
        %v2848 = vlaneseq
        %v2849 = vshrl.u32 %v2848, 7
        %v2850 = vsub.s32 0, %v2849
        %v2851 = vrot.slane %v2846, %v2850
        %2852 = vrot.lane.b32.xlu0 %v2851, 56
        %v2853 = vpop.permute.xlu0 %2852
        %v2855 = vadd.f32 %v2601, %v2853
        %v2856 = vadd.f32 %v2602, %v2853
        %v2857 = vadd.f32 %v2603, %v2853
        %v2858 = vadd.f32 %v2604, %v2853
        %v2859 = vld [vmem:[#allocation10] sm:$0x7f]
        %vm2864 = vcmask 1042432
        %v2865 = vrot.slane %v2855, 5
        %v2866 = vrot.slane %v2856, 5
        %v2867 = vrot.slane %v2857, 5
        %v2868 = vsel %vm2864, %v2865, %v2867
        %v2869 = vrot.slane %v2858, 5
        %v2870 = vsel %vm2864, %v2866, %v2869
        %2871 = vrot.lane.b32.xlu0 %v2865, 72
        %v2872 = vpop.permute.xlu0 %2871
        %2873 = vrot.lane.b32.xlu0 %v2866, 72
        %v2874 = vpop.permute.xlu0 %2873
        %2875 = vrot.lane.b32.xlu0 %v2868, 72
        %v2876 = vpop.permute.xlu0 %2875
        %2877 = vrot.lane.b32.xlu0 %v2870, 72
        %v2878 = vpop.permute.xlu0 %2877
        %2879 = vrot.lane.b32.xlu0 %v2867, 72
        %v2880 = vpop.permute.xlu0 %2879
        %2881 = vrot.lane.b32.xlu0 %v2869, 72
        %v2882 = vpop.permute.xlu0 %2881
        %v2883 = vsel %vm1954, %v2872, %v2874
        %v2884 = vsel %vm1954, %v2876, %v2878
        %v2885 = vsel %vm1954, %v2880, %v2882
        %v2889 = vsel %vm2864, 0.0, %v2883
        %v2890 = vsel %vm2864, %v2885, 0.0
        %v2891 = vlaneseq
        %v2892 = vshrl.u32 %v2891, 7
        %v2893 = vsub.s32 0, %v2892
        %v2894 = vrot.slane %v2859, %v2893
        %v2895 = vmul.f32 %v2889, %v2894
        %v2896 = vmul.f32 %v2884, %v2894
        %v2897 = vadd.f32 %v2895, 0.0
        %v2898 = vadd.f32 %v2896, 0.0
        %v2899 = vlaneseq
        %v2900 = vshrl.u32 %v2899, 7
        %v2901 = vsub.s32 1, %v2900
        %v2902 = vrot.slane %v2859, %v2901
        %v2903 = vmul.f32 %v2889, %v2902
        %v2904 = vmul.f32 %v2884, %v2902
        %v2905 = vmul.f32 %v2890, %v2902
        %v2909 = vrot.slane %v2903, 1
        %v2910 = vrot.slane %v2904, 1
        %v2911 = vsel %vm889, %v2909, %v2910
        %v2912 = vrot.slane %v2905, 1
        %v2913 = vsel %vm889, %v2910, %v2912
        %v2916 = vadd.f32 %v2897, %v2911
        %v2917 = vadd.f32 %v2898, %v2913
        %v2918 = vlaneseq
        %v2919 = vshrl.u32 %v2918, 7
        %v2920 = vsub.s32 2, %v2919
        %v2921 = vrot.slane %v2859, %v2920
        %v2922 = vmul.f32 %v2889, %v2921
        %v2923 = vmul.f32 %v2884, %v2921
        %v2924 = vmul.f32 %v2890, %v2921
        %v2928 = vrot.slane %v2922, 2
        %v2929 = vrot.slane %v2923, 2
        %v2930 = vsel %vm1085, %v2928, %v2929
        %v2931 = vrot.slane %v2924, 2
        %v2932 = vsel %vm1085, %v2929, %v2931
        %v2935 = vadd.f32 %v2916, %v2930
        %v2936 = vadd.f32 %v2917, %v2932
        %v2937 = vlaneseq
        %v2938 = vshrl.u32 %v2937, 7
        %v2939 = vsub.s32 3, %v2938
        %v2940 = vrot.slane %v2859, %v2939
        %v2941 = vmul.f32 %v2889, %v2940
        %v2942 = vmul.f32 %v2884, %v2940
        %v2943 = vmul.f32 %v2890, %v2940
        %v2947 = vrot.slane %v2941, 3
        %v2948 = vrot.slane %v2942, 3
        %v2949 = vsel %vm1281, %v2947, %v2948
        %v2950 = vrot.slane %v2943, 3
        %v2951 = vsel %vm1281, %v2948, %v2950
        %v2954 = vadd.f32 %v2935, %v2949
        %v2955 = vadd.f32 %v2936, %v2951
        %v2956 = vlaneseq
        %v2957 = vshrl.u32 %v2956, 7
        %v2958 = vsub.s32 4, %v2957
        %v2959 = vrot.slane %v2859, %v2958
        %v2960 = vmul.f32 %v2889, %v2959
        %v2961 = vmul.f32 %v2884, %v2959
        %v2962 = vmul.f32 %v2890, %v2959
        %v2966 = vrot.slane %v2960, 4
        %v2967 = vrot.slane %v2961, 4
        %v2968 = vsel %vm1477, %v2966, %v2967
        %v2969 = vrot.slane %v2962, 4
        %v2970 = vsel %vm1477, %v2967, %v2969
        %v2973 = vadd.f32 %v2954, %v2968
        %v2974 = vadd.f32 %v2955, %v2970
        %v2975 = vlaneseq
        %v2976 = vshrl.u32 %v2975, 7
        %v2977 = vsub.s32 5, %v2976
        %v2978 = vrot.slane %v2859, %v2977
        %v2979 = vmul.f32 %v2889, %v2978
        %v2980 = vmul.f32 %v2884, %v2978
        %v2981 = vmul.f32 %v2890, %v2978
        %v2985 = vrot.slane %v2979, 5
        %v2986 = vrot.slane %v2980, 5
        %v2987 = vsel %vm2864, %v2985, %v2986
        %v2988 = vrot.slane %v2981, 5
        %v2989 = vsel %vm2864, %v2986, %v2988
        %v2992 = vadd.f32 %v2973, %v2987
        %v2993 = vadd.f32 %v2974, %v2989
        %v2994 = vlaneseq
        %v2995 = vshrl.u32 %v2994, 7
        %v2996 = vsub.s32 6, %v2995
        %v2997 = vrot.slane %v2859, %v2996
        %v2998 = vmul.f32 %v2889, %v2997
        %v2999 = vmul.f32 %v2884, %v2997
        %v3000 = vmul.f32 %v2890, %v2997
        %v3004 = vrot.slane %v2998, 6
        %v3005 = vrot.slane %v2999, 6
        %v3006 = vsel %vm721, %v3004, %v3005
        %v3007 = vrot.slane %v3000, 6
        %v3008 = vsel %vm721, %v3005, %v3007
        %v3011 = vadd.f32 %v2992, %v3006
        %v3012 = vadd.f32 %v2993, %v3008
        %v3013 = vadd.f32 %v1670, %v3011
        %v3014 = vadd.f32 %v1671, %v3012
        %v3015 = vld [vmem:[#allocation11] sm:$0x1]
        %v3017 = vlaneseq
        %v3018 = vshrl.u32 %v3017, 7
        %v3019 = vsub.s32 0, %v3018
        %v3020 = vrot.slane %v3015, %v3019
        %v3022 = vadd.f32 %v3013, %v3020
        %v3023 = vadd.f32 %v3014, %v3020
        %v3024 = vld [vmem:[#allocation14] sm:$0x1]
        %v3026 = vlaneseq
        %v3027 = vshrl.u32 %v3026, 7
        %v3028 = vsub.s32 0, %v3027
        %v3029 = vrot.slane %v3024, %v3028
        %3030 = vrot.lane.b32.xlu0 %v3029, 40
        %v3031 = vpop.permute.xlu0 %3030
        %v3033 = vadd.f32 %v2730, %v3031
        %v3034 = vadd.f32 %v2731, %v3031
        %v3035 = vadd.f32 %v2732, %v3031
        %v3036 = vadd.f32 %v2733, %v3031
        %v3037 = vld [vmem:[#allocation16] sm:$0xff]
        %v3038 = vld [vmem:[#allocation16 + $0x8] sm:$0x7]
        %v3043 = vrot.slane %v3033, 3
        %v3044 = vrot.slane %v3034, 3
        %v3045 = vrot.slane %v3035, 3
        %v3046 = vsel %vm1281, %v3043, %v3045
        %v3047 = vrot.slane %v3036, 3
        %v3048 = vsel %vm1281, %v3044, %v3047
        %3049 = vrot.lane.b32.xlu0 %v3043, 88
        %v3050 = vpop.permute.xlu0 %3049
        %3051 = vrot.lane.b32.xlu0 %v3044, 88
        %v3052 = vpop.permute.xlu0 %3051
        %3053 = vrot.lane.b32.xlu0 %v3046, 88
        %v3054 = vpop.permute.xlu0 %3053
        %3055 = vrot.lane.b32.xlu0 %v3048, 88
        %v3056 = vpop.permute.xlu0 %3055
        %3057 = vrot.lane.b32.xlu0 %v3045, 88
        %v3058 = vpop.permute.xlu0 %3057
        %3059 = vrot.lane.b32.xlu0 %v3047, 88
        %v3060 = vpop.permute.xlu0 %3059
        %v3061 = vsel %vm1843, %v3050, %v3052
        %v3062 = vsel %vm1843, %v3054, %v3056
        %v3063 = vsel %vm1843, %v3058, %v3060
        %v3067 = vsel %vm1281, 0.0, %v3061
        %v3068 = vsel %vm1281, %v3063, 0.0
        %v3069 = vlaneseq
        %v3070 = vshrl.u32 %v3069, 7
        %v3071 = vsub.s32 0, %v3070
        %v3072 = vrot.slane %v3037, %v3071
        %v3073 = vmul.f32 %v3067, %v3072
        %v3074 = vmul.f32 %v3062, %v3072
        %v3075 = vadd.f32 %v3073, 0.0
        %v3076 = vadd.f32 %v3074, 0.0
        %v3077 = vlaneseq
        %v3078 = vshrl.u32 %v3077, 7
        %v3079 = vsub.s32 1, %v3078
        %v3080 = vrot.slane %v3037, %v3079
        %v3081 = vmul.f32 %v3067, %v3080
        %v3082 = vmul.f32 %v3062, %v3080
        %v3083 = vmul.f32 %v3068, %v3080
        %v3087 = vrot.slane %v3081, 1
        %v3088 = vrot.slane %v3082, 1
        %v3089 = vsel %vm889, %v3087, %v3088
        %v3090 = vrot.slane %v3083, 1
        %v3091 = vsel %vm889, %v3088, %v3090
        %v3094 = vadd.f32 %v3075, %v3089
        %v3095 = vadd.f32 %v3076, %v3091
        %v3096 = vlaneseq
        %v3097 = vshrl.u32 %v3096, 7
        %v3098 = vsub.s32 2, %v3097
        %v3099 = vrot.slane %v3037, %v3098
        %v3100 = vmul.f32 %v3067, %v3099
        %v3101 = vmul.f32 %v3062, %v3099
        %v3102 = vmul.f32 %v3068, %v3099
        %v3106 = vrot.slane %v3100, 2
        %v3107 = vrot.slane %v3101, 2
        %v3108 = vsel %vm1085, %v3106, %v3107
        %v3109 = vrot.slane %v3102, 2
        %v3110 = vsel %vm1085, %v3107, %v3109
        %v3113 = vadd.f32 %v3094, %v3108
        %v3114 = vadd.f32 %v3095, %v3110
        %v3115 = vlaneseq
        %v3116 = vshrl.u32 %v3115, 7
        %v3117 = vsub.s32 3, %v3116
        %v3118 = vrot.slane %v3037, %v3117
        %v3119 = vmul.f32 %v3067, %v3118
        %v3120 = vmul.f32 %v3062, %v3118
        %v3121 = vmul.f32 %v3068, %v3118
        %v3125 = vrot.slane %v3119, 3
        %v3126 = vrot.slane %v3120, 3
        %v3127 = vsel %vm1281, %v3125, %v3126
        %v3128 = vrot.slane %v3121, 3
        %v3129 = vsel %vm1281, %v3126, %v3128
        %v3132 = vadd.f32 %v3113, %v3127
        %v3133 = vadd.f32 %v3114, %v3129
        %v3134 = vlaneseq
        %v3135 = vshrl.u32 %v3134, 7
        %v3136 = vsub.s32 4, %v3135
        %v3137 = vrot.slane %v3037, %v3136
        %v3138 = vmul.f32 %v3067, %v3137
        %v3139 = vmul.f32 %v3062, %v3137
        %v3140 = vmul.f32 %v3068, %v3137
        %v3144 = vrot.slane %v3138, 4
        %v3145 = vrot.slane %v3139, 4
        %v3146 = vsel %vm1477, %v3144, %v3145
        %v3147 = vrot.slane %v3140, 4
        %v3148 = vsel %vm1477, %v3145, %v3147
        %v3151 = vadd.f32 %v3132, %v3146
        %v3152 = vadd.f32 %v3133, %v3148
        %v3153 = vlaneseq
        %v3154 = vshrl.u32 %v3153, 7
        %v3155 = vsub.s32 5, %v3154
        %v3156 = vrot.slane %v3037, %v3155
        %v3157 = vmul.f32 %v3067, %v3156
        %v3158 = vmul.f32 %v3062, %v3156
        %v3159 = vmul.f32 %v3068, %v3156
        %v3163 = vrot.slane %v3157, 5
        %v3164 = vrot.slane %v3158, 5
        %v3165 = vsel %vm2864, %v3163, %v3164
        %v3166 = vrot.slane %v3159, 5
        %v3167 = vsel %vm2864, %v3164, %v3166
        %v3170 = vadd.f32 %v3151, %v3165
        %v3171 = vadd.f32 %v3152, %v3167
        %v3172 = vlaneseq
        %v3173 = vshrl.u32 %v3172, 7
        %v3174 = vsub.s32 6, %v3173
        %v3175 = vrot.slane %v3037, %v3174
        %v3176 = vmul.f32 %v3067, %v3175
        %v3177 = vmul.f32 %v3062, %v3175
        %v3178 = vmul.f32 %v3068, %v3175
        %v3182 = vrot.slane %v3176, 6
        %v3183 = vrot.slane %v3177, 6
        %v3184 = vsel %vm721, %v3182, %v3183
        %v3185 = vrot.slane %v3178, 6
        %v3186 = vsel %vm721, %v3183, %v3185
        %v3189 = vadd.f32 %v3170, %v3184
        %v3190 = vadd.f32 %v3171, %v3186
        %v3191 = vlaneseq
        %v3192 = vshrl.u32 %v3191, 7
        %v3193 = vsub.s32 7, %v3192
        %v3194 = vrot.slane %v3037, %v3193
        %v3195 = vmul.f32 %v3067, %v3194
        %v3196 = vmul.f32 %v3062, %v3194
        %v3197 = vmul.f32 %v3068, %v3194
        %vm3201 = vcmask 1040384
        %v3202 = vrot.slane %v3195, 7
        %v3203 = vrot.slane %v3196, 7
        %v3204 = vsel %vm3201, %v3202, %v3203
        %v3205 = vrot.slane %v3197, 7
        %v3206 = vsel %vm3201, %v3203, %v3205
        %v3209 = vadd.f32 %v3189, %v3204
        %v3210 = vadd.f32 %v3190, %v3206
        %v3211 = vlaneseq
        %v3212 = vshrl.u32 %v3211, 7
        %v3213 = vsub.s32 0, %v3212
        %v3214 = vrot.slane %v3038, %v3213
        %v3215 = vmul.f32 %v3062, %v3214
        %v3216 = vmul.f32 %v3068, %v3214
        %v3217 = vadd.f32 %v3209, %v3215
        %v3218 = vadd.f32 %v3210, %v3216
        %v3219 = vlaneseq
        %v3220 = vshrl.u32 %v3219, 7
        %v3221 = vsub.s32 1, %v3220
        %v3222 = vrot.slane %v3038, %v3221
        %v3223 = vmul.f32 %v3062, %v3222
        %v3224 = vmul.f32 %v3068, %v3222
        %v3225 = vmul.f32 %v3222, 0.0
        %v3229 = vrot.slane %v3223, 1
        %v3230 = vrot.slane %v3224, 1
        %v3231 = vsel %vm889, %v3229, %v3230
        %v3232 = vrot.slane %v3225, 1
        %v3233 = vsel %vm889, %v3230, %v3232
        %v3236 = vadd.f32 %v3217, %v3231
        %v3237 = vadd.f32 %v3218, %v3233
        %v3238 = vlaneseq
        %v3239 = vshrl.u32 %v3238, 7
        %v3240 = vsub.s32 2, %v3239
        %v3241 = vrot.slane %v3038, %v3240
        %v3242 = vmul.f32 %v3062, %v3241
        %v3243 = vmul.f32 %v3068, %v3241
        %v3244 = vmul.f32 %v3241, 0.0
        %v3248 = vrot.slane %v3242, 2
        %v3249 = vrot.slane %v3243, 2
        %v3250 = vsel %vm1085, %v3248, %v3249
        %v3251 = vrot.slane %v3244, 2
        %v3252 = vsel %vm1085, %v3249, %v3251
        %v3255 = vadd.f32 %v3236, %v3250
        %v3256 = vadd.f32 %v3237, %v3252
        %v3257 = vadd.f32 %v3022, %v3255
        %v3258 = vadd.f32 %v3023, %v3256
        %v3259 = vld [vmem:[#allocation17] sm:$0x1]
        %v3261 = vlaneseq
        %v3262 = vshrl.u32 %v3261, 7
        %v3263 = vsub.s32 0, %v3262
        %v3264 = vrot.slane %v3259, %v3263
        %v3266 = vadd.f32 %v3257, %v3264
        %v3267 = vadd.f32 %v3258, %v3264
        %v3268 = vld [vmem:[#allocation19] sm:$0x1]
        %v3270 = vlaneseq
        %v3271 = vshrl.u32 %v3270, 7
        %v3272 = vsub.s32 0, %v3271
        %v3273 = vrot.slane %v3268, %v3272
        %v3275 = vadd.f32 %v2844, %v3273
        %v3276 = vadd.f32 %v2845, %v3273
        %v3277 = vld [vmem:[%s13] sm:$0xff]
        %v3278 = vld [vmem:[%s13 + $0x8] sm:$0xff]
        %v3279 = vld [vmem:[%s13 + $0x10] sm:$0x1f]
        %v3282 = vrot.slane %v3275, 6
        %v3283 = vrot.slane %v3276, 6
        %v3284 = vsel %vm721, %v3282, %v3283
        %v3288 = vsel %vm721, 0.0, %v3282
        %v3289 = vsel %vm721, %v3283, 0.0
        %v3290 = vlaneseq
        %v3291 = vshrl.u32 %v3290, 7
        %v3292 = vsub.s32 0, %v3291
        %v3293 = vrot.slane %v3277, %v3292
        %v3294 = vmul.f32 %v3293, 0.0
        %v3295 = vmul.f32 %v3288, %v3293
        %v3296 = vadd.f32 %v3294, 0.0
        %v3297 = vadd.f32 %v3295, 0.0
        %v3298 = vlaneseq
        %v3299 = vshrl.u32 %v3298, 7
        %v3300 = vsub.s32 1, %v3299
        %v3301 = vrot.slane %v3277, %v3300
        %v3302 = vmul.f32 %v3301, 0.0
        %v3303 = vmul.f32 %v3288, %v3301
        %v3304 = vmul.f32 %v3284, %v3301
        %v3308 = vrot.slane %v3302, 1
        %v3309 = vrot.slane %v3303, 1
        %v3310 = vsel %vm889, %v3308, %v3309
        %v3311 = vrot.slane %v3304, 1
        %v3312 = vsel %vm889, %v3309, %v3311
        %v3315 = vadd.f32 %v3296, %v3310
        %v3316 = vadd.f32 %v3297, %v3312
        %v3317 = vlaneseq
        %v3318 = vshrl.u32 %v3317, 7
        %v3319 = vsub.s32 2, %v3318
        %v3320 = vrot.slane %v3277, %v3319
        %v3321 = vmul.f32 %v3320, 0.0
        %v3322 = vmul.f32 %v3288, %v3320
        %v3323 = vmul.f32 %v3284, %v3320
        %v3327 = vrot.slane %v3321, 2
        %v3328 = vrot.slane %v3322, 2
        %v3329 = vsel %vm1085, %v3327, %v3328
        %v3330 = vrot.slane %v3323, 2
        %v3331 = vsel %vm1085, %v3328, %v3330
        %v3334 = vadd.f32 %v3315, %v3329
        %v3335 = vadd.f32 %v3316, %v3331
        %v3336 = vlaneseq
        %v3337 = vshrl.u32 %v3336, 7
        %v3338 = vsub.s32 3, %v3337
        %v3339 = vrot.slane %v3277, %v3338
        %v3340 = vmul.f32 %v3339, 0.0
        %v3341 = vmul.f32 %v3288, %v3339
        %v3342 = vmul.f32 %v3284, %v3339
        %v3346 = vrot.slane %v3340, 3
        %v3347 = vrot.slane %v3341, 3
        %v3348 = vsel %vm1281, %v3346, %v3347
        %v3349 = vrot.slane %v3342, 3
        %v3350 = vsel %vm1281, %v3347, %v3349
        %v3353 = vadd.f32 %v3334, %v3348
        %v3354 = vadd.f32 %v3335, %v3350
        %v3355 = vlaneseq
        %v3356 = vshrl.u32 %v3355, 7
        %v3357 = vsub.s32 4, %v3356
        %v3358 = vrot.slane %v3277, %v3357
        %v3359 = vmul.f32 %v3358, 0.0
        %v3360 = vmul.f32 %v3288, %v3358
        %v3361 = vmul.f32 %v3284, %v3358
        %v3365 = vrot.slane %v3359, 4
        %v3366 = vrot.slane %v3360, 4
        %v3367 = vsel %vm1477, %v3365, %v3366
        %v3368 = vrot.slane %v3361, 4
        %v3369 = vsel %vm1477, %v3366, %v3368
        %v3372 = vadd.f32 %v3353, %v3367
        %v3373 = vadd.f32 %v3354, %v3369
        %v3374 = vlaneseq
        %v3375 = vshrl.u32 %v3374, 7
        %v3376 = vsub.s32 5, %v3375
        %v3377 = vrot.slane %v3277, %v3376
        %v3378 = vmul.f32 %v3377, 0.0
        %v3379 = vmul.f32 %v3288, %v3377
        %v3380 = vmul.f32 %v3284, %v3377
        %v3384 = vrot.slane %v3378, 5
        %v3385 = vrot.slane %v3379, 5
        %v3386 = vsel %vm2864, %v3384, %v3385
        %v3387 = vrot.slane %v3380, 5
        %v3388 = vsel %vm2864, %v3385, %v3387
        %v3391 = vadd.f32 %v3372, %v3386
        %v3392 = vadd.f32 %v3373, %v3388
        %v3393 = vlaneseq
        %v3394 = vshrl.u32 %v3393, 7
        %v3395 = vsub.s32 6, %v3394
        %v3396 = vrot.slane %v3277, %v3395
        %v3397 = vmul.f32 %v3396, 0.0
        %v3398 = vmul.f32 %v3288, %v3396
        %v3399 = vmul.f32 %v3284, %v3396
        %v3403 = vrot.slane %v3397, 6
        %v3404 = vrot.slane %v3398, 6
        %v3405 = vsel %vm721, %v3403, %v3404
        %v3406 = vrot.slane %v3399, 6
        %v3407 = vsel %vm721, %v3404, %v3406
        %v3410 = vadd.f32 %v3391, %v3405
        %v3411 = vadd.f32 %v3392, %v3407
        %v3412 = vlaneseq
        %v3413 = vshrl.u32 %v3412, 7
        %v3414 = vsub.s32 7, %v3413
        %v3415 = vrot.slane %v3277, %v3414
        %v3416 = vmul.f32 %v3415, 0.0
        %v3417 = vmul.f32 %v3288, %v3415
        %v3418 = vmul.f32 %v3284, %v3415
        %v3422 = vrot.slane %v3416, 7
        %v3423 = vrot.slane %v3417, 7
        %v3424 = vsel %vm3201, %v3422, %v3423
        %v3425 = vrot.slane %v3418, 7
        %v3426 = vsel %vm3201, %v3423, %v3425
        %v3429 = vadd.f32 %v3410, %v3424
        %v3430 = vadd.f32 %v3411, %v3426
        %v3431 = vlaneseq
        %v3432 = vshrl.u32 %v3431, 7
        %v3433 = vsub.s32 0, %v3432
        %v3434 = vrot.slane %v3278, %v3433
        %v3435 = vmul.f32 %v3288, %v3434
        %v3436 = vmul.f32 %v3284, %v3434
        %v3437 = vadd.f32 %v3429, %v3435
        %v3438 = vadd.f32 %v3430, %v3436
        %v3439 = vlaneseq
        %v3440 = vshrl.u32 %v3439, 7
        %v3441 = vsub.s32 1, %v3440
        %v3442 = vrot.slane %v3278, %v3441
        %v3443 = vmul.f32 %v3288, %v3442
        %v3444 = vmul.f32 %v3284, %v3442
        %v3445 = vmul.f32 %v3289, %v3442
        %v3449 = vrot.slane %v3443, 1
        %v3450 = vrot.slane %v3444, 1
        %v3451 = vsel %vm889, %v3449, %v3450
        %v3452 = vrot.slane %v3445, 1
        %v3453 = vsel %vm889, %v3450, %v3452
        %v3456 = vadd.f32 %v3437, %v3451
        %v3457 = vadd.f32 %v3438, %v3453
        %v3458 = vlaneseq
        %v3459 = vshrl.u32 %v3458, 7
        %v3460 = vsub.s32 2, %v3459
        %v3461 = vrot.slane %v3278, %v3460
        %v3462 = vmul.f32 %v3288, %v3461
        %v3463 = vmul.f32 %v3284, %v3461
        %v3464 = vmul.f32 %v3289, %v3461
        %v3468 = vrot.slane %v3462, 2
        %v3469 = vrot.slane %v3463, 2
        %v3470 = vsel %vm1085, %v3468, %v3469
        %v3471 = vrot.slane %v3464, 2
        %v3472 = vsel %vm1085, %v3469, %v3471
        %v3475 = vadd.f32 %v3456, %v3470
        %v3476 = vadd.f32 %v3457, %v3472
        %v3477 = vlaneseq
        %v3478 = vshrl.u32 %v3477, 7
        %v3479 = vsub.s32 3, %v3478
        %v3480 = vrot.slane %v3278, %v3479
        %v3481 = vmul.f32 %v3288, %v3480
        %v3482 = vmul.f32 %v3284, %v3480
        %v3483 = vmul.f32 %v3289, %v3480
        %v3487 = vrot.slane %v3481, 3
        %v3488 = vrot.slane %v3482, 3
        %v3489 = vsel %vm1281, %v3487, %v3488
        %v3490 = vrot.slane %v3483, 3
        %v3491 = vsel %vm1281, %v3488, %v3490
        %v3494 = vadd.f32 %v3475, %v3489
        %v3495 = vadd.f32 %v3476, %v3491
        %v3496 = vlaneseq
        %v3497 = vshrl.u32 %v3496, 7
        %v3498 = vsub.s32 4, %v3497
        %v3499 = vrot.slane %v3278, %v3498
        %v3500 = vmul.f32 %v3288, %v3499
        %v3501 = vmul.f32 %v3284, %v3499
        %v3502 = vmul.f32 %v3289, %v3499
        %v3506 = vrot.slane %v3500, 4
        %v3507 = vrot.slane %v3501, 4
        %v3508 = vsel %vm1477, %v3506, %v3507
        %v3509 = vrot.slane %v3502, 4
        %v3510 = vsel %vm1477, %v3507, %v3509
        %v3513 = vadd.f32 %v3494, %v3508
        %v3514 = vadd.f32 %v3495, %v3510
        %v3515 = vlaneseq
        %v3516 = vshrl.u32 %v3515, 7
        %v3517 = vsub.s32 5, %v3516
        %v3518 = vrot.slane %v3278, %v3517
        %v3519 = vmul.f32 %v3288, %v3518
        %v3520 = vmul.f32 %v3284, %v3518
        %v3521 = vmul.f32 %v3289, %v3518
        %v3525 = vrot.slane %v3519, 5
        %v3526 = vrot.slane %v3520, 5
        %v3527 = vsel %vm2864, %v3525, %v3526
        %v3528 = vrot.slane %v3521, 5
        %v3529 = vsel %vm2864, %v3526, %v3528
        %v3532 = vadd.f32 %v3513, %v3527
        %v3533 = vadd.f32 %v3514, %v3529
        %v3534 = vlaneseq
        %v3535 = vshrl.u32 %v3534, 7
        %v3536 = vsub.s32 6, %v3535
        %v3537 = vrot.slane %v3278, %v3536
        %v3538 = vmul.f32 %v3288, %v3537
        %v3539 = vmul.f32 %v3284, %v3537
        %v3540 = vmul.f32 %v3289, %v3537
        %v3544 = vrot.slane %v3538, 6
        %v3545 = vrot.slane %v3539, 6
        %v3546 = vsel %vm721, %v3544, %v3545
        %v3547 = vrot.slane %v3540, 6
        %v3548 = vsel %vm721, %v3545, %v3547
        %v3551 = vadd.f32 %v3532, %v3546
        %v3552 = vadd.f32 %v3533, %v3548
        %v3553 = vlaneseq
        %v3554 = vshrl.u32 %v3553, 7
        %v3555 = vsub.s32 7, %v3554
        %v3556 = vrot.slane %v3278, %v3555
        %v3557 = vmul.f32 %v3288, %v3556
        %v3558 = vmul.f32 %v3284, %v3556
        %v3559 = vmul.f32 %v3289, %v3556
        %v3563 = vrot.slane %v3557, 7
        %v3564 = vrot.slane %v3558, 7
        %v3565 = vsel %vm3201, %v3563, %v3564
        %v3566 = vrot.slane %v3559, 7
        %v3567 = vsel %vm3201, %v3564, %v3566
        %v3570 = vadd.f32 %v3551, %v3565
        %v3571 = vadd.f32 %v3552, %v3567
        %v3572 = vlaneseq
        %v3573 = vshrl.u32 %v3572, 7
        %v3574 = vsub.s32 0, %v3573
        %v3575 = vrot.slane %v3279, %v3574
        %v3576 = vmul.f32 %v3284, %v3575
        %v3577 = vmul.f32 %v3289, %v3575
        %v3578 = vadd.f32 %v3570, %v3576
        %v3579 = vadd.f32 %v3571, %v3577
        %v3580 = vlaneseq
        %v3581 = vshrl.u32 %v3580, 7
        %v3582 = vsub.s32 1, %v3581
        %v3583 = vrot.slane %v3279, %v3582
        %v3584 = vmul.f32 %v3284, %v3583
        %v3585 = vmul.f32 %v3289, %v3583
        %v3586 = vmul.f32 %v3583, 0.0
        %v3590 = vrot.slane %v3584, 1
        %v3591 = vrot.slane %v3585, 1
        %v3592 = vsel %vm889, %v3590, %v3591
        %v3593 = vrot.slane %v3586, 1
        %v3594 = vsel %vm889, %v3591, %v3593
        %v3597 = vadd.f32 %v3578, %v3592
        %v3598 = vadd.f32 %v3579, %v3594
        %v3599 = vlaneseq
        %v3600 = vshrl.u32 %v3599, 7
        %v3601 = vsub.s32 2, %v3600
        %v3602 = vrot.slane %v3279, %v3601
        %v3603 = vmul.f32 %v3284, %v3602
        %v3604 = vmul.f32 %v3289, %v3602
        %v3605 = vmul.f32 %v3602, 0.0
        %v3609 = vrot.slane %v3603, 2
        %v3610 = vrot.slane %v3604, 2
        %v3611 = vsel %vm1085, %v3609, %v3610
        %v3612 = vrot.slane %v3605, 2
        %v3613 = vsel %vm1085, %v3610, %v3612
        %v3616 = vadd.f32 %v3597, %v3611
        %v3617 = vadd.f32 %v3598, %v3613
        %v3618 = vlaneseq
        %v3619 = vshrl.u32 %v3618, 7
        %v3620 = vsub.s32 3, %v3619
        %v3621 = vrot.slane %v3279, %v3620
        %v3622 = vmul.f32 %v3284, %v3621
        %v3623 = vmul.f32 %v3289, %v3621
        %v3624 = vmul.f32 %v3621, 0.0
        %v3628 = vrot.slane %v3622, 3
        %v3629 = vrot.slane %v3623, 3
        %v3630 = vsel %vm1281, %v3628, %v3629
        %v3631 = vrot.slane %v3624, 3
        %v3632 = vsel %vm1281, %v3629, %v3631
        %v3635 = vadd.f32 %v3616, %v3630
        %v3636 = vadd.f32 %v3617, %v3632
        %v3637 = vlaneseq
        %v3638 = vshrl.u32 %v3637, 7
        %v3639 = vsub.s32 4, %v3638
        %v3640 = vrot.slane %v3279, %v3639
        %v3641 = vmul.f32 %v3284, %v3640
        %v3642 = vmul.f32 %v3289, %v3640
        %v3643 = vmul.f32 %v3640, 0.0
        %v3647 = vrot.slane %v3641, 4
        %v3648 = vrot.slane %v3642, 4
        %v3649 = vsel %vm1477, %v3647, %v3648
        %v3650 = vrot.slane %v3643, 4
        %v3651 = vsel %vm1477, %v3648, %v3650
        %v3654 = vadd.f32 %v3635, %v3649
        %v3655 = vadd.f32 %v3636, %v3651
        %v3656 = vadd.f32 %v3266, %v3654
        %v3657 = vadd.f32 %v3267, %v3655
        %v3658 = vld [vmem:[%s14] sm:$0x1]
        %v3660 = vlaneseq
        %v3661 = vshrl.u32 %v3660, 7
        %v3662 = vsub.s32 0, %v3661
        %v3663 = vrot.slane %v3658, %v3662
        %v3665 = vadd.f32 %v3656, %v3663
        %v3666 = vadd.f32 %v3657, %v3663
        %v3667 = vld [vmem:[#allocation20] sm:$0xff]
        %v3668 = vld [vmem:[#allocation20 + $0x8] sm:$0xff]
        %v3669 = vld [vmem:[#allocation20 + $0x10] sm:$0xff]
        %v3670 = vld [vmem:[#allocation20 + $0x18] sm:$0xff]
        %v3671 = vld [vmem:[#allocation20 + $0x20] sm:$0xff]
        %v3672 = vld [vmem:[#allocation20 + $0x28] sm:$0xff]
        %v3673 = vld [vmem:[#allocation20 + $0x30] sm:$0xff]
        %v3674 = vld [vmem:[#allocation20 + $0x38] sm:$0xff]
        %v3675 = vld [vmem:[#allocation20 + $0x40] sm:$0xff]
        %v3676 = vld [vmem:[#allocation20 + $0x48] sm:$0xff]
        %v3677 = vld [vmem:[#allocation20 + $0x50] sm:$0xff]
        %v3678 = vld [vmem:[#allocation20 + $0x58] sm:$0xff]
        %v3679 = vld [vmem:[#allocation20 + $0x60] sm:$0xff]
        %v3680 = vld [vmem:[#allocation20 + $0x68] sm:$0xff]
        %v3681 = vld [vmem:[#allocation20 + $0x70] sm:$0xff]
        %v3682 = vld [vmem:[#allocation20 + $0x78] sm:$0xff]
        %v3683 = vld [vmem:[%s16] sm:$0x1]
        %v3685 = vlaneseq
        %v3686 = vshrl.u32 %v3685, 7
        %v3687 = vsub.s32 0, %v3686
        %v3688 = vrot.slane %v3683, %v3687
        %3690 = vmatprep.subr.mxu0 0.0
        %3691 = vmatpush1.msra.mxu0 %v3667
        %3692 = vmatprep.subr.mxu0 0.0
        %3693 = vmatpush1.msra.mxu0 %v3668
        %3694 = vmatprep.subr.mxu0 0.0
        %3695 = vmatpush1.msra.mxu0 %v3669
        %3696 = vmatprep.subr.mxu0 0.0
        %3697 = vmatpush1.msra.mxu0 %v3670
        %3698 = vmatprep.subr.mxu0 0.0
        %3699 = vmatpush1.msra.mxu0 %v3671
        %3700 = vmatprep.subr.mxu0 0.0
        %3701 = vmatpush1.msra.mxu0 %v3672
        %3702 = vmatprep.subr.mxu0 0.0
        %3703 = vmatpush1.msra.mxu0 %v3673
        %3704 = vmatprep.subr.mxu0 0.0
        %3705 = vmatpush1.msra.mxu0 %v3674
        %3706 = vmatprep.subr.mxu0 0.0
        %3707 = vmatpush1.msra.mxu0 %v3675
        %3708 = vmatprep.subr.mxu0 0.0
        %3709 = vmatpush1.msra.mxu0 %v3676
        %3710 = vmatprep.subr.mxu0 0.0
        %3711 = vmatpush1.msra.mxu0 %v3677
        %3712 = vmatprep.subr.mxu0 0.0
        %3713 = vmatpush1.msra.mxu0 %v3678
        %3714 = vmatprep.subr.mxu0 0.0
        %3715 = vmatpush1.msra.mxu0 %v3679
        %3716 = vmatprep.subr.mxu0 0.0
        %3717 = vmatpush1.msra.mxu0 %v3680
        %3718 = vmatprep.subr.mxu0 0.0
        %3719 = vmatpush1.msra.mxu0 %v3681
        %3720 = vmatprep.subr.mxu0 0.0
        %3721 = vmatpush1.msra.mxu0 %v3682
        %3722 = vmatprep.subr.mxu0 0.0
        %3723 = vmatpush1.msra.mxu0 0.0
        %3724 = vmatprep.subr.mxu0 0.0
        %3725 = vmatpush1.msra.mxu0 0.0
        %3726 = vmatprep.subr.mxu0 0.0
        %3727 = vmatpush1.msra.mxu0 0.0
        %3728 = vmatprep.subr.mxu0 0.0
        %3729 = vmatpush1.msra.mxu0 0.0
        %3730 = vmatprep.subr.mxu0 0.0
        %3731 = vmatpush1.msra.mxu0 0.0
        %3732 = vmatprep.subr.mxu0 0.0
        %3733 = vmatpush1.msra.mxu0 0.0
        %3734 = vmatprep.subr.mxu0 0.0
        %3735 = vmatpush1.msra.mxu0 0.0
        %3736 = vmatprep.subr.mxu0 0.0
        %3737 = vmatpush1.msra.mxu0 0.0
        %3738 = vmatprep.subr.mxu0 0.0
        %3739 = vmatpush1.msra.mxu0 0.0
        %3740 = vmatprep.subr.mxu0 0.0
        %3741 = vmatpush1.msra.mxu0 0.0
        %3742 = vmatprep.subr.mxu0 0.0
        %3743 = vmatpush1.msra.mxu0 0.0
        %3744 = vmatprep.subr.mxu0 0.0
        %3745 = vmatpush1.msra.mxu0 0.0
        %3746 = vmatprep.subr.mxu0 0.0
        %3747 = vmatpush1.msra.mxu0 0.0
        %3748 = vmatprep.subr.mxu0 0.0
        %3749 = vmatpush1.msra.mxu0 0.0
        %3750 = vmatprep.subr.mxu0 0.0
        %3751 = vmatpush1.msra.mxu0 0.0
        %3752 = vmatprep.subr.mxu0 0.0
        %3753 = vmatpush1.msra.mxu0 0.0
        %3754 = vmatprep.mubr.f32.mxu0 0.0
        %3755 = vmatmul.mubr.f32.gmra.mrb[0].mxu0 %v3665
        %v3756 = vpop.f32.mrb[0].mxu0
        %v3757 = vadd.f32 %v3688, %v3756
        %v3758 = vpop.f32.mrb[0].mxu0
        %3759 = vmatprep.mubr.f32.mxu0 0.0
        %3760 = vmatmul.mubr.f32.gmra.mrb[0].mxu0 %v3666
        %v3761 = vpop.f32.mrb[0].mxu0
        %v3762 = vadd.f32 %v3688, %v3761
        %v3763 = vpop.f32.mrb[0].mxu0
        %3764 = vdwg.mxu0
        %v3765 = vmul.f32 %v3757, %v713
        %v3766 = vmul.f32 %v3762, %v714
        %3767 = vst [vmem:[%s712] sm:$0xff] %v3765
        %3768 = vst [vmem:[%s712 + $0x8] sm:$0xff] %v3766
        %s3769 = sand.u32 %s410, 1
        %s3770 = scalar_lea.sflag [#allocation4], %s3769
        %s3771 = sand.u32 %s410, 1
        %s3772 = smul.addr %s3771, 16
        %s3773 = scalar_lea.vmem [#allocation22], %s3772
        // Predicated region
        $region137: #{tpu_custom_call.1} parent=87 // pred_check
          %p3774 = pneg %p420
        $region138: #{tpu_custom_call.1} parent=87 // pred_check_branch
          %3776 = sbr.rel (%p3774) target = $region140
        $region139: #{tpu_custom_call.1} parent=87 // pred_region
          %s3778 = ssub.s32 256, 256
          %3779 = vsyncadd %s3770, %s3778
          %s3780 = smul.addr %s40, 2
          %s3781 = smul.addr %s3780, 128
          %s3782 = scalar_lea.hbm %s17, %s3781
          %s3783 = sshll.u32 %s3773, 4
          %s3784 = int_to_ptr.vmem [resolvable:$true] %s3783
          %3789 = dma.vmem_to_hbm [thread:$0]  %s3784, 256, %s3782, %s3770, 128, 128, 8
        $region140: #{tpu_custom_call.1} parent=87 // pred_fallthru
          _
      $region88: #{tpu_custom_call.1} parent=5 // pred_fallthru
        _
      %p3790 = scmp.le.s32.totalorder 2, %s35
      // Predicated region
      $region141: #{tpu_custom_call.1} parent=5 // pred_check
        %p3791 = pneg %p3790
      $region142: #{tpu_custom_call.1} parent=5 // pred_check_branch
        %3793 = sbr.rel (%p3791) target = $region144
      $region143: #{tpu_custom_call.1} parent=5 // pred_region
        %s3794 = ssub.s32 %s35, 2
        // Predicated region
        $region145: #{tpu_custom_call.1} parent=143 // pred_check
          %p3795 = pneg %p426
        $region146: #{tpu_custom_call.1} parent=143 // pred_check_branch
          %3797 = sbr.rel (%p3795) target = $region148
        $region147: #{tpu_custom_call.1} parent=143 // pred_region
          %s3798 = sand.u32 %s411, 1
          %s3799 = scalar_lea.sflag [#allocation4], %s3798
          %s3800 = sand.u32 %s411, 1
          %s3801 = smul.addr %s3800, 16
          %s3802 = scalar_lea.vmem [#allocation22], %s3801
          %3803 = dma.done %s3799, 256
        $region148: #{tpu_custom_call.1} parent=143 // pred_fallthru
          _
      $region144: #{tpu_custom_call.1} parent=5 // pred_fallthru
        _
    $region6: #{tpu_custom_call.1} parent=1 // loop_footer
      %s39 = sadd.s32 1, %s35
    $region7: #{tpu_custom_call.1} parent=1 // loop_footer_branch
      %34 = sbr.rel target = $region3
    $region8: #{tpu_custom_call.1} parent=1 // loop_exit
      _
    %3804 = vsyncpa [#allocation3], 1
    %s3805 = scalar_lea.sflag [#allocation3], 1
    %3806 = vsyncpa %s3805, 1
    %3807 = vsyncpa [#allocation6], 1
    %3808 = vsyncpa [#allocation9], 1
    %3809 = vsyncpa [#allocation12], 1
    %3810 = vsyncpa [#allocation15], 1
    %3811 = vsyncpa [#allocation18], 1
    %3812 = vsyncpa [#allocation21], 1
    %3813 = vsyncpa [#allocation4], 1
    %s3814 = scalar_lea.sflag [#allocation4], 1
    %3815 = vsyncpa %s3814, 1

</llo_original>
